<compile_context>
chip_gen: v5e
topology: v5e:2x2
jax: 0.10.0
libtpu: 0.0.40
codegen_flags: <defaults>
</compile_context>

<pallas_src>
import functools

import jax
import jax.numpy as jnp
from jax import lax
from jax.experimental import pallas as pl
from jax.experimental.pallas import tpu as pltpu

EPS = 1e-5
LANE = 128
_VMEM_LIMIT = 48 * 1024 * 1024  # fits v5e/v6e (128 MiB) and v7x (64 MiB)


def _round_up(x, m):
    return (x + m - 1) // m * m


def _pick_row_tile(total):
    """Largest multiple of 8 that divides `total` and is <= 1024."""
    cap = min(1024, total)
    for cand in range(cap - cap % 8, 7, -8):
        if total % cand == 0:
            return cand
    return total


def _num_partitions(n):
    # Leading "parallel" grid axis so both v7x TensorCores get conv work.
    return 2 if (n % 2 == 0 and n >= 2) else 1


# ----------------------------------------------------------------------------
# Kernel A: conv as a single K-folded MXU matmul + per-channel sum / sum-of-sq
# ----------------------------------------------------------------------------
def _conv_stats_kernel(*refs, taps, ho, wo, nphase, cin):
    ntaps = len(taps)
    ph_refs = refs[:nphase]
    w_ref = refs[nphase]
    y_ref = refs[nphase + 1]
    st_ref = refs[nphase + 2]
    m = ho * wo

    if ntaps > 1:
        slab_ref = refs[nphase + 3]                 # (M, ntaps*Cin) bf16 scratch
        for t, (p, di, dj) in enumerate(taps):
            win = ph_refs[p][0, di:di + ho, dj:dj + wo, :]
            slab_ref[:, t * cin:(t + 1) * cin] = win.reshape(m, cin)
        slab = slab_ref[...]
    else:
        p, di, dj = taps[0]
        slab = ph_refs[p][0, di:di + ho, dj:dj + wo, :].reshape(m, cin)

    # One MXU dot with K = ntaps*Cin, f32 accumulation.
    acc = jnp.dot(slab, w_ref[...], preferred_element_type=jnp.float32)
    y_ref[0] = acc.astype(y_ref.dtype)              # bf16 writeback to HBM

    # Per-partition global BN statistics (accumulated across the sequential
    # "arbitrary" grid axis, one stats block per "parallel" partition).
    @pl.when(pl.program_id(1) == 0)
    def _():
        st_ref[...] = jnp.zeros_like(st_ref)

    st_ref[0] += jnp.concatenate(
        [jnp.sum(acc, axis=0, keepdims=True),
         jnp.sum(acc * acc, axis=0, keepdims=True)], axis=0)


def conv_bn_stats(phases, w_folded, ho, wo, taps, *, out_dtype):
    """phases: list of (N, Hph, Wph, Cin) bf16; w_folded: (ntaps*Cin, Cpad) bf16."""
    nphase = len(phases)
    n, hph, wph, cin = phases[0].shape
    ktot, cpad = w_folded.shape
    ntaps = len(taps)
    assert ktot == ntaps * cin
    m = ho * wo
    nparts = _num_partitions(n)
    n_per = n // nparts

    kernel = functools.partial(_conv_stats_kernel, taps=tuple(taps), ho=ho,
                               wo=wo, nphase=nphase, cin=cin)
    img4 = lambda p, i: (p * n_per + i, 0, 0, 0)
    img3 = lambda p, i: (p * n_per + i, 0, 0)
    in_specs = ([pl.BlockSpec((1, hph, wph, cin), img4)] * nphase
                + [pl.BlockSpec((ktot, cpad), lambda p, i: (0, 0))])
    scratch = [pltpu.VMEM((m, ktot), jnp.bfloat16)] if ntaps > 1 else []

    y, stats = pl.pallas_call(
        kernel,
        grid=(nparts, n_per),
        in_specs=in_specs,
        out_specs=[pl.BlockSpec((1, m, cpad), img3),
                   pl.BlockSpec((1, 2, cpad), lambda p, i: (p, 0, 0))],
        out_shape=[jax.ShapeDtypeStruct((n, m, cpad), out_dtype),
                   jax.ShapeDtypeStruct((nparts, 2, cpad), jnp.float32)],
        scratch_shapes=scratch,
        compiler_params=pltpu.CompilerParams(
            dimension_semantics=("parallel", "arbitrary"),
            vmem_limit_bytes=_VMEM_LIMIT),
    )(*phases, w_folded)
    return y, stats


# ----------------------------------------------------------------------------
# Kernel A2: conv2 with bn1-apply + ReLU fused (out1 never touches HBM)
# ----------------------------------------------------------------------------
def _conv2_fused_kernel(y1_ref, ss_ref, w_ref, y_ref, st_ref, halo_ref,
                        slab_ref, *, ho, wo):
    cpad = y_ref.shape[-1]
    m = ho * wo

    # bn1 fold (scale/shift) + ReLU applied to the VMEM-resident block.
    ss = ss_ref[...]
    out1 = jnp.maximum(y1_ref[0].astype(jnp.float32) * ss[0:1, :] + ss[1:2, :],
                       0.0)

    # Zero-padded spatial halo built in VMEM (no wrapper-side jnp.pad pass).
    halo_ref[...] = jnp.zeros_like(halo_ref)
    halo_ref[1:1 + ho, 1:1 + wo, :] = out1.reshape(ho, wo, cpad).astype(
        jnp.bfloat16)

    # im2col slab (M, 9*Cpad) bf16, then a single MXU dot.
    t = 0
    for kh in range(3):
        for kw in range(3):
            win = halo_ref[kh:kh + ho, kw:kw + wo, :]
            slab_ref[:, t * cpad:(t + 1) * cpad] = win.reshape(m, cpad)
            t += 1
    acc = jnp.dot(slab_ref[...], w_ref[...], preferred_element_type=jnp.float32)
    y_ref[0] = acc.astype(y_ref.dtype)

    @pl.when(pl.program_id(1) == 0)
    def _():
        st_ref[...] = jnp.zeros_like(st_ref)

    st_ref[0] += jnp.concatenate(
        [jnp.sum(acc, axis=0, keepdims=True),
         jnp.sum(acc * acc, axis=0, keepdims=True)], axis=0)


def conv2_bn_stats_fused(y1, ss1, w_folded, ho, wo, *, out_dtype):
    n, m, cpad = y1.shape
    ktot = w_folded.shape[0]
    nparts = _num_partitions(n)
    n_per = n // nparts
    kernel = functools.partial(_conv2_fused_kernel, ho=ho, wo=wo)
    img3 = lambda p, i: (p * n_per + i, 0, 0)

    y2, stats = pl.pallas_call(
        kernel,
        grid=(nparts, n_per),
        in_specs=[pl.BlockSpec((1, m, cpad), img3),
                  pl.BlockSpec((2, cpad), lambda p, i: (0, 0)),
                  pl.BlockSpec((ktot, cpad), lambda p, i: (0, 0))],
        out_specs=[pl.BlockSpec((1, m, cpad), img3),
                   pl.BlockSpec((1, 2, cpad), lambda p, i: (p, 0, 0))],
        out_shape=[jax.ShapeDtypeStruct((n, m, cpad), out_dtype),
                   jax.ShapeDtypeStruct((nparts, 2, cpad), jnp.float32)],
        scratch_shapes=[pltpu.VMEM((ho + 2, wo + 2, cpad), jnp.bfloat16),
                        pltpu.VMEM((m, ktot), jnp.bfloat16)],
        compiler_params=pltpu.CompilerParams(
            dimension_semantics=("parallel", "arbitrary"),
            vmem_limit_bytes=_VMEM_LIMIT),
    )(y1, ss1, w_folded)
    return y2, stats


# ----------------------------------------------------------------------------
# Kernel B: out = relu( y*scale + shift + res*res_scale + res_shift )
# ----------------------------------------------------------------------------
def _bn_apply_kernel(y_ref, ss_ref, res_ref, rs_ref, out_ref):
    ss = ss_ref[...]
    rs = rs_ref[...]
    out = y_ref[...].astype(jnp.float32) * ss[0:1, :] + ss[1:2, :]
    out = out + res_ref[...].astype(jnp.float32) * rs[0:1, :] + rs[1:2, :]
    out_ref[...] = jnp.maximum(out, 0.0).astype(out_ref.dtype)


def bn_apply_residual_relu(y, ss, res, res_ss, *, out_dtype):
    rows, cpad = y.shape
    tr = _pick_row_tile(rows)
    row_spec = pl.BlockSpec((tr, cpad), lambda i: (i, 0))
    par_spec = pl.BlockSpec((2, cpad), lambda i: (0, 0))
    return pl.pallas_call(
        _bn_apply_kernel,
        grid=(rows // tr,),
        in_specs=[row_spec, par_spec, row_spec, par_spec],
        out_specs=row_spec,
        out_shape=jax.ShapeDtypeStruct((rows, cpad), out_dtype),
        compiler_params=pltpu.CompilerParams(
            dimension_semantics=("parallel",),
            vmem_limit_bytes=_VMEM_LIMIT),
    )(y, ss, res, res_ss)


# ----------------------------------------------------------------------------
# Glue: layout plumbing in plain JAX
# ----------------------------------------------------------------------------
def _make_phases(x_nhwc, stride, spatial_pad):
    """Padded bf16 input (stride 1) or its stride x stride phase decomposition."""
    xp = (jnp.pad(x_nhwc, ((0, 0), (1, 1), (1, 1), (0, 0)))
          if spatial_pad else x_nhwc)
    if stride == 1:
        return [xp]
    return [xp[:, pr::stride, pc::stride, :]
            for pr in range(stride) for pc in range(stride)]


def _conv_weight_folded(w_oihw, cin_pad, cout_pad):
    # (Cout, Cin, kh, kw) -> (kh*kw*Cin_pad, Cout_pad): im2col-folded K layout,
    # row block t = kh*3+kw matches the slab's tap order.
    co, ci, kh, kw = w_oihw.shape
    wm = jnp.transpose(w_oihw, (2, 3, 1, 0))
    wm = jnp.pad(wm, ((0, 0), (0, 0), (0, cin_pad - ci), (0, cout_pad - co)))
    return wm.reshape(kh * kw * cin_pad, cout_pad).astype(jnp.bfloat16)


def _fold_bn(stats, gamma, beta, count, cpad):
    """Fold training-mode BN (batch mean, biased var) into scale/shift."""
    st = jnp.sum(stats, axis=0)            # combine megacore partial sums
    cout = gamma.shape[0]
    g = jnp.pad(gamma.astype(jnp.float32), (0, cpad - cout))
    b = jnp.pad(beta.astype(jnp.float32), (0, cpad - cout))
    mean = st[0] / count
    var = jnp.maximum(st[1] / count - mean * mean, 0.0)
    scale = g * lax.rsqrt(var + EPS)
    shift = b - mean * scale
    return jnp.stack([scale, shift]).astype(jnp.float32)


def basic_block_forward(x_nchw, params, stride):
    assert stride in (1, 2)
    # TODO(synk): in a multi-block network keep NHWC + padded channels between
    # blocks and drop these boundary transposes / channel strips.
    x = jnp.transpose(x_nchw, (0, 2, 3, 1))                    # NCHW -> NHWC
    n, h, w, cin = x.shape
    cout = params["w1"].shape[0]
    assert h % stride == 0 and w % stride == 0
    ho, wo = h // stride, w // stride
    m_total = n * ho * wo
    cpad = _round_up(cout, LANE)                               # lane-dense Cout

    xb = x.astype(jnp.bfloat16)                                # single bf16 cast

    # taps: (phase_index, row_offset, col_offset), ordered t = kh*3 + kw.
    if stride == 1:
        taps1 = [(0, kh, kw) for kh in range(3) for kw in range(3)]
    else:
        taps1 = [((kh % 2) * 2 + (kw % 2), kh // 2, kw // 2)
                 for kh in range(3) for kw in range(3)]

    # --- conv1 (+ bn1 stats) --------------------------------------------------
    w1 = _conv_weight_folded(params["w1"], cin, cpad)
    y1, st1 = conv_bn_stats(_make_phases(xb, stride, True), w1, ho, wo, taps1,
                            out_dtype=jnp.bfloat16)
    ss1 = _fold_bn(st1, params["g1"], params["b1"], m_total, cpad)

    # --- shortcut branch --------------------------------------------------------
    if stride != 1 or cin != cout:
        xs = xb[:, ::stride, ::stride, :]
        ws = _conv_weight_folded(params["ws"], cin, cpad)      # 1x1: single tap
        res, sts = conv_bn_stats([xs], ws, ho, wo, [(0, 0, 0)],
                                 out_dtype=jnp.bfloat16)
        res = res.reshape(m_total, cpad)
        res_ss = _fold_bn(sts, params["gs"], params["bs"], m_total, cpad)
    else:
        res = jnp.pad(xb.reshape(m_total, cin), ((0, 0), (0, cpad - cin)))
        res_ss = jnp.stack([jnp.ones((cpad,), jnp.float32),
                            jnp.zeros((cpad,), jnp.float32)])

    # --- conv2 with fused bn1-apply + ReLU (+ bn2 stats) ------------------------
    w2 = _conv_weight_folded(params["w2"], cpad, cpad)  # padded Cin = zero rows
    y2, st2 = conv2_bn_stats_fused(y1, ss1, w2, ho, wo, out_dtype=jnp.bfloat16)
    ss2 = _fold_bn(st2, params["g2"], params["b2"], m_total, cpad)

    # --- bn2 + shortcut + ReLU, flattened lane-dense rows -----------------------
    out = bn_apply_residual_relu(y2.reshape(m_total, cpad), ss2, res, res_ss,
                                 out_dtype=jnp.float32)
    out = out.reshape(n, ho, wo, cpad)[:, :, :, :cout]          # strip chan pad
    return jnp.transpose(out, (0, 3, 1, 2))                     # NHWC -> NCHW


# ----------------------------------------------------------------------------
# Pure-JAX reference (emulates the kernel's bf16 matmul-operand rounding;
# the kernel additionally keeps intermediates in bf16 in HBM, hence the 5e-2
# mixed-precision tolerance below).
# ----------------------------------------------------------------------------
def ref_block(x, params, stride):
    q = lambda a: a.astype(jnp.bfloat16).astype(jnp.float32)

    def bn(y, g, b):
        mean = y.mean(axis=(0, 2, 3), keepdims=True)
        var = jnp.square(y - mean).mean(axis=(0, 2, 3), keepdims=True)
        return (g.reshape(1, -1, 1, 1) * (y - mean) * lax.rsqrt(var + EPS)
                + b.reshape(1, -1, 1, 1))

    dn = ("NCHW", "OIHW", "NCHW")
    y = lax.conv_general_dilated(q(x), q(params["w1"]), (stride, stride),
                                 ((1, 1), (1, 1)), dimension_numbers=dn)
    y = jax.nn.relu(bn(y, params["g1"], params["b1"]))
    y2 = lax.conv_general_dilated(q(y), q(params["w2"]), (1, 1),
                                  ((1, 1), (1, 1)), dimension_numbers=dn)
    y2 = bn(y2, params["g2"], params["b2"])
    if stride != 1 or x.shape[1] != params["w1"].shape[0]:
        s = lax.conv_general_dilated(q(x), q(params["ws"]), (stride, stride),
                                     ((0, 0), (0, 0)), dimension_numbers=dn)
        s = bn(s, params["gs"], params["bs"])
    else:
        s = x
    return jax.nn.relu(y2 + s)


def _make_params(key, cin, cout, with_proj):
    ks = jax.random.split(key, 3)
    p = {
        "w1": jax.random.normal(ks[0], (cout, cin, 3, 3), jnp.float32) * 0.1,
        "g1": jnp.full((cout,), 1.2, jnp.float32),
        "b1": jnp.full((cout,), 0.1, jnp.float32),
        "w2": jax.random.normal(ks[1], (cout, cout, 3, 3), jnp.float32) * 0.1,
        "g2": jnp.full((cout,), 0.9, jnp.float32),
        "b2": jnp.full((cout,), -0.05, jnp.float32),
    }
    if with_proj:
        p.update({
            "ws": jax.random.normal(ks[2], (cout, cin, 1, 1), jnp.float32) * 0.1,
            "gs": jnp.full((cout,), 1.1, jnp.float32),
            "bs": jnp.full((cout,), 0.02, jnp.float32),
        })
    return p


if __name__ == "__main__":
    key = jax.random.PRNGKey(0)
    k_x, k_p = jax.random.split(key)
    TOL = 5e-2  # mixed-precision (bf16 intermediates) vs f32-storage reference

    # Case 1: downsampling block with projection shortcut (stride 2, Cin != Cout).
    N, Cin, H, W, Cout, stride = 2, 4, 16, 16, 8, 2
    x = jax.random.normal(k_x, (N, Cin, H, W), jnp.float32)
    params = _make_params(k_p, Cin, Cout, with_proj=True)
    fwd = jax.jit(functools.partial(basic_block_forward, stride=stride))
    out = jax.block_until_ready(fwd(x, params))
    assert out.shape == (N, Cout, H // stride, W // stride), out.shape
    err = float(jnp.max(jnp.abs(out - ref_block(x, params, stride))))
    assert err < TOL, f"projection-block max abs err {err}"

    # Case 2: identity-shortcut block (stride 1, Cin == Cout).
    N2, C2, H2, W2 = 2, 8, 16, 16
    x2 = jax.random.normal(jax.random.fold_in(k_x, 1), (N2, C2, H2, W2),
                           jnp.float32)
    params2 = _make_params(jax.random.fold_in(k_p, 1), C2, C2, with_proj=False)
    fwd2 = jax.jit(functools.partial(basic_block_forward, stride=1))
    out2 = jax.block_until_ready(fwd2(x2, params2))
    assert out2.shape == (N2, C2, H2, W2), out2.shape
    err2 = float(jnp.max(jnp.abs(out2 - ref_block(x2, params2, 1))))
    assert err2 < TOL, f"identity-block max abs err {err2}"

    print("KERNEL_OK")
</pallas_src>

<mosaic_0001>
module attributes {stable_mosaic.version = 11 : i64} {
  func.func @_conv_stats_kernel(%arg0: i32, %arg1: i32, %arg2: memref<1x8x8x4xbf16, #tpu.memory_space<vmem>>, %arg3: memref<4x128xbf16, #tpu.memory_space<vmem>>, %arg4: memref<1x64x128xbf16, #tpu.memory_space<vmem>>, %arg5: memref<1x2x128xf32, #tpu.memory_space<vmem>>) attributes {dimension_semantics = [#tpu.dimension_semantics<parallel>, #tpu.dimension_semantics<arbitrary>], iteration_bounds = array<i64: 2, 1>, scalar_prefetch = 0 : i64, scratch_operands = 0 : i64, tpu.core_type = #tpu.core_type<tc>, window_params = [{transform_indices = @transform_0, window_bounds = array<i64: 1, 8, 8, 4>}, {pipeline_mode = #tpu.pipeline_mode<synchronous>, transform_indices = @transform_1, window_bounds = array<i64: 4, 128>}, {transform_indices = @transform_2, window_bounds = array<i64: 1, 64, 128>}, {transform_indices = @transform_3, window_bounds = array<i64: 1, 2, 128>}]} {
    %c0 = arith.constant 0 : index
    %c0_0 = arith.constant 0 : index
    %c0_1 = arith.constant 0 : index
    %c0_2 = arith.constant 0 : index
    %0 = vector.load %arg2[%c0, %c0_0, %c0_1, %c0_2] : memref<1x8x8x4xbf16, #tpu.memory_space<vmem>>, vector<1x8x8x4xbf16>
    %1 = vector.shape_cast %0 : vector<1x8x8x4xbf16> to vector<8x8x4xbf16>
    %2 = vector.shape_cast %1 : vector<8x8x4xbf16> to vector<64x4xbf16>
    %c0_3 = arith.constant 0 : index
    %c0_4 = arith.constant 0 : index
    %3 = vector.load %arg3[%c0_3, %c0_4] : memref<4x128xbf16, #tpu.memory_space<vmem>>, vector<4x128xbf16>
    %cst = arith.constant dense<0.000000e+00> : vector<64x128xf32>
    %4 = tpu.matmul %2, %3, %cst {dimension_numbers = #tpu.dot_dimension_numbers<[1], [0], [0], [1], [0, 0, 1, 1], [], []>} : vector<64x4xbf16>, vector<4x128xbf16>, vector<64x128xf32> -> vector<64x128xf32>
    %5 = arith.truncf %4 : vector<64x128xf32> to vector<64x128xbf16>
    %c0_5 = arith.constant 0 : index
    %c0_6 = arith.constant 0 : index
    %c0_7 = arith.constant 0 : index
    %6 = vector.load %arg4[%c0_5, %c0_6, %c0_7] : memref<1x64x128xbf16, #tpu.memory_space<vmem>>, vector<1x64x128xbf16>
    %7 = vector.shape_cast %6 : vector<1x64x128xbf16> to vector<64x128xbf16>
    %8 = vector.shape_cast %5 : vector<64x128xbf16> to vector<1x64x128xbf16>
    tpu.vector_store %arg4[%c0_5, %c0_6, %c0_7], %8 {strides = array<i32>} : memref<1x64x128xbf16, #tpu.memory_space<vmem>>, vector<1x64x128xbf16>,
    %c0_i32 = arith.constant 0 : i32
    %9 = arith.cmpi eq, %arg1, %c0_i32 : i32
    %10 = arith.extui %9 : i1 to i32
    %c0_i32_8 = arith.constant 0 : i32
    %11 = arith.cmpi ne, %10, %c0_i32_8 : i32
    scf.if %11 {
      %cst_17 = arith.constant 0.000000e+00 : f32
      %24 = vector.broadcast %cst_17 : f32 to vector<1x2x128xf32>
      %c0_18 = arith.constant 0 : index
      %c0_19 = arith.constant 0 : index
      %c0_20 = arith.constant 0 : index
      %25 = vector.load %arg5[%c0_18, %c0_19, %c0_20] : memref<1x2x128xf32, #tpu.memory_space<vmem>>, vector<1x2x128xf32>
      tpu.vector_store %arg5[%c0_18, %c0_19, %c0_20], %24 {strides = array<i32>} : memref<1x2x128xf32, #tpu.memory_space<vmem>>, vector<1x2x128xf32>,
    } else {
    }
    %c0_9 = arith.constant 0 : index
    %c0_10 = arith.constant 0 : index
    %c0_11 = arith.constant 0 : index
    %12 = vector.load %arg5[%c0_9, %c0_10, %c0_11] : memref<1x2x128xf32, #tpu.memory_space<vmem>>, vector<1x2x128xf32>
    %13 = vector.shape_cast %12 : vector<1x2x128xf32> to vector<2x128xf32>
    %cst_12 = arith.constant dense<0.000000e+00> : vector<128xf32>
    %14 = vector.multi_reduction <add>, %4, %cst_12 [0] : vector<64x128xf32> to vector<128xf32>
    %15 = vector.shape_cast %14 : vector<128xf32> to vector<1x128xf32>
    %16 = arith.mulf %4, %4 : vector<64x128xf32>
    %cst_13 = arith.constant dense<0.000000e+00> : vector<128xf32>
    %17 = vector.multi_reduction <add>, %16, %cst_13 [0] : vector<64x128xf32> to vector<128xf32>
    %18 = vector.shape_cast %17 : vector<128xf32> to vector<1x128xf32>
    %19 = tpu.concatenate %15, %18 in 0 : vector<1x128xf32>, vector<1x128xf32> -> vector<2x128xf32>
    %20 = arith.addf %13, %19 : vector<2x128xf32>
    %c0_14 = arith.constant 0 : index
    %c0_15 = arith.constant 0 : index
    %c0_16 = arith.constant 0 : index
    %21 = vector.load %arg5[%c0_14, %c0_15, %c0_16] : memref<1x2x128xf32, #tpu.memory_space<vmem>>, vector<1x2x128xf32>
    %22 = vector.shape_cast %21 : vector<1x2x128xf32> to vector<2x128xf32>
    %23 = vector.shape_cast %20 : vector<2x128xf32> to vector<1x2x128xf32>
    tpu.vector_store %arg5[%c0_14, %c0_15, %c0_16], %23 {strides = array<i32>} : memref<1x2x128xf32, #tpu.memory_space<vmem>>, vector<1x2x128xf32>,
    return
  }
  func.func @transform_0(%arg0: i32, %arg1: i32) -> (i32, i32, i32, i32) {
    %c1_i32 = arith.constant 1 : i32
    %0 = arith.muli %arg0, %c1_i32 : i32
    %1 = arith.addi %0, %arg1 : i32
    %c0_i32 = arith.constant 0 : i32
    %c0_i32_0 = arith.constant 0 : i32
    %c0_i32_1 = arith.constant 0 : i32
    %c0_i32_2 = arith.constant 0 : i32
    return %1, %c0_i32, %c0_i32_0, %c0_i32_1 : i32, i32, i32, i32
  }
  func.func @transform_1(%arg0: i32, %arg1: i32) -> (i32, i32) {
    %c0_i32 = arith.constant 0 : i32
    %c0_i32_0 = arith.constant 0 : i32
    %c0_i32_1 = arith.constant 0 : i32
    return %c0_i32, %c0_i32_0 : i32, i32
  }
  func.func @transform_2(%arg0: i32, %arg1: i32) -> (i32, i32, i32) {
    %c1_i32 = arith.constant 1 : i32
    %0 = arith.muli %arg0, %c1_i32 : i32
    %1 = arith.addi %0, %arg1 : i32
    %c0_i32 = arith.constant 0 : i32
    %c0_i32_0 = arith.constant 0 : i32
    %c0_i32_1 = arith.constant 0 : i32
    return %1, %c0_i32, %c0_i32_0 : i32, i32, i32
  }
  func.func @transform_3(%arg0: i32, %arg1: i32) -> (i32, i32, i32) {
    %c0_i32 = arith.constant 0 : i32
    %c0_i32_0 = arith.constant 0 : i32
    %c0_i32_1 = arith.constant 0 : i32
    return %arg0, %c0_i32, %c0_i32_0 : i32, i32, i32
  }
}

module attributes {stable_mosaic.version = 11 : i64} {
  func.func @_conv_stats_kernel(%arg0: i32, %arg1: i32, %arg2: memref<1x9x9x4xbf16, #tpu.memory_space<vmem>>, %arg3: memref<1x9x9x4xbf16, #tpu.memory_space<vmem>>, %arg4: memref<1x9x9x4xbf16, #tpu.memory_space<vmem>>, %arg5: memref<1x9x9x4xbf16, #tpu.memory_space<vmem>>, %arg6: memref<36x128xbf16, #tpu.memory_space<vmem>>, %arg7: memref<1x64x128xbf16, #tpu.memory_space<vmem>>, %arg8: memref<1x2x128xf32, #tpu.memory_space<vmem>>, %arg9: memref<64x36xbf16, #tpu.memory_space<vmem>>) attributes {dimension_semantics = [#tpu.dimension_semantics<parallel>, #tpu.dimension_semantics<arbitrary>], iteration_bounds = array<i64: 2, 1>, scalar_prefetch = 0 : i64, scratch_operands = 1 : i64, tpu.core_type = #tpu.core_type<tc>, window_params = [{transform_indices = @transform_0, window_bounds = array<i64: 1, 9, 9, 4>}, {transform_indices = @transform_1, window_bounds = array<i64: 1, 9, 9, 4>}, {transform_indices = @transform_2, window_bounds = array<i64: 1, 9, 9, 4>}, {transform_indices = @transform_3, window_bounds = array<i64: 1, 9, 9, 4>}, {pipeline_mode = #tpu.pipeline_mode<synchronous>, transform_indices = @transform_4, window_bounds = array<i64: 36, 128>}, {transform_indices = @transform_5, window_bounds = array<i64: 1, 64, 128>}, {transform_indices = @transform_6, window_bounds = array<i64: 1, 2, 128>}]} {
    %c0 = arith.constant 0 : index
    %c0_0 = arith.constant 0 : index
    %c0_1 = arith.constant 0 : index
    %c0_2 = arith.constant 0 : index
    %0 = vector.load %arg2[%c0, %c0_0, %c0_1, %c0_2] : memref<1x9x9x4xbf16, #tpu.memory_space<vmem>>, vector<1x8x8x4xbf16>
    %1 = vector.shape_cast %0 : vector<1x8x8x4xbf16> to vector<8x8x4xbf16>
    %2 = vector.shape_cast %1 : vector<8x8x4xbf16> to vector<64x4xbf16>
    %c0_3 = arith.constant 0 : index
    %c0_4 = arith.constant 0 : index
    %3 = vector.load %arg9[%c0_3, %c0_4] : memref<64x36xbf16, #tpu.memory_space<vmem>>, vector<64x4xbf16>
    tpu.vector_store %arg9[%c0_3, %c0_4], %2 {strides = array<i32>} : memref<64x36xbf16, #tpu.memory_space<vmem>>, vector<64x4xbf16>,
    %c0_5 = arith.constant 0 : index
    %c0_6 = arith.constant 0 : index
    %c0_7 = arith.constant 0 : index
    %c0_8 = arith.constant 0 : index
    %4 = vector.load %arg3[%c0_5, %c0_6, %c0_7, %c0_8] : memref<1x9x9x4xbf16, #tpu.memory_space<vmem>>, vector<1x8x8x4xbf16>
    %5 = vector.shape_cast %4 : vector<1x8x8x4xbf16> to vector<8x8x4xbf16>
    %6 = vector.shape_cast %5 : vector<8x8x4xbf16> to vector<64x4xbf16>
    %c0_9 = arith.constant 0 : index
    %c4 = arith.constant 4 : index
    %7 = vector.load %arg9[%c0_9, %c4] : memref<64x36xbf16, #tpu.memory_space<vmem>>, vector<64x4xbf16>
    tpu.vector_store %arg9[%c0_9, %c4], %6 {strides = array<i32>} : memref<64x36xbf16, #tpu.memory_space<vmem>>, vector<64x4xbf16>,
    %c0_10 = arith.constant 0 : index
    %c0_11 = arith.constant 0 : index
    %c1 = arith.constant 1 : index
    %c0_12 = arith.constant 0 : index
    %8 = vector.load %arg2[%c0_10, %c0_11, %c1, %c0_12] : memref<1x9x9x4xbf16, #tpu.memory_space<vmem>>, vector<1x8x8x4xbf16>
    %9 = vector.shape_cast %8 : vector<1x8x8x4xbf16> to vector<8x8x4xbf16>
    %10 = vector.shape_cast %9 : vector<8x8x4xbf16> to vector<64x4xbf16>
    %c0_13 = arith.constant 0 : index
    %c8 = arith.constant 8 : index
    %11 = vector.load %arg9[%c0_13, %c8] : memref<64x36xbf16, #tpu.memory_space<vmem>>, vector<64x4xbf16>
    tpu.vector_store %arg9[%c0_13, %c8], %10 {strides = array<i32>} : memref<64x36xbf16, #tpu.memory_space<vmem>>, vector<64x4xbf16>,
    %c0_14 = arith.constant 0 : index
    %c0_15 = arith.constant 0 : index
    %c0_16 = arith.constant 0 : index
    %c0_17 = arith.constant 0 : index
    %12 = vector.load %arg4[%c0_14, %c0_15, %c0_16, %c0_17] : memref<1x9x9x4xbf16, #tpu.memory_space<vmem>>, vector<1x8x8x4xbf16>
    %13 = vector.shape_cast %12 : vector<1x8x8x4xbf16> to vector<8x8x4xbf16>
    %14 = vector.shape_cast %13 : vector<8x8x4xbf16> to vector<64x4xbf16>
    %c0_18 = arith.constant 0 : index
    %c12 = arith.constant 12 : index
    %15 = vector.load %arg9[%c0_18, %c12] : memref<64x36xbf16, #tpu.memory_space<vmem>>, vector<64x4xbf16>
    tpu.vector_store %arg9[%c0_18, %c12], %14 {strides = array<i32>} : memref<64x36xbf16, #tpu.memory_space<vmem>>, vector<64x4xbf16>,
    %c0_19 = arith.constant 0 : index
    %c0_20 = arith.constant 0 : index
    %c0_21 = arith.constant 0 : index
    %c0_22 = arith.constant 0 : index
    %16 = vector.load %arg5[%c0_19, %c0_20, %c0_21, %c0_22] : memref<1x9x9x4xbf16, #tpu.memory_space<vmem>>, vector<1x8x8x4xbf16>
    %17 = vector.shape_cast %16 : vector<1x8x8x4xbf16> to vector<8x8x4xbf16>
    %18 = vector.shape_cast %17 : vector<8x8x4xbf16> to vector<64x4xbf16>
    %c0_23 = arith.constant 0 : index
    %c16 = arith.constant 16 : index
    %19 = vector.load %arg9[%c0_23, %c16] : memref<64x36xbf16, #tpu.memory_space<vmem>>, vector<64x4xbf16>
    tpu.vector_store %arg9[%c0_23, %c16], %18 {strides = array<i32>} : memref<64x36xbf16, #tpu.memory_space<vmem>>, vector<64x4xbf16>,
    %c0_24 = arith.constant 0 : index
    %c0_25 = arith.constant 0 : index
    %c1_26 = arith.constant 1 : index
    %c0_27 = arith.constant 0 : index
    %20 = vector.load %arg4[%c0_24, %c0_25, %c1_26, %c0_27] : memref<1x9x9x4xbf16, #tpu.memory_space<vmem>>, vector<1x8x8x4xbf16>
    %21 = vector.shape_cast %20 : vector<1x8x8x4xbf16> to vector<8x8x4xbf16>
    %22 = vector.shape_cast %21 : vector<8x8x4xbf16> to vector<64x4xbf16>
    %c0_28 = arith.constant 0 : index
    %c20 = arith.constant 20 : index
    %23 = vector.load %arg9[%c0_28, %c20] : memref<64x36xbf16, #tpu.memory_space<vmem>>, vector<64x4xbf16>
    tpu.vector_store %arg9[%c0_28, %c20], %22 {strides = array<i32>} : memref<64x36xbf16, #tpu.memory_space<vmem>>, vector<64x4xbf16>,
    %c0_29 = arith.constant 0 : index
    %c1_30 = arith.constant 1 : index
    %c0_31 = arith.constant 0 : index
    %c0_32 = arith.constant 0 : index
    %24 = vector.load %arg2[%c0_29, %c1_30, %c0_31, %c0_32] : memref<1x9x9x4xbf16, #tpu.memory_space<vmem>>, vector<1x8x8x4xbf16>
    %25 = vector.shape_cast %24 : vector<1x8x8x4xbf16> to vector<8x8x4xbf16>
    %26 = vector.shape_cast %25 : vector<8x8x4xbf16> to vector<64x4xbf16>
    %c0_33 = arith.constant 0 : index
    %c24 = arith.constant 24 : index
    %27 = vector.load %arg9[%c0_33, %c24] : memref<64x36xbf16, #tpu.memory_space<vmem>>, vector<64x4xbf16>
    tpu.vector_store %arg9[%c0_33, %c24], %26 {strides = array<i32>} : memref<64x36xbf16, #tpu.memory_space<vmem>>, vector<64x4xbf16>,
    %c0_34 = arith.constant 0 : index
    %c1_35 = arith.constant 1 : index
    %c0_36 = arith.constant 0 : index
    %c0_37 = arith.constant 0 : index
    %28 = vector.load %arg3[%c0_34, %c1_35, %c0_36, %c0_37] : memref<1x9x9x4xbf16, #tpu.memory_space<vmem>>, vector<1x8x8x4xbf16>
    %29 = vector.shape_cast %28 : vector<1x8x8x4xbf16> to vector<8x8x4xbf16>
    %30 = vector.shape_cast %29 : vector<8x8x4xbf16> to vector<64x4xbf16>
    %c0_38 = arith.constant 0 : index
    %c28 = arith.constant 28 : index
    %31 = vector.load %arg9[%c0_38, %c28] : memref<64x36xbf16, #tpu.memory_space<vmem>>, vector<64x4xbf16>
    tpu.vector_store %arg9[%c0_38, %c28], %30 {strides = array<i32>} : memref<64x36xbf16, #tpu.memory_space<vmem>>, vector<64x4xbf16>,
    %c0_39 = arith.constant 0 : index
    %c1_40 = arith.constant 1 : index
    %c1_41 = arith.constant 1 : index
    %c0_42 = arith.constant 0 : index
    %32 = vector.load %arg2[%c0_39, %c1_40, %c1_41, %c0_42] : memref<1x9x9x4xbf16, #tpu.memory_space<vmem>>, vector<1x8x8x4xbf16>
    %33 = vector.shape_cast %32 : vector<1x8x8x4xbf16> to vector<8x8x4xbf16>
    %34 = vector.shape_cast %33 : vector<8x8x4xbf16> to vector<64x4xbf16>
    %c0_43 = arith.constant 0 : index
    %c32 = arith.constant 32 : index
    %35 = vector.load %arg9[%c0_43, %c32] : memref<64x36xbf16, #tpu.memory_space<vmem>>, vector<64x4xbf16>
    tpu.vector_store %arg9[%c0_43, %c32], %34 {strides = array<i32>} : memref<64x36xbf16, #tpu.memory_space<vmem>>, vector<64x4xbf16>,
    %c0_44 = arith.constant 0 : index
    %c0_45 = arith.constant 0 : index
    %36 = vector.load %arg9[%c0_44, %c0_45] : memref<64x36xbf16, #tpu.memory_space<vmem>>, vector<64x36xbf16>
    %c0_46 = arith.constant 0 : index
    %c0_47 = arith.constant 0 : index
    %37 = vector.load %arg6[%c0_46, %c0_47] : memref<36x128xbf16, #tpu.memory_space<vmem>>, vector<36x128xbf16>
    %cst = arith.constant dense<0.000000e+00> : vector<64x128xf32>
    %38 = tpu.matmul %36, %37, %cst {dimension_numbers = #tpu.dot_dimension_numbers<[1], [0], [0], [1], [0, 0, 1, 1], [], []>} : vector<64x36xbf16>, vector<36x128xbf16>, vector<64x128xf32> -> vector<64x128xf32>
    %39 = arith.truncf %38 : vector<64x128xf32> to vector<64x128xbf16>
    %c0_48 = arith.constant 0 : index
    %c0_49 = arith.constant 0 : index
    %c0_50 = arith.constant 0 : index
    %40 = vector.load %arg7[%c0_48, %c0_49, %c0_50] : memref<1x64x128xbf16, #tpu.memory_space<vmem>>, vector<1x64x128xbf16>
    %41 = vector.shape_cast %40 : vector<1x64x128xbf16> to vector<64x128xbf16>
    %42 = vector.shape_cast %39 : vector<64x128xbf16> to vector<1x64x128xbf16>
    tpu.vector_store %arg7[%c0_48, %c0_49, %c0_50], %42 {strides = array<i32>} : memref<1x64x128xbf16, #tpu.memory_space<vmem>>, vector<1x64x128xbf16>,
    %c0_i32 = arith.constant 0 : i32
    %43 = arith.cmpi eq, %arg1, %c0_i32 : i32
    %44 = arith.extui %43 : i1 to i32
    %c0_i32_51 = arith.constant 0 : i32
    %45 = arith.cmpi ne, %44, %c0_i32_51 : i32
    scf.if %45 {
      %cst_60 = arith.constant 0.000000e+00 : f32
      %58 = vector.broadcast %cst_60 : f32 to vector<1x2x128xf32>
      %c0_61 = arith.constant 0 : index
      %c0_62 = arith.constant 0 : index
      %c0_63 = arith.constant 0 : index
      %59 = vector.load %arg8[%c0_61, %c0_62, %c0_63] : memref<1x2x128xf32, #tpu.memory_space<vmem>>, vector<1x2x128xf32>
      tpu.vector_store %arg8[%c0_61, %c0_62, %c0_63], %58 {strides = array<i32>} : memref<1x2x128xf32, #tpu.memory_space<vmem>>, vector<1x2x128xf32>,
    } else {
    }
    %c0_52 = arith.constant 0 : index
    %c0_53 = arith.constant 0 : index
    %c0_54 = arith.constant 0 : index
    %46 = vector.load %arg8[%c0_52, %c0_53, %c0_54] : memref<1x2x128xf32, #tpu.memory_space<vmem>>, vector<1x2x128xf32>
    %47 = vector.shape_cast %46 : vector<1x2x128xf32> to vector<2x128xf32>
    %cst_55 = arith.constant dense<0.000000e+00> : vector<128xf32>
    %48 = vector.multi_reduction <add>, %38, %cst_55 [0] : vector<64x128xf32> to vector<128xf32>
    %49 = vector.shape_cast %48 : vector<128xf32> to vector<1x128xf32>
    %50 = arith.mulf %38, %38 : vector<64x128xf32>
    %cst_56 = arith.constant dense<0.000000e+00> : vector<128xf32>
    %51 = vector.multi_reduction <add>, %50, %cst_56 [0] : vector<64x128xf32> to vector<128xf32>
    %52 = vector.shape_cast %51 : vector<128xf32> to vector<1x128xf32>
    %53 = tpu.concatenate %49, %52 in 0 : vector<1x128xf32>, vector<1x128xf32> -> vector<2x128xf32>
    %54 = arith.addf %47, %53 : vector<2x128xf32>
    %c0_57 = arith.constant 0 : index
    %c0_58 = arith.constant 0 : index
    %c0_59 = arith.constant 0 : index
    %55 = vector.load %arg8[%c0_57, %c0_58, %c0_59] : memref<1x2x128xf32, #tpu.memory_space<vmem>>, vector<1x2x128xf32>
    %56 = vector.shape_cast %55 : vector<1x2x128xf32> to vector<2x128xf32>
    %57 = vector.shape_cast %54 : vector<2x128xf32> to vector<1x2x128xf32>
    tpu.vector_store %arg8[%c0_57, %c0_58, %c0_59], %57 {strides = array<i32>} : memref<1x2x128xf32, #tpu.memory_space<vmem>>, vector<1x2x128xf32>,
    return
  }
  func.func @transform_0(%arg0: i32, %arg1: i32) -> (i32, i32, i32, i32) {
    %c1_i32 = arith.constant 1 : i32
    %0 = arith.muli %arg0, %c1_i32 : i32
    %1 = arith.addi %0, %arg1 : i32
    %c0_i32 = arith.constant 0 : i32
    %c0_i32_0 = arith.constant 0 : i32
    %c0_i32_1 = arith.constant 0 : i32
    %c0_i32_2 = arith.constant 0 : i32
    return %1, %c0_i32, %c0_i32_0, %c0_i32_1 : i32, i32, i32, i32
  }
  func.func @transform_1(%arg0: i32, %arg1: i32) -> (i32, i32, i32, i32) {
    %c1_i32 = arith.constant 1 : i32
    %0 = arith.muli %arg0, %c1_i32 : i32
    %1 = arith.addi %0, %arg1 : i32
    %c0_i32 = arith.constant 0 : i32
    %c0_i32_0 = arith.constant 0 : i32
    %c0_i32_1 = arith.constant 0 : i32
    %c0_i32_2 = arith.constant 0 : i32
    return %1, %c0_i32, %c0_i32_0, %c0_i32_1 : i32, i32, i32, i32
  }
  func.func @transform_2(%arg0: i32, %arg1: i32) -> (i32, i32, i32, i32) {
    %c1_i32 = arith.constant 1 : i32
    %0 = arith.muli %arg0, %c1_i32 : i32
    %1 = arith.addi %0, %arg1 : i32
    %c0_i32 = arith.constant 0 : i32
    %c0_i32_0 = arith.constant 0 : i32
    %c0_i32_1 = arith.constant 0 : i32
    %c0_i32_2 = arith.constant 0 : i32
    return %1, %c0_i32, %c0_i32_0, %c0_i32_1 : i32, i32, i32, i32
  }
  func.func @transform_3(%arg0: i32, %arg1: i32) -> (i32, i32, i32, i32) {
    %c1_i32 = arith.constant 1 : i32
    %0 = arith.muli %arg0, %c1_i32 : i32
    %1 = arith.addi %0, %arg1 : i32
    %c0_i32 = arith.constant 0 : i32
    %c0_i32_0 = arith.constant 0 : i32
    %c0_i32_1 = arith.constant 0 : i32
    %c0_i32_2 = arith.constant 0 : i32
    return %1, %c0_i32, %c0_i32_0, %c0_i32_1 : i32, i32, i32, i32
  }
  func.func @transform_4(%arg0: i32, %arg1: i32) -> (i32, i32) {
    %c0_i32 = arith.constant 0 : i32
    %c0_i32_0 = arith.constant 0 : i32
    %c0_i32_1 = arith.constant 0 : i32
    return %c0_i32, %c0_i32_0 : i32, i32
  }
  func.func @transform_5(%arg0: i32, %arg1: i32) -> (i32, i32, i32) {
    %c1_i32 = arith.constant 1 : i32
    %0 = arith.muli %arg0, %c1_i32 : i32
    %1 = arith.addi %0, %arg1 : i32
    %c0_i32 = arith.constant 0 : i32
    %c0_i32_0 = arith.constant 0 : i32
    %c0_i32_1 = arith.constant 0 : i32
    return %1, %c0_i32, %c0_i32_0 : i32, i32, i32
  }
  func.func @transform_6(%arg0: i32, %arg1: i32) -> (i32, i32, i32) {
    %c0_i32 = arith.constant 0 : i32
    %c0_i32_0 = arith.constant 0 : i32
    %c0_i32_1 = arith.constant 0 : i32
    return %arg0, %c0_i32, %c0_i32_0 : i32, i32, i32
  }
}

module attributes {stable_mosaic.version = 11 : i64} {
  func.func @_bn_apply_kernel(%arg0: i32, %arg1: memref<128x128xbf16, #tpu.memory_space<vmem>>, %arg2: memref<2x128xf32, #tpu.memory_space<vmem>>, %arg3: memref<128x128xbf16, #tpu.memory_space<vmem>>, %arg4: memref<2x128xf32, #tpu.memory_space<vmem>>, %arg5: memref<128x128xf32, #tpu.memory_space<vmem>>) attributes {dimension_semantics = [#tpu.dimension_semantics<parallel>], iteration_bounds = array<i64: 1>, scalar_prefetch = 0 : i64, scratch_operands = 0 : i64, tpu.core_type = #tpu.core_type<tc>, window_params = [{transform_indices = @transform_0, window_bounds = array<i64: 128, 128>}, {pipeline_mode = #tpu.pipeline_mode<synchronous>, transform_indices = @transform_1, window_bounds = array<i64: 2, 128>}, {transform_indices = @transform_2, window_bounds = array<i64: 128, 128>}, {pipeline_mode = #tpu.pipeline_mode<synchronous>, transform_indices = @transform_3, window_bounds = array<i64: 2, 128>}, {transform_indices = @transform_4, window_bounds = array<i64: 128, 128>}]} {
    %c0 = arith.constant 0 : index
    %c0_0 = arith.constant 0 : index
    %0 = vector.load %arg2[%c0, %c0_0] : memref<2x128xf32, #tpu.memory_space<vmem>>, vector<2x128xf32>
    %c0_1 = arith.constant 0 : index
    %c0_2 = arith.constant 0 : index
    %1 = vector.load %arg4[%c0_1, %c0_2] : memref<2x128xf32, #tpu.memory_space<vmem>>, vector<2x128xf32>
    %c0_3 = arith.constant 0 : index
    %c0_4 = arith.constant 0 : index
    %2 = vector.load %arg1[%c0_3, %c0_4] : memref<128x128xbf16, #tpu.memory_space<vmem>>, vector<128x128xbf16>
    %3 = arith.extf %2 : vector<128x128xbf16> to vector<128x128xf32>
    %4 = vector.extract_strided_slice %0 {offsets = [0, 0], sizes = [1, 128], strides = [1, 1]} : vector<2x128xf32> to vector<1x128xf32>
    %5 = vector.broadcast %4 : vector<1x128xf32> to vector<128x128xf32>
    %6 = arith.mulf %3, %5 : vector<128x128xf32>
    %7 = vector.extract_strided_slice %0 {offsets = [1, 0], sizes = [1, 128], strides = [1, 1]} : vector<2x128xf32> to vector<1x128xf32>
    %8 = vector.broadcast %7 : vector<1x128xf32> to vector<128x128xf32>
    %9 = arith.addf %6, %8 : vector<128x128xf32>
    %c0_5 = arith.constant 0 : index
    %c0_6 = arith.constant 0 : index
    %10 = vector.load %arg3[%c0_5, %c0_6] : memref<128x128xbf16, #tpu.memory_space<vmem>>, vector<128x128xbf16>
    %11 = arith.extf %10 : vector<128x128xbf16> to vector<128x128xf32>
    %12 = vector.extract_strided_slice %1 {offsets = [0, 0], sizes = [1, 128], strides = [1, 1]} : vector<2x128xf32> to vector<1x128xf32>
    %13 = vector.broadcast %12 : vector<1x128xf32> to vector<128x128xf32>
    %14 = arith.mulf %11, %13 : vector<128x128xf32>
    %15 = arith.addf %9, %14 : vector<128x128xf32>
    %16 = vector.extract_strided_slice %1 {offsets = [1, 0], sizes = [1, 128], strides = [1, 1]} : vector<2x128xf32> to vector<1x128xf32>
    %17 = vector.broadcast %16 : vector<1x128xf32> to vector<128x128xf32>
    %18 = arith.addf %15, %17 : vector<128x128xf32>
    %cst = arith.constant 0.000000e+00 : f32
    %19 = vector.broadcast %cst : f32 to vector<128x128xf32>
    %20 = arith.maximumf %18, %19 : vector<128x128xf32>
    %c0_7 = arith.constant 0 : index
    %c0_8 = arith.constant 0 : index
    %21 = vector.load %arg5[%c0_7, %c0_8] : memref<128x128xf32, #tpu.memory_space<vmem>>, vector<128x128xf32>
    tpu.vector_store %arg5[%c0_7, %c0_8], %20 {strides = array<i32>} : memref<128x128xf32, #tpu.memory_space<vmem>>, vector<128x128xf32>,
    return
  }
  func.func @transform_0(%arg0: i32) -> (i32, i32) {
    %c0_i32 = arith.constant 0 : i32
    %c0_i32_0 = arith.constant 0 : i32
    return %arg0, %c0_i32 : i32, i32
  }
  func.func @transform_1(%arg0: i32) -> (i32, i32) {
    %c0_i32 = arith.constant 0 : i32
    %c0_i32_0 = arith.constant 0 : i32
    %c0_i32_1 = arith.constant 0 : i32
    return %c0_i32, %c0_i32_0 : i32, i32
  }
  func.func @transform_2(%arg0: i32) -> (i32, i32) {
    %c0_i32 = arith.constant 0 : i32
    %c0_i32_0 = arith.constant 0 : i32
    return %arg0, %c0_i32 : i32, i32
  }
  func.func @transform_3(%arg0: i32) -> (i32, i32) {
    %c0_i32 = arith.constant 0 : i32
    %c0_i32_0 = arith.constant 0 : i32
    %c0_i32_1 = arith.constant 0 : i32
    return %c0_i32, %c0_i32_0 : i32, i32
  }
  func.func @transform_4(%arg0: i32) -> (i32, i32) {
    %c0_i32 = arith.constant 0 : i32
    %c0_i32_0 = arith.constant 0 : i32
    return %arg0, %c0_i32 : i32, i32
  }
}

module attributes {stable_mosaic.version = 11 : i64} {
  func.func @_conv2_fused_kernel(%arg0: i32, %arg1: i32, %arg2: memref<1x64x128xbf16, #tpu.memory_space<vmem>>, %arg3: memref<2x128xf32, #tpu.memory_space<vmem>>, %arg4: memref<1152x128xbf16, #tpu.memory_space<vmem>>, %arg5: memref<1x64x128xbf16, #tpu.memory_space<vmem>>, %arg6: memref<1x2x128xf32, #tpu.memory_space<vmem>>, %arg7: memref<10x10x128xbf16, #tpu.memory_space<vmem>>, %arg8: memref<64x1152xbf16, #tpu.memory_space<vmem>>) attributes {dimension_semantics = [#tpu.dimension_semantics<parallel>, #tpu.dimension_semantics<arbitrary>], iteration_bounds = array<i64: 2, 1>, scalar_prefetch = 0 : i64, scratch_operands = 2 : i64, tpu.core_type = #tpu.core_type<tc>, window_params = [{transform_indices = @transform_0, window_bounds = array<i64: 1, 64, 128>}, {pipeline_mode = #tpu.pipeline_mode<synchronous>, transform_indices = @transform_1, window_bounds = array<i64: 2, 128>}, {pipeline_mode = #tpu.pipeline_mode<synchronous>, transform_indices = @transform_2, window_bounds = array<i64: 1152, 128>}, {transform_indices = @transform_3, window_bounds = array<i64: 1, 64, 128>}, {transform_indices = @transform_4, window_bounds = array<i64: 1, 2, 128>}]} {
    %c0 = arith.constant 0 : index
    %c0_0 = arith.constant 0 : index
    %0 = vector.load %arg3[%c0, %c0_0] : memref<2x128xf32, #tpu.memory_space<vmem>>, vector<2x128xf32>
    %c0_1 = arith.constant 0 : index
    %c0_2 = arith.constant 0 : index
    %c0_3 = arith.constant 0 : index
    %1 = vector.load %arg2[%c0_1, %c0_2, %c0_3] : memref<1x64x128xbf16, #tpu.memory_space<vmem>>, vector<1x64x128xbf16>
    %2 = vector.shape_cast %1 : vector<1x64x128xbf16> to vector<64x128xbf16>
    %3 = arith.extf %2 : vector<64x128xbf16> to vector<64x128xf32>
    %4 = vector.extract_strided_slice %0 {offsets = [0, 0], sizes = [1, 128], strides = [1, 1]} : vector<2x128xf32> to vector<1x128xf32>
    %5 = vector.broadcast %4 : vector<1x128xf32> to vector<64x128xf32>
    %6 = arith.mulf %3, %5 : vector<64x128xf32>
    %7 = vector.extract_strided_slice %0 {offsets = [1, 0], sizes = [1, 128], strides = [1, 1]} : vector<2x128xf32> to vector<1x128xf32>
    %8 = vector.broadcast %7 : vector<1x128xf32> to vector<64x128xf32>
    %9 = arith.addf %6, %8 : vector<64x128xf32>
    %cst = arith.constant 0.000000e+00 : f32
    %10 = vector.broadcast %cst : f32 to vector<64x128xf32>
    %11 = arith.maximumf %9, %10 : vector<64x128xf32>
    %cst_4 = arith.constant 0.000000e+00 : bf16
    %12 = vector.broadcast %cst_4 : bf16 to vector<10x10x128xbf16>
    %c0_5 = arith.constant 0 : index
    %c0_6 = arith.constant 0 : index
    %c0_7 = arith.constant 0 : index
    %13 = vector.load %arg7[%c0_5, %c0_6, %c0_7] : memref<10x10x128xbf16, #tpu.memory_space<vmem>>, vector<10x10x128xbf16>
    tpu.vector_store %arg7[%c0_5, %c0_6, %c0_7], %12 {strides = array<i32>} : memref<10x10x128xbf16, #tpu.memory_space<vmem>>, vector<10x10x128xbf16>,
    %14 = vector.shape_cast %11 : vector<64x128xf32> to vector<8x8x128xf32>
    %15 = arith.truncf %14 : vector<8x8x128xf32> to vector<8x8x128xbf16>
    %c1 = arith.constant 1 : index
    %c1_8 = arith.constant 1 : index
    %c0_9 = arith.constant 0 : index
    %16 = vector.load %arg7[%c1, %c1_8, %c0_9] : memref<10x10x128xbf16, #tpu.memory_space<vmem>>, vector<8x8x128xbf16>
    tpu.vector_store %arg7[%c1, %c1_8, %c0_9], %15 {strides = array<i32>} : memref<10x10x128xbf16, #tpu.memory_space<vmem>>, vector<8x8x128xbf16>,
    %c0_10 = arith.constant 0 : index
    %c0_11 = arith.constant 0 : index
    %c0_12 = arith.constant 0 : index
    %17 = vector.load %arg7[%c0_10, %c0_11, %c0_12] : memref<10x10x128xbf16, #tpu.memory_space<vmem>>, vector<8x8x128xbf16>
    %18 = vector.shape_cast %17 : vector<8x8x128xbf16> to vector<64x128xbf16>
    %c0_13 = arith.constant 0 : index
    %c0_14 = arith.constant 0 : index
    %19 = vector.load %arg8[%c0_13, %c0_14] : memref<64x1152xbf16, #tpu.memory_space<vmem>>, vector<64x128xbf16>
    tpu.vector_store %arg8[%c0_13, %c0_14], %18 {strides = array<i32>} : memref<64x1152xbf16, #tpu.memory_space<vmem>>, vector<64x128xbf16>,
    %c0_15 = arith.constant 0 : index
    %c1_16 = arith.constant 1 : index
    %c0_17 = arith.constant 0 : index
    %20 = vector.load %arg7[%c0_15, %c1_16, %c0_17] : memref<10x10x128xbf16, #tpu.memory_space<vmem>>, vector<8x8x128xbf16>
    %21 = vector.shape_cast %20 : vector<8x8x128xbf16> to vector<64x128xbf16>
    %c0_18 = arith.constant 0 : index
    %c128 = arith.constant 128 : index
    %22 = vector.load %arg8[%c0_18, %c128] : memref<64x1152xbf16, #tpu.memory_space<vmem>>, vector<64x128xbf16>
    tpu.vector_store %arg8[%c0_18, %c128], %21 {strides = array<i32>} : memref<64x1152xbf16, #tpu.memory_space<vmem>>, vector<64x128xbf16>,
    %c0_19 = arith.constant 0 : index
    %c2 = arith.constant 2 : index
    %c0_20 = arith.constant 0 : index
    %23 = vector.load %arg7[%c0_19, %c2, %c0_20] : memref<10x10x128xbf16, #tpu.memory_space<vmem>>, vector<8x8x128xbf16>
    %24 = vector.shape_cast %23 : vector<8x8x128xbf16> to vector<64x128xbf16>
    %c0_21 = arith.constant 0 : index
    %c256 = arith.constant 256 : index
    %25 = vector.load %arg8[%c0_21, %c256] : memref<64x1152xbf16, #tpu.memory_space<vmem>>, vector<64x128xbf16>
    tpu.vector_store %arg8[%c0_21, %c256], %24 {strides = array<i32>} : memref<64x1152xbf16, #tpu.memory_space<vmem>>, vector<64x128xbf16>,
    %c1_22 = arith.constant 1 : index
    %c0_23 = arith.constant 0 : index
    %c0_24 = arith.constant 0 : index
    %26 = vector.load %arg7[%c1_22, %c0_23, %c0_24] : memref<10x10x128xbf16, #tpu.memory_space<vmem>>, vector<8x8x128xbf16>
    %27 = vector.shape_cast %26 : vector<8x8x128xbf16> to vector<64x128xbf16>
    %c0_25 = arith.constant 0 : index
    %c384 = arith.constant 384 : index
    %28 = vector.load %arg8[%c0_25, %c384] : memref<64x1152xbf16, #tpu.memory_space<vmem>>, vector<64x128xbf16>
    tpu.vector_store %arg8[%c0_25, %c384], %27 {strides = array<i32>} : memref<64x1152xbf16, #tpu.memory_space<vmem>>, vector<64x128xbf16>,
    %c1_26 = arith.constant 1 : index
    %c1_27 = arith.constant 1 : index
    %c0_28 = arith.constant 0 : index
    %29 = vector.load %arg7[%c1_26, %c1_27, %c0_28] : memref<10x10x128xbf16, #tpu.memory_space<vmem>>, vector<8x8x128xbf16>
    %30 = vector.shape_cast %29 : vector<8x8x128xbf16> to vector<64x128xbf16>
    %c0_29 = arith.constant 0 : index
    %c512 = arith.constant 512 : index
    %31 = vector.load %arg8[%c0_29, %c512] : memref<64x1152xbf16, #tpu.memory_space<vmem>>, vector<64x128xbf16>
    tpu.vector_store %arg8[%c0_29, %c512], %30 {strides = array<i32>} : memref<64x1152xbf16, #tpu.memory_space<vmem>>, vector<64x128xbf16>,
    %c1_30 = arith.constant 1 : index
    %c2_31 = arith.constant 2 : index
    %c0_32 = arith.constant 0 : index
    %32 = vector.load %arg7[%c1_30, %c2_31, %c0_32] : memref<10x10x128xbf16, #tpu.memory_space<vmem>>, vector<8x8x128xbf16>
    %33 = vector.shape_cast %32 : vector<8x8x128xbf16> to vector<64x128xbf16>
    %c0_33 = arith.constant 0 : index
    %c640 = arith.constant 640 : index
    %34 = vector.load %arg8[%c0_33, %c640] : memref<64x1152xbf16, #tpu.memory_space<vmem>>, vector<64x128xbf16>
    tpu.vector_store %arg8[%c0_33, %c640], %33 {strides = array<i32>} : memref<64x1152xbf16, #tpu.memory_space<vmem>>, vector<64x128xbf16>,
    %c2_34 = arith.constant 2 : index
    %c0_35 = arith.constant 0 : index
    %c0_36 = arith.constant 0 : index
    %35 = vector.load %arg7[%c2_34, %c0_35, %c0_36] : memref<10x10x128xbf16, #tpu.memory_space<vmem>>, vector<8x8x128xbf16>
    %36 = vector.shape_cast %35 : vector<8x8x128xbf16> to vector<64x128xbf16>
    %c0_37 = arith.constant 0 : index
    %c768 = arith.constant 768 : index
    %37 = vector.load %arg8[%c0_37, %c768] : memref<64x1152xbf16, #tpu.memory_space<vmem>>, vector<64x128xbf16>
    tpu.vector_store %arg8[%c0_37, %c768], %36 {strides = array<i32>} : memref<64x1152xbf16, #tpu.memory_space<vmem>>, vector<64x128xbf16>,
    %c2_38 = arith.constant 2 : index
    %c1_39 = arith.constant 1 : index
    %c0_40 = arith.constant 0 : index
    %38 = vector.load %arg7[%c2_38, %c1_39, %c0_40] : memref<10x10x128xbf16, #tpu.memory_space<vmem>>, vector<8x8x128xbf16>
    %39 = vector.shape_cast %38 : vector<8x8x128xbf16> to vector<64x128xbf16>
    %c0_41 = arith.constant 0 : index
    %c896 = arith.constant 896 : index
    %40 = vector.load %arg8[%c0_41, %c896] : memref<64x1152xbf16, #tpu.memory_space<vmem>>, vector<64x128xbf16>
    tpu.vector_store %arg8[%c0_41, %c896], %39 {strides = array<i32>} : memref<64x1152xbf16, #tpu.memory_space<vmem>>, vector<64x128xbf16>,
    %c2_42 = arith.constant 2 : index
    %c2_43 = arith.constant 2 : index
    %c0_44 = arith.constant 0 : index
    %41 = vector.load %arg7[%c2_42, %c2_43, %c0_44] : memref<10x10x128xbf16, #tpu.memory_space<vmem>>, vector<8x8x128xbf16>
    %42 = vector.shape_cast %41 : vector<8x8x128xbf16> to vector<64x128xbf16>
    %c0_45 = arith.constant 0 : index
    %c1024 = arith.constant 1024 : index
    %43 = vector.load %arg8[%c0_45, %c1024] : memref<64x1152xbf16, #tpu.memory_space<vmem>>, vector<64x128xbf16>
    tpu.vector_store %arg8[%c0_45, %c1024], %42 {strides = array<i32>} : memref<64x1152xbf16, #tpu.memory_space<vmem>>, vector<64x128xbf16>,
    %c0_46 = arith.constant 0 : index
    %c0_47 = arith.constant 0 : index
    %44 = vector.load %arg8[%c0_46, %c0_47] : memref<64x1152xbf16, #tpu.memory_space<vmem>>, vector<64x1152xbf16>
    %c0_48 = arith.constant 0 : index
    %c0_49 = arith.constant 0 : index
    %45 = vector.load %arg4[%c0_48, %c0_49] : memref<1152x128xbf16, #tpu.memory_space<vmem>>, vector<1152x128xbf16>
    %cst_50 = arith.constant dense<0.000000e+00> : vector<64x128xf32>
    %46 = tpu.matmul %44, %45, %cst_50 {dimension_numbers = #tpu.dot_dimension_numbers<[1], [0], [0], [1], [0, 0, 1, 1], [], []>} : vector<64x1152xbf16>, vector<1152x128xbf16>, vector<64x128xf32> -> vector<64x128xf32>
    %47 = arith.truncf %46 : vector<64x128xf32> to vector<64x128xbf16>
    %c0_51 = arith.constant 0 : index
    %c0_52 = arith.constant 0 : index
    %c0_53 = arith.constant 0 : index
    %48 = vector.load %arg5[%c0_51, %c0_52, %c0_53] : memref<1x64x128xbf16, #tpu.memory_space<vmem>>, vector<1x64x128xbf16>
    %49 = vector.shape_cast %48 : vector<1x64x128xbf16> to vector<64x128xbf16>
    %50 = vector.shape_cast %47 : vector<64x128xbf16> to vector<1x64x128xbf16>
    tpu.vector_store %arg5[%c0_51, %c0_52, %c0_53], %50 {strides = array<i32>} : memref<1x64x128xbf16, #tpu.memory_space<vmem>>, vector<1x64x128xbf16>,
    %c0_i32 = arith.constant 0 : i32
    %51 = arith.cmpi eq, %arg1, %c0_i32 : i32
    %52 = arith.extui %51 : i1 to i32
    %c0_i32_54 = arith.constant 0 : i32
    %53 = arith.cmpi ne, %52, %c0_i32_54 : i32
    scf.if %53 {
      %cst_63 = arith.constant 0.000000e+00 : f32
      %66 = vector.broadcast %cst_63 : f32 to vector<1x2x128xf32>
      %c0_64 = arith.constant 0 : index
      %c0_65 = arith.constant 0 : index
      %c0_66 = arith.constant 0 : index
      %67 = vector.load %arg6[%c0_64, %c0_65, %c0_66] : memref<1x2x128xf32, #tpu.memory_space<vmem>>, vector<1x2x128xf32>
      tpu.vector_store %arg6[%c0_64, %c0_65, %c0_66], %66 {strides = array<i32>} : memref<1x2x128xf32, #tpu.memory_space<vmem>>, vector<1x2x128xf32>,
    } else {
    }
    %c0_55 = arith.constant 0 : index
    %c0_56 = arith.constant 0 : index
    %c0_57 = arith.constant 0 : index
    %54 = vector.load %arg6[%c0_55, %c0_56, %c0_57] : memref<1x2x128xf32, #tpu.memory_space<vmem>>, vector<1x2x128xf32>
    %55 = vector.shape_cast %54 : vector<1x2x128xf32> to vector<2x128xf32>
    %cst_58 = arith.constant dense<0.000000e+00> : vector<128xf32>
    %56 = vector.multi_reduction <add>, %46, %cst_58 [0] : vector<64x128xf32> to vector<128xf32>
    %57 = vector.shape_cast %56 : vector<128xf32> to vector<1x128xf32>
    %58 = arith.mulf %46, %46 : vector<64x128xf32>
    %cst_59 = arith.constant dense<0.000000e+00> : vector<128xf32>
    %59 = vector.multi_reduction <add>, %58, %cst_59 [0] : vector<64x128xf32> to vector<128xf32>
    %60 = vector.shape_cast %59 : vector<128xf32> to vector<1x128xf32>
    %61 = tpu.concatenate %57, %60 in 0 : vector<1x128xf32>, vector<1x128xf32> -> vector<2x128xf32>
    %62 = arith.addf %55, %61 : vector<2x128xf32>
    %c0_60 = arith.constant 0 : index
    %c0_61 = arith.constant 0 : index
    %c0_62 = arith.constant 0 : index
    %63 = vector.load %arg6[%c0_60, %c0_61, %c0_62] : memref<1x2x128xf32, #tpu.memory_space<vmem>>, vector<1x2x128xf32>
    %64 = vector.shape_cast %63 : vector<1x2x128xf32> to vector<2x128xf32>
    %65 = vector.shape_cast %62 : vector<2x128xf32> to vector<1x2x128xf32>
    tpu.vector_store %arg6[%c0_60, %c0_61, %c0_62], %65 {strides = array<i32>} : memref<1x2x128xf32, #tpu.memory_space<vmem>>, vector<1x2x128xf32>,
    return
  }
  func.func @transform_0(%arg0: i32, %arg1: i32) -> (i32, i32, i32) {
    %c1_i32 = arith.constant 1 : i32
    %0 = arith.muli %arg0, %c1_i32 : i32
    %1 = arith.addi %0, %arg1 : i32
    %c0_i32 = arith.constant 0 : i32
    %c0_i32_0 = arith.constant 0 : i32
    %c0_i32_1 = arith.constant 0 : i32
    return %1, %c0_i32, %c0_i32_0 : i32, i32, i32
  }
  func.func @transform_1(%arg0: i32, %arg1: i32) -> (i32, i32) {
    %c0_i32 = arith.constant 0 : i32
    %c0_i32_0 = arith.constant 0 : i32
    %c0_i32_1 = arith.constant 0 : i32
    return %c0_i32, %c0_i32_0 : i32, i32
  }
  func.func @transform_2(%arg0: i32, %arg1: i32) -> (i32, i32) {
    %c0_i32 = arith.constant 0 : i32
    %c0_i32_0 = arith.constant 0 : i32
    %c0_i32_1 = arith.constant 0 : i32
    return %c0_i32, %c0_i32_0 : i32, i32
  }
  func.func @transform_3(%arg0: i32, %arg1: i32) -> (i32, i32, i32) {
    %c1_i32 = arith.constant 1 : i32
    %0 = arith.muli %arg0, %c1_i32 : i32
    %1 = arith.addi %0, %arg1 : i32
    %c0_i32 = arith.constant 0 : i32
    %c0_i32_0 = arith.constant 0 : i32
    %c0_i32_1 = arith.constant 0 : i32
    return %1, %c0_i32, %c0_i32_0 : i32, i32, i32
  }
  func.func @transform_4(%arg0: i32, %arg1: i32) -> (i32, i32, i32) {
    %c0_i32 = arith.constant 0 : i32
    %c0_i32_0 = arith.constant 0 : i32
    %c0_i32_1 = arith.constant 0 : i32
    return %arg0, %c0_i32, %c0_i32_0 : i32, i32, i32
  }
}

</mosaic_0001>

<llo_original>
// kernel: basic_block_forward.5
$region0: #{basic_block_forward.5}
  #allocation0 [shape = 'u32[]', space=smem, size = 0x4, offset = 0x4, fixed_abs, tag = 'smem constant byte address 0x4 - core index']
  #allocation1 [shape = 'u32[72,128]{1,0:T(1,128)}', space=vmem, size = 0x9000, scoped, tag = 'internal scratch']
  %s0 = inlined_call_operand.vmem [shape: bf16[2,8,8,4], index: 0, kind: input, shape index: {}]
  %s1 = inlined_call_operand.vmem [shape: bf16[4,128], index: 1, kind: input, shape index: {}]
  %s2 = inlined_call_operand.vmem [shape: bf16[2,64,128], index: 2, kind: output, shape index: {0}]
  %s3 = inlined_call_operand.vmem [shape: f32[2,2,128], index: 3, kind: output, shape index: {1}]
  %4 = xla_tuple %s2, %s3
  %s5 = sld [smem:[#allocation0]]
  $region53: #{basic_block_forward.5} parent=0
    _
  %s7 = ssub.s32 1, %s5
  %s8 = scalar_select 0, %s7, %s5
  loop: start=0, step=1, limit=4
  $region2: #{basic_block_forward.5} parent=0 // loop_pre_header
    _
  $region3: #{basic_block_forward.5} parent=0 // loop_header
    %s10 = sphi 0, %s14
    %p11 = scmp.ge.s32.totalorder %s10, 4
    %s17 = sphi 0, %s29
    %s18 = sphi 0, %s25
    %s19 = sphi 0, %s17
    %s20 = sphi 0, %s18
    %s21 = sphi 0, %s19
    %s22 = sphi 0, %s20
    %s34 = sphi 0, %s36
    %s37 = sphi 0, %s34
    %s38 = sphi 0, %s37
    %s54 = sphi 0, %s38
    %s58 = sphi 0, %s58
    %s60 = sphi 0, %s58
    %s61 = sphi 0, %s60
    %s75 = sphi 0, %s61
    %s83 = sphi 0, %s85
    %s86 = sphi 0, %s83
    %s87 = sphi 0, %s86
    %s103 = sphi 0, %s87
    %s109 = sphi 0, %s111
    %s112 = sphi 0, %s109
    %s113 = sphi 0, %s112
    %s129 = sphi 0, %s113
  $region4: #{basic_block_forward.5} parent=0 // loop_header_branch
    %13 = sbr.rel (%p11) target = $region8
  $region5: #{basic_block_forward.5} parent=0 // loop_body
    %s15 = ssub.s32 %s10, 1
    %s16 = ssub.s32 %s10, 2
    %s23 = sadd.s32 1, %s18
    %p24 = scmp.ge.s32.totalorder %s23, 1
    %s25 = scalar_select %p24, 0, %s23
    %s26 = sadd.s32 1, %s17
    %s27 = scalar_select %p24, %s26, %s17
    %p28 = scmp.ge.s32.totalorder %s27, 2
    %s29 = scalar_select %p28, 0, %s27
    %s30 = sadd.s32 %s17, %s18
    %s31 = sadd.s32 %s29, %s25
    %s32 = ssub.s32 %s30, %s31
    %p33 = scmp.eq.s32.totalorder %s32, 0
    %s35 = sadd.s32 %s34, 1
    %s36 = scalar_select %p33, %s34, %s35
    %p39 = pneg %p33
    %p40 = scmp.eq.s32.totalorder %s10, 1
    %p41 = por %p39, %p40
    %p42 = scmp.ne.s32.totalorder %s34, %s37
    %p43 = scmp.eq.s32.totalorder %s10, 0
    %p44 = por %p42, %p43
    %p45 = scmp.ne.s32.totalorder %s34, %s37
    %p46 = scmp.eq.s32.totalorder %s15, 1
    %p47 = por %p45, %p46
    %p48 = scmp.ne.s32.totalorder %s37, %s38
    %p49 = scmp.eq.s32.totalorder %s15, 0
    %p50 = por %p48, %p49
    %p51 = scmp.ne.s32.totalorder %s37, %s38
    %p52 = scmp.eq.s32.totalorder %s16, 1
    %p53 = por %p51, %p52
    %p55 = scmp.ne.s32.totalorder %s38, %s54
    %p56 = scmp.eq.s32.totalorder %s16, 0
    %p57 = por %p55, %p56
    %s59 = sadd.s32 %s58, 1
    %p62 = scmp.eq.s32.totalorder %s10, 1
    %p63 = scmp.ne.s32.totalorder %s58, %s60
    %p64 = scmp.eq.s32.totalorder %s10, 0
    %p65 = por %p63, %p64
    %p66 = scmp.ne.s32.totalorder %s58, %s60
    %p67 = scmp.eq.s32.totalorder %s15, 1
    %p68 = por %p66, %p67
    %p69 = scmp.ne.s32.totalorder %s60, %s61
    %p70 = scmp.eq.s32.totalorder %s15, 0
    %p71 = por %p69, %p70
    %p72 = scmp.ne.s32.totalorder %s60, %s61
    %p73 = scmp.eq.s32.totalorder %s16, 1
    %p74 = por %p72, %p73
    %p76 = scmp.ne.s32.totalorder %s61, %s75
    %p77 = scmp.eq.s32.totalorder %s16, 0
    %p78 = por %p76, %p77
    %s79 = sadd.s32 %s17, %s18
    %s80 = sadd.s32 %s29, %s25
    %s81 = ssub.s32 %s79, %s80
    %p82 = scmp.eq.s32.totalorder %s81, 0
    %s84 = sadd.s32 %s83, 1
    %s85 = scalar_select %p82, %s83, %s84
    %p88 = pneg %p82
    %p89 = scmp.eq.s32.totalorder %s10, 1
    %p90 = por %p88, %p89
    %p91 = scmp.ne.s32.totalorder %s83, %s86
    %p92 = scmp.eq.s32.totalorder %s10, 0
    %p93 = por %p91, %p92
    %p94 = scmp.ne.s32.totalorder %s83, %s86
    %p95 = scmp.eq.s32.totalorder %s15, 1
    %p96 = por %p94, %p95
    %p97 = scmp.ne.s32.totalorder %s86, %s87
    %p98 = scmp.eq.s32.totalorder %s15, 0
    %p99 = por %p97, %p98
    %p100 = scmp.ne.s32.totalorder %s86, %s87
    %p101 = scmp.eq.s32.totalorder %s16, 1
    %p102 = por %p100, %p101
    %p104 = scmp.ne.s32.totalorder %s87, %s103
    %p105 = scmp.eq.s32.totalorder %s16, 0
    %p106 = por %p104, %p105
    %s107 = ssub.s32 %s17, %s29
    %p108 = scmp.eq.s32.totalorder %s107, 0
    %s110 = sadd.s32 %s109, 1
    %s111 = scalar_select %p108, %s109, %s110
    %p114 = pneg %p108
    %p115 = scmp.eq.s32.totalorder %s10, 1
    %p116 = por %p114, %p115
    %p117 = scmp.ne.s32.totalorder %s109, %s112
    %p118 = scmp.eq.s32.totalorder %s10, 0
    %p119 = por %p117, %p118
    %p120 = scmp.ne.s32.totalorder %s109, %s112
    %p121 = scmp.eq.s32.totalorder %s15, 1
    %p122 = por %p120, %p121
    %p123 = scmp.ne.s32.totalorder %s112, %s113
    %p124 = scmp.eq.s32.totalorder %s15, 0
    %p125 = por %p123, %p124
    %p126 = scmp.ne.s32.totalorder %s112, %s113
    %p127 = scmp.eq.s32.totalorder %s16, 1
    %p128 = por %p126, %p127
    %p130 = scmp.ne.s32.totalorder %s113, %s129
    %p131 = scmp.eq.s32.totalorder %s16, 0
    %p132 = por %p130, %p131
    %p133 = scmp.le.s32.totalorder 1, %s10
    %p134 = scmp.lt.s32.totalorder %s10, 3
    %p135 = pnand %p133, %p134
    %p136 = pneg %p135
    // Predicated region
    $region9: #{basic_block_forward.5} parent=5 // pred_check
      _
    $region10: #{basic_block_forward.5} parent=5 // pred_check_branch
      %138 = sbr.rel (%p135) target = $region12
    $region11: #{basic_block_forward.5} parent=5 // pred_region
      %s139 = ssub.s32 %s10, 1
      // Predicated region
      $region13: #{basic_block_forward.5} parent=11 // pred_check
        %p140 = pneg %p71
      $region14: #{basic_block_forward.5} parent=11 // pred_check_branch
        %142 = sbr.rel (%p140) target = $region16
      $region15: #{basic_block_forward.5} parent=11 // pred_region
        _
      $region16: #{basic_block_forward.5} parent=11 // pred_fallthru
        _
    $region12: #{basic_block_forward.5} parent=5 // pred_fallthru
      _
    %p143 = scmp.lt.s32.totalorder %s10, 2
    // Predicated region
    $region17: #{basic_block_forward.5} parent=5 // pred_check
      %p144 = pneg %p143
    $region18: #{basic_block_forward.5} parent=5 // pred_check_branch
      %146 = sbr.rel (%p144) target = $region20
    $region19: #{basic_block_forward.5} parent=5 // pred_region
      // Predicated region
      $region21: #{basic_block_forward.5} parent=19 // pred_check
        %p147 = pneg %p44
      $region22: #{basic_block_forward.5} parent=19 // pred_check_branch
        %149 = sbr.rel (%p147) target = $region24
      $region23: #{basic_block_forward.5} parent=19 // pred_region
        %s150 = sadd.s32 %s17, %s18
        %p151 = scmp.lt.s32.totalorder %s150, 1
        %s152 = scalar_select %p151, %s150, 1
        %s153 = smul.addr %s152, 8
        %s154 = smul.addr %s153, 4
        %s155 = scalar_lea.vmem %s0, %s154
        %s156 = sadd.s32 %s17, %s18
      $region24: #{basic_block_forward.5} parent=19 // pred_fallthru
        _
    $region20: #{basic_block_forward.5} parent=5 // pred_fallthru
      _
    %p157 = scmp.le.s32.totalorder 1, %s10
    %p158 = scmp.lt.s32.totalorder %s10, 3
    %p159 = pnand %p157, %p158
    %p160 = pneg %p159
    // Predicated region
    $region25: #{basic_block_forward.5} parent=5 // pred_check
      _
    $region26: #{basic_block_forward.5} parent=5 // pred_check_branch
      %162 = sbr.rel (%p159) target = $region28
    $region27: #{basic_block_forward.5} parent=5 // pred_region
      %s163 = ssub.s32 %s10, 1
      %s164 = sadd.s32 %s19, %s20
      %p165 = scmp.lt.s32.totalorder %s164, 1
      %s166 = scalar_select %p165, %s164, 1
      %s167 = smul.addr %s166, 8
      %s168 = smul.addr %s167, 4
      %s169 = scalar_lea.vmem %s0, %s168
      %p170 = pneg %p50
      %p171 = pneg %p47
      %p172 = pneg %p71
      %p173 = pneg %p68
      %p174 = pneg %p99
      %p175 = pneg %p96
      %s176 = sadd.s32 %s19, %s20
      %p177 = scmp.lt.s32.totalorder %s176, 1
      %s178 = scalar_select %p177, %s176, 1
      %s179 = smul.addr %s178, 8
      %s180 = smul.addr %s179, 4
      %s181 = scalar_lea.vmem %s2, %s180
      %p182 = pneg %p125
      %p183 = pneg %p122
      %p184 = scmp.lt.s32.totalorder %s19, 1
      %s185 = scalar_select %p184, %s19, 1
      %s186 = smul.addr %s185, 2
      %s187 = scalar_lea.vmem %s3, %s186
      %s188 = sadd.s32 %s19, %s20
      %p189 = scmp.lt.s32.totalorder %s188, 1
      %s190 = scalar_select %p189, %s188, 1
      %s191 = smul.addr %s190, 8
      %s192 = smul.addr %s191, 4
      %s193 = scalar_lea.vmem %s0, %s192
      %s194 = sadd.s32 %s19, %s20
      %s195 = sadd.s32 %s19, %s20
      %p196 = scmp.lt.s32.totalorder %s195, 1
      %s197 = scalar_select %p196, %s195, 1
      %s198 = smul.addr %s197, 8
      %s199 = smul.addr %s198, 4
      %s200 = scalar_lea.vmem %s2, %s199
      %s201 = sadd.s32 %s19, %s20
      %p202 = scmp.lt.s32.totalorder %s19, 1
      %s203 = scalar_select %p202, %s19, 1
      %s204 = smul.addr %s203, 2
      %s205 = scalar_lea.vmem %s3, %s204
      %v207 = vld [vmem:[%s193] sm:$0xf]
      %v208 = vld [vmem:[%s193 + $0x4] sm:$0xf]
      %v209 = vld [vmem:[%s193 + $0x8] sm:$0xf]
      %v210 = vld [vmem:[%s193 + $0xc] sm:$0xf]
      %v211 = vld [vmem:[%s193 + $0x10] sm:$0xf]
      %v212 = vld [vmem:[%s193 + $0x14] sm:$0xf]
      %v213 = vld [vmem:[%s193 + $0x18] sm:$0xf]
      %v214 = vld [vmem:[%s193 + $0x1c] sm:$0xf]
      %v215 = vld [vmem:[%s1] sm:$0x3]
      %v224 = vunpack.c.l.b16 %v207
      %v225 = vunpack.c.l.b16 %v208
      %v226 = vunpack.c.l.b16 %v209
      %v227 = vunpack.c.l.b16 %v210
      %v228 = vunpack.c.l.b16 %v211
      %v229 = vunpack.c.l.b16 %v212
      %v230 = vunpack.c.l.b16 %v213
      %v231 = vunpack.c.l.b16 %v214
      %v232 = vpack.c.b16 %v225, %v224
      %v233 = vpack.c.b16 %v227, %v226
      %v234 = vpack.c.b16 %v229, %v228
      %v235 = vpack.c.b16 %v231, %v230
      %vm236 = vcmask 31744
      %v238 = vsel %vm236, %v232, 0
      %v241 = vsel %vm236, %v233, 0
      %v244 = vsel %vm236, %v234, 0
      %v247 = vsel %vm236, %v235, 0
      %vm249 = vcmask 1041408
      %v251 = vsel %vm249, %v215, 0
      %253 = vmatpush.bf16.msra.mxu0 0
      %254 = vmatpush.bf16.msra.mxu0 0
      %255 = vmatpush.bf16.msra.mxu0 0
      %256 = vmatpush.bf16.msra.mxu0 0
      %257 = vmatpush.bf16.msra.mxu0 0
      %258 = vmatpush.bf16.msra.mxu0 0
      %259 = vmatpush.bf16.msra.mxu0 0
      %260 = vmatpush.bf16.msra.mxu0 %v251
      %261 = vmatmul.bf16.gmra.mxu0 %v238
      %v262 = vpop.f32.mrf.mxu0
      %v263 = vadd.f32 0.0, %v262
      %v264 = vpop.f32.mrf.mxu0
      %v265 = vadd.f32 0.0, %v264
      %266 = vmatmul.bf16.gmra.mxu0 %v241
      %v267 = vpop.f32.mrf.mxu0
      %v268 = vadd.f32 0.0, %v267
      %v269 = vpop.f32.mrf.mxu0
      %v270 = vadd.f32 0.0, %v269
      %271 = vmatmul.bf16.gmra.mxu0 %v244
      %v272 = vpop.f32.mrf.mxu0
      %v273 = vadd.f32 0.0, %v272
      %v274 = vpop.f32.mrf.mxu0
      %v275 = vadd.f32 0.0, %v274
      %276 = vmatmul.bf16.gmra.mxu0 %v247
      %v277 = vpop.f32.mrf.mxu0
      %v278 = vadd.f32 0.0, %v277
      %v279 = vpop.f32.mrf.mxu0
      %v280 = vadd.f32 0.0, %v279
      %281 = vdwg.mxu0
      %v282 = vpack.c.bf16 %v263, %v263
      %v283 = vpack.c.bf16 %v265, %v265
      %v284 = vpack.c.bf16 %v268, %v268
      %v285 = vpack.c.bf16 %v270, %v270
      %v286 = vpack.c.bf16 %v273, %v273
      %v287 = vpack.c.bf16 %v275, %v275
      %v288 = vpack.c.bf16 %v278, %v278
      %v289 = vpack.c.bf16 %v280, %v280
      %290 = vst [vmem:[%s200] sm:$0xf] %v282
      %291 = vst [vmem:[%s200 + $0x4] sm:$0xf] %v283
      %292 = vst [vmem:[%s200 + $0x8] sm:$0xf] %v284
      %293 = vst [vmem:[%s200 + $0xc] sm:$0xf] %v285
      %294 = vst [vmem:[%s200 + $0x10] sm:$0xf] %v286
      %295 = vst [vmem:[%s200 + $0x14] sm:$0xf] %v287
      %296 = vst [vmem:[%s200 + $0x18] sm:$0xf] %v288
      %297 = vst [vmem:[%s200 + $0x1c] sm:$0xf] %v289
      %p298 = scmp.eq.s32.totalorder %s20, 0
      // Predicated region
      $region29: #{basic_block_forward.5} parent=27 // pred_check
        %p299 = pneg %p298
      $region30: #{basic_block_forward.5} parent=27 // pred_check_branch
        %301 = sbr.rel (%p299) target = $region32
      $region31: #{basic_block_forward.5} parent=27 // pred_region
        %302 = vst [vmem:[%s205] sm:$0x3] 0.0
      $region32: #{basic_block_forward.5} parent=27 // pred_fallthru
        _
      %v303 = vld [vmem:[%s205] sm:$0x3]
      %v304 = vadd.f32 %v263, %v265
      %v305 = vadd.f32 %v304, %v268
      %v306 = vadd.f32 %v305, %v270
      %v307 = vadd.f32 %v306, %v273
      %v308 = vadd.f32 %v307, %v275
      %v309 = vadd.f32 %v308, %v278
      %v310 = vadd.f32 %v309, %v280
      %v311 = vrot.slane %v310, 4
      %v312 = vadd.f32 %v310, %v311
      %v313 = vrot.slane %v312, 2
      %v314 = vadd.f32 %v312, %v313
      %v315 = vrot.slane %v314, 1
      %v316 = vadd.f32 %v314, %v315
      %v317 = vmul.f32 %v263, %v263
      %v318 = vmul.f32 %v265, %v265
      %v319 = vmul.f32 %v268, %v268
      %v320 = vmul.f32 %v270, %v270
      %v321 = vmul.f32 %v273, %v273
      %v322 = vmul.f32 %v275, %v275
      %v323 = vmul.f32 %v278, %v278
      %v324 = vmul.f32 %v280, %v280
      %v325 = vadd.f32 %v317, %v318
      %v326 = vadd.f32 %v325, %v319
      %v327 = vadd.f32 %v326, %v320
      %v328 = vadd.f32 %v327, %v321
      %v329 = vadd.f32 %v328, %v322
      %v330 = vadd.f32 %v329, %v323
      %v331 = vadd.f32 %v330, %v324
      %v332 = vrot.slane %v331, 4
      %v333 = vadd.f32 %v331, %v332
      %v334 = vrot.slane %v333, 2
      %v335 = vadd.f32 %v333, %v334
      %v336 = vrot.slane %v335, 1
      %v337 = vadd.f32 %v335, %v336
      %vm338 = vcmask 1040384
      %v339 = vsel %vm338, %v316, %v337
      %v340 = vadd.f32 %v303, %v339
      %341 = vst [vmem:[%s205] sm:$0x3] %v340
      %s342 = sadd.s32 %s19, %s20
      %p343 = scmp.lt.s32.totalorder %s342, 1
      %s344 = scalar_select %p343, %s342, 1
      %s345 = smul.addr %s344, 8
      %s346 = smul.addr %s345, 4
      %s347 = scalar_lea.vmem %s2, %s346
      %p348 = scmp.lt.s32.totalorder %s19, 1
      %s349 = scalar_select %p348, %s19, 1
      %s350 = smul.addr %s349, 2
      %s351 = scalar_lea.vmem %s3, %s350
      // Predicated region
      $region33: #{basic_block_forward.5} parent=27 // pred_check
        %p352 = pneg %p96
      $region34: #{basic_block_forward.5} parent=27 // pred_check_branch
        %354 = sbr.rel (%p352) target = $region36
      $region35: #{basic_block_forward.5} parent=27 // pred_region
        %s355 = sadd.s32 %s19, %s20
      $region36: #{basic_block_forward.5} parent=27 // pred_fallthru
        _
      // Predicated region
      $region37: #{basic_block_forward.5} parent=27 // pred_check
        %p356 = pneg %p122
      $region38: #{basic_block_forward.5} parent=27 // pred_check_branch
        %358 = sbr.rel (%p356) target = $region40
      $region39: #{basic_block_forward.5} parent=27 // pred_region
        _
      $region40: #{basic_block_forward.5} parent=27 // pred_fallthru
        _
    $region28: #{basic_block_forward.5} parent=5 // pred_fallthru
      _
    %p359 = scmp.le.s32.totalorder 2, %s10
    // Predicated region
    $region41: #{basic_block_forward.5} parent=5 // pred_check
      %p360 = pneg %p359
    $region42: #{basic_block_forward.5} parent=5 // pred_check_branch
      %362 = sbr.rel (%p360) target = $region44
    $region43: #{basic_block_forward.5} parent=5 // pred_region
      %s363 = ssub.s32 %s10, 2
      // Predicated region
      $region45: #{basic_block_forward.5} parent=43 // pred_check
        %p364 = pneg %p102
      $region46: #{basic_block_forward.5} parent=43 // pred_check_branch
        %366 = sbr.rel (%p364) target = $region48
      $region47: #{basic_block_forward.5} parent=43 // pred_region
        %s367 = sadd.s32 %s21, %s22
        %p368 = scmp.lt.s32.totalorder %s367, 1
        %s369 = scalar_select %p368, %s367, 1
        %s370 = smul.addr %s369, 8
        %s371 = smul.addr %s370, 4
        %s372 = scalar_lea.vmem %s2, %s371
      $region48: #{basic_block_forward.5} parent=43 // pred_fallthru
        _
      // Predicated region
      $region49: #{basic_block_forward.5} parent=43 // pred_check
        %p373 = pneg %p128
      $region50: #{basic_block_forward.5} parent=43 // pred_check_branch
        %375 = sbr.rel (%p373) target = $region52
      $region51: #{basic_block_forward.5} parent=43 // pred_region
        %p376 = scmp.lt.s32.totalorder %s21, 1
        %s377 = scalar_select %p376, %s21, 1
        %s378 = smul.addr %s377, 2
        %s379 = scalar_lea.vmem %s3, %s378
      $region52: #{basic_block_forward.5} parent=43 // pred_fallthru
        _
    $region44: #{basic_block_forward.5} parent=5 // pred_fallthru
      _
  $region6: #{basic_block_forward.5} parent=0 // loop_footer
    %s14 = sadd.s32 1, %s10
  $region7: #{basic_block_forward.5} parent=0 // loop_footer_branch
    %9 = sbr.rel target = $region3
  $region8: #{basic_block_forward.5} parent=0 // loop_exit
    _

// kernel: basic_block_forward.7
$region0: #{basic_block_forward.7}
  #allocation0 [shape = 'u32[]', space=smem, size = 0x4, offset = 0x4, fixed_abs, tag = 'smem constant byte address 0x4 - core index']
  #allocation1 [shape = 'u32[72,128]{1,0:T(1,128)}', space=vmem, size = 0x9000, scoped, tag = 'internal scratch']
  %s0 = inlined_call_operand.vmem [shape: bf16[128,128], index: 0, kind: input, shape index: {}]
  %s1 = inlined_call_operand.vmem [shape: f32[2,128], index: 1, kind: input, shape index: {}]
  %s2 = inlined_call_operand.vmem [shape: bf16[128,128], index: 2, kind: input, shape index: {}]
  %s3 = inlined_call_operand.vmem [shape: f32[2,128], index: 3, kind: input, shape index: {}]
  %s4 = inlined_call_operand.vmem [shape: f32[128,128], index: 4, kind: output, shape index: {}]
  %s5 = sld [smem:[#allocation0]]
  $region26: #{basic_block_forward.7} parent=0
    _
  %s7 = ssub.s32 1, %s5
  %s8 = scalar_select 0, %s7, %s5
  // Predicated region
  $region2: #{basic_block_forward.7} parent=0 // pred_check
    _
  $region3: #{basic_block_forward.7} parent=0 // pred_check_branch
    %10 = sbr.rel (0) target = $region5
  $region4: #{basic_block_forward.7} parent=0 // pred_region
    _
  $region5: #{basic_block_forward.7} parent=0 // pred_fallthru
    _
  // Predicated region
  $region6: #{basic_block_forward.7} parent=0 // pred_check
    _
  $region7: #{basic_block_forward.7} parent=0 // pred_check_branch
    %12 = sbr.rel (0) target = $region9
  $region8: #{basic_block_forward.7} parent=0 // pred_region
    _
  $region9: #{basic_block_forward.7} parent=0 // pred_fallthru
    _
  // Predicated region
  $region10: #{basic_block_forward.7} parent=0 // pred_check
    _
  $region11: #{basic_block_forward.7} parent=0 // pred_check_branch
    %14 = sbr.rel (0) target = $region13
  $region12: #{basic_block_forward.7} parent=0 // pred_region
    _
  $region13: #{basic_block_forward.7} parent=0 // pred_fallthru
    _
  // Predicated region
  $region14: #{basic_block_forward.7} parent=0 // pred_check
    _
  $region15: #{basic_block_forward.7} parent=0 // pred_check_branch
    %16 = sbr.rel (0) target = $region17
  $region16: #{basic_block_forward.7} parent=0 // pred_region
    _
  $region17: #{basic_block_forward.7} parent=0 // pred_fallthru
    _
  %v17 = vld [vmem:[%s1] sm:$0x3]
  %v18 = vld [vmem:[%s3] sm:$0x3]
  %v19 = vld [vmem:[%s0] sm:$0xf]
  %v20 = vld [vmem:[%s0 + $0x4] sm:$0xf]
  %v21 = vld [vmem:[%s0 + $0x8] sm:$0xf]
  %v22 = vld [vmem:[%s0 + $0xc] sm:$0xf]
  %v23 = vld [vmem:[%s0 + $0x10] sm:$0xf]
  %v24 = vld [vmem:[%s0 + $0x14] sm:$0xf]
  %v25 = vld [vmem:[%s0 + $0x18] sm:$0xf]
  %v26 = vld [vmem:[%s0 + $0x1c] sm:$0xf]
  %v27 = vld [vmem:[%s0 + $0x20] sm:$0xf]
  %v28 = vld [vmem:[%s0 + $0x24] sm:$0xf]
  %v29 = vld [vmem:[%s0 + $0x28] sm:$0xf]
  %v30 = vld [vmem:[%s0 + $0x2c] sm:$0xf]
  %v31 = vld [vmem:[%s0 + $0x30] sm:$0xf]
  %v32 = vld [vmem:[%s0 + $0x34] sm:$0xf]
  %v33 = vld [vmem:[%s0 + $0x38] sm:$0xf]
  %v34 = vld [vmem:[%s0 + $0x3c] sm:$0xf]
  %v35 = vunpack.c.l.bf16 %v19
  %v36 = vunpack.c.l.bf16 %v20
  %v37 = vunpack.c.l.bf16 %v21
  %v38 = vunpack.c.l.bf16 %v22
  %v39 = vunpack.c.l.bf16 %v23
  %v40 = vunpack.c.l.bf16 %v24
  %v41 = vunpack.c.l.bf16 %v25
  %v42 = vunpack.c.l.bf16 %v26
  %v43 = vunpack.c.l.bf16 %v27
  %v44 = vunpack.c.l.bf16 %v28
  %v45 = vunpack.c.l.bf16 %v29
  %v46 = vunpack.c.l.bf16 %v30
  %v47 = vunpack.c.l.bf16 %v31
  %v48 = vunpack.c.l.bf16 %v32
  %v49 = vunpack.c.l.bf16 %v33
  %v50 = vunpack.c.l.bf16 %v34
  %v51 = vperm.slane %v17, 0
  %v52 = vmul.f32 %v35, %v51
  %v53 = vmul.f32 %v36, %v51
  %v54 = vmul.f32 %v37, %v51
  %v55 = vmul.f32 %v38, %v51
  %v56 = vmul.f32 %v39, %v51
  %v57 = vmul.f32 %v40, %v51
  %v58 = vmul.f32 %v41, %v51
  %v59 = vmul.f32 %v42, %v51
  %v60 = vmul.f32 %v43, %v51
  %v61 = vmul.f32 %v44, %v51
  %v62 = vmul.f32 %v45, %v51
  %v63 = vmul.f32 %v46, %v51
  %v64 = vmul.f32 %v47, %v51
  %v65 = vmul.f32 %v48, %v51
  %v66 = vmul.f32 %v49, %v51
  %v67 = vmul.f32 %v50, %v51
  %v68 = vperm.slane %v17, 1
  %v69 = vadd.f32 %v52, %v68
  %v70 = vadd.f32 %v53, %v68
  %v71 = vadd.f32 %v54, %v68
  %v72 = vadd.f32 %v55, %v68
  %v73 = vadd.f32 %v56, %v68
  %v74 = vadd.f32 %v57, %v68
  %v75 = vadd.f32 %v58, %v68
  %v76 = vadd.f32 %v59, %v68
  %v77 = vadd.f32 %v60, %v68
  %v78 = vadd.f32 %v61, %v68
  %v79 = vadd.f32 %v62, %v68
  %v80 = vadd.f32 %v63, %v68
  %v81 = vadd.f32 %v64, %v68
  %v82 = vadd.f32 %v65, %v68
  %v83 = vadd.f32 %v66, %v68
  %v84 = vadd.f32 %v67, %v68
  %v85 = vld [vmem:[%s2] sm:$0xf]
  %v86 = vld [vmem:[%s2 + $0x4] sm:$0xf]
  %v87 = vld [vmem:[%s2 + $0x8] sm:$0xf]
  %v88 = vld [vmem:[%s2 + $0xc] sm:$0xf]
  %v89 = vld [vmem:[%s2 + $0x10] sm:$0xf]
  %v90 = vld [vmem:[%s2 + $0x14] sm:$0xf]
  %v91 = vld [vmem:[%s2 + $0x18] sm:$0xf]
  %v92 = vld [vmem:[%s2 + $0x1c] sm:$0xf]
  %v93 = vld [vmem:[%s2 + $0x20] sm:$0xf]
  %v94 = vld [vmem:[%s2 + $0x24] sm:$0xf]
  %v95 = vld [vmem:[%s2 + $0x28] sm:$0xf]
  %v96 = vld [vmem:[%s2 + $0x2c] sm:$0xf]
  %v97 = vld [vmem:[%s2 + $0x30] sm:$0xf]
  %v98 = vld [vmem:[%s2 + $0x34] sm:$0xf]
  %v99 = vld [vmem:[%s2 + $0x38] sm:$0xf]
  %v100 = vld [vmem:[%s2 + $0x3c] sm:$0xf]
  %v101 = vunpack.c.l.bf16 %v85
  %v102 = vunpack.c.l.bf16 %v86
  %v103 = vunpack.c.l.bf16 %v87
  %v104 = vunpack.c.l.bf16 %v88
  %v105 = vunpack.c.l.bf16 %v89
  %v106 = vunpack.c.l.bf16 %v90
  %v107 = vunpack.c.l.bf16 %v91
  %v108 = vunpack.c.l.bf16 %v92
  %v109 = vunpack.c.l.bf16 %v93
  %v110 = vunpack.c.l.bf16 %v94
  %v111 = vunpack.c.l.bf16 %v95
  %v112 = vunpack.c.l.bf16 %v96
  %v113 = vunpack.c.l.bf16 %v97
  %v114 = vunpack.c.l.bf16 %v98
  %v115 = vunpack.c.l.bf16 %v99
  %v116 = vunpack.c.l.bf16 %v100
  %v117 = vperm.slane %v18, 0
  %v118 = vmul.f32 %v101, %v117
  %v119 = vmul.f32 %v102, %v117
  %v120 = vmul.f32 %v103, %v117
  %v121 = vmul.f32 %v104, %v117
  %v122 = vmul.f32 %v105, %v117
  %v123 = vmul.f32 %v106, %v117
  %v124 = vmul.f32 %v107, %v117
  %v125 = vmul.f32 %v108, %v117
  %v126 = vmul.f32 %v109, %v117
  %v127 = vmul.f32 %v110, %v117
  %v128 = vmul.f32 %v111, %v117
  %v129 = vmul.f32 %v112, %v117
  %v130 = vmul.f32 %v113, %v117
  %v131 = vmul.f32 %v114, %v117
  %v132 = vmul.f32 %v115, %v117
  %v133 = vmul.f32 %v116, %v117
  %v134 = vadd.f32 %v69, %v118
  %v135 = vadd.f32 %v70, %v119
  %v136 = vadd.f32 %v71, %v120
  %v137 = vadd.f32 %v72, %v121
  %v138 = vadd.f32 %v73, %v122
  %v139 = vadd.f32 %v74, %v123
  %v140 = vadd.f32 %v75, %v124
  %v141 = vadd.f32 %v76, %v125
  %v142 = vadd.f32 %v77, %v126
  %v143 = vadd.f32 %v78, %v127
  %v144 = vadd.f32 %v79, %v128
  %v145 = vadd.f32 %v80, %v129
  %v146 = vadd.f32 %v81, %v130
  %v147 = vadd.f32 %v82, %v131
  %v148 = vadd.f32 %v83, %v132
  %v149 = vadd.f32 %v84, %v133
  %v150 = vperm.slane %v18, 1
  %v151 = vadd.f32 %v134, %v150
  %v152 = vadd.f32 %v135, %v150
  %v153 = vadd.f32 %v136, %v150
  %v154 = vadd.f32 %v137, %v150
  %v155 = vadd.f32 %v138, %v150
  %v156 = vadd.f32 %v139, %v150
  %v157 = vadd.f32 %v140, %v150
  %v158 = vadd.f32 %v141, %v150
  %v159 = vadd.f32 %v142, %v150
  %v160 = vadd.f32 %v143, %v150
  %v161 = vadd.f32 %v144, %v150
  %v162 = vadd.f32 %v145, %v150
  %v163 = vadd.f32 %v146, %v150
  %v164 = vadd.f32 %v147, %v150
  %v165 = vadd.f32 %v148, %v150
  %v166 = vadd.f32 %v149, %v150
  %v167 = vmax.f32 %v151, 0.0
  %v168 = vmax.f32 %v152, 0.0
  %v169 = vmax.f32 %v153, 0.0
  %v170 = vmax.f32 %v154, 0.0
  %v171 = vmax.f32 %v155, 0.0
  %v172 = vmax.f32 %v156, 0.0
  %v173 = vmax.f32 %v157, 0.0
  %v174 = vmax.f32 %v158, 0.0
  %v175 = vmax.f32 %v159, 0.0
  %v176 = vmax.f32 %v160, 0.0
  %v177 = vmax.f32 %v161, 0.0
  %v178 = vmax.f32 %v162, 0.0
  %v179 = vmax.f32 %v163, 0.0
  %v180 = vmax.f32 %v164, 0.0
  %v181 = vmax.f32 %v165, 0.0
  %v182 = vmax.f32 %v166, 0.0
  %183 = vst [vmem:[%s4] sm:$0xff] %v167
  %184 = vst [vmem:[%s4 + $0x8] sm:$0xff] %v168
  %185 = vst [vmem:[%s4 + $0x10] sm:$0xff] %v169
  %186 = vst [vmem:[%s4 + $0x18] sm:$0xff] %v170
  %187 = vst [vmem:[%s4 + $0x20] sm:$0xff] %v171
  %188 = vst [vmem:[%s4 + $0x28] sm:$0xff] %v172
  %189 = vst [vmem:[%s4 + $0x30] sm:$0xff] %v173
  %190 = vst [vmem:[%s4 + $0x38] sm:$0xff] %v174
  %191 = vst [vmem:[%s4 + $0x40] sm:$0xff] %v175
  %192 = vst [vmem:[%s4 + $0x48] sm:$0xff] %v176
  %193 = vst [vmem:[%s4 + $0x50] sm:$0xff] %v177
  %194 = vst [vmem:[%s4 + $0x58] sm:$0xff] %v178
  %195 = vst [vmem:[%s4 + $0x60] sm:$0xff] %v179
  %196 = vst [vmem:[%s4 + $0x68] sm:$0xff] %v180
  %197 = vst [vmem:[%s4 + $0x70] sm:$0xff] %v181
  %198 = vst [vmem:[%s4 + $0x78] sm:$0xff] %v182
  // Predicated region
  $region18: #{basic_block_forward.7} parent=0 // pred_check
    _
  $region19: #{basic_block_forward.7} parent=0 // pred_check_branch
    %200 = sbr.rel (0) target = $region21
  $region20: #{basic_block_forward.7} parent=0 // pred_region
    _
  $region21: #{basic_block_forward.7} parent=0 // pred_fallthru
    _
  // Predicated region
  $region22: #{basic_block_forward.7} parent=0 // pred_check
    _
  $region23: #{basic_block_forward.7} parent=0 // pred_check_branch
    %202 = sbr.rel (0) target = $region25
  $region24: #{basic_block_forward.7} parent=0 // pred_region
    _
  $region25: #{basic_block_forward.7} parent=0 // pred_fallthru
    _

// kernel: basic_block_forward.4
$region0: #{basic_block_forward.4}
  #allocation0 [shape = 'u32[]', space=smem, size = 0x4, offset = 0x4, fixed_abs, tag = 'smem constant byte address 0x4 - core index']
  #allocation1 [shape = 'u32[72,128]{1,0:T(1,128)}', space=vmem, size = 0x9000, scoped, tag = 'internal scratch']
  #allocation2 [shape = 'bf16[64,36]{1,0:T(8,128)(2,1)}', space=vmem, size = 0x4000, scoped, tag = 'scratch operand']
  %s0 = inlined_call_operand.vmem [shape: bf16[2,9,9,4], index: 0, kind: input, shape index: {}]
  %s1 = inlined_call_operand.vmem [shape: bf16[2,9,9,4], index: 1, kind: input, shape index: {}]
  %s2 = inlined_call_operand.vmem [shape: bf16[2,9,9,4], index: 2, kind: input, shape index: {}]
  %s3 = inlined_call_operand.vmem [shape: bf16[2,9,9,4], index: 3, kind: input, shape index: {}]
  %s4 = inlined_call_operand.vmem [shape: bf16[36,128], index: 4, kind: input, shape index: {}]
  %s5 = inlined_call_operand.vmem [shape: bf16[2,64,128], index: 5, kind: output, shape index: {0}]
  %s6 = inlined_call_operand.vmem [shape: f32[2,2,128], index: 6, kind: output, shape index: {1}]
  %7 = xla_tuple %s5, %s6
  %s8 = sld [smem:[#allocation0]]
  $region65: #{basic_block_forward.4} parent=0
    _
  %s10 = ssub.s32 1, %s8
  %s11 = scalar_select 0, %s10, %s8
  loop: start=0, step=1, limit=4
  $region2: #{basic_block_forward.4} parent=0 // loop_pre_header
    _
  $region3: #{basic_block_forward.4} parent=0 // loop_header
    %s13 = sphi 0, %s17
    %p14 = scmp.ge.s32.totalorder %s13, 4
    %s20 = sphi 0, %s32
    %s21 = sphi 0, %s28
    %s22 = sphi 0, %s20
    %s23 = sphi 0, %s21
    %s24 = sphi 0, %s22
    %s25 = sphi 0, %s23
    %s37 = sphi 0, %s39
    %s40 = sphi 0, %s37
    %s41 = sphi 0, %s40
    %s57 = sphi 0, %s41
    %s65 = sphi 0, %s67
    %s68 = sphi 0, %s65
    %s69 = sphi 0, %s68
    %s85 = sphi 0, %s69
    %s93 = sphi 0, %s95
    %s96 = sphi 0, %s93
    %s97 = sphi 0, %s96
    %s113 = sphi 0, %s97
    %s121 = sphi 0, %s123
    %s124 = sphi 0, %s121
    %s125 = sphi 0, %s124
    %s141 = sphi 0, %s125
    %s145 = sphi 0, %s145
    %s147 = sphi 0, %s145
    %s148 = sphi 0, %s147
    %s162 = sphi 0, %s148
    %s170 = sphi 0, %s172
    %s173 = sphi 0, %s170
    %s174 = sphi 0, %s173
    %s190 = sphi 0, %s174
    %s196 = sphi 0, %s198
    %s199 = sphi 0, %s196
    %s200 = sphi 0, %s199
    %s216 = sphi 0, %s200
  $region4: #{basic_block_forward.4} parent=0 // loop_header_branch
    %16 = sbr.rel (%p14) target = $region8
  $region5: #{basic_block_forward.4} parent=0 // loop_body
    %s18 = ssub.s32 %s13, 1
    %s19 = ssub.s32 %s13, 2
    %s26 = sadd.s32 1, %s21
    %p27 = scmp.ge.s32.totalorder %s26, 1
    %s28 = scalar_select %p27, 0, %s26
    %s29 = sadd.s32 1, %s20
    %s30 = scalar_select %p27, %s29, %s20
    %p31 = scmp.ge.s32.totalorder %s30, 2
    %s32 = scalar_select %p31, 0, %s30
    %s33 = sadd.s32 %s20, %s21
    %s34 = sadd.s32 %s32, %s28
    %s35 = ssub.s32 %s33, %s34
    %p36 = scmp.eq.s32.totalorder %s35, 0
    %s38 = sadd.s32 %s37, 1
    %s39 = scalar_select %p36, %s37, %s38
    %p42 = pneg %p36
    %p43 = scmp.eq.s32.totalorder %s13, 1
    %p44 = por %p42, %p43
    %p45 = scmp.ne.s32.totalorder %s37, %s40
    %p46 = scmp.eq.s32.totalorder %s13, 0
    %p47 = por %p45, %p46
    %p48 = scmp.ne.s32.totalorder %s37, %s40
    %p49 = scmp.eq.s32.totalorder %s18, 1
    %p50 = por %p48, %p49
    %p51 = scmp.ne.s32.totalorder %s40, %s41
    %p52 = scmp.eq.s32.totalorder %s18, 0
    %p53 = por %p51, %p52
    %p54 = scmp.ne.s32.totalorder %s40, %s41
    %p55 = scmp.eq.s32.totalorder %s19, 1
    %p56 = por %p54, %p55
    %p58 = scmp.ne.s32.totalorder %s41, %s57
    %p59 = scmp.eq.s32.totalorder %s19, 0
    %p60 = por %p58, %p59
    %s61 = sadd.s32 %s20, %s21
    %s62 = sadd.s32 %s32, %s28
    %s63 = ssub.s32 %s61, %s62
    %p64 = scmp.eq.s32.totalorder %s63, 0
    %s66 = sadd.s32 %s65, 1
    %s67 = scalar_select %p64, %s65, %s66
    %p70 = pneg %p64
    %p71 = scmp.eq.s32.totalorder %s13, 1
    %p72 = por %p70, %p71
    %p73 = scmp.ne.s32.totalorder %s65, %s68
    %p74 = scmp.eq.s32.totalorder %s13, 0
    %p75 = por %p73, %p74
    %p76 = scmp.ne.s32.totalorder %s65, %s68
    %p77 = scmp.eq.s32.totalorder %s18, 1
    %p78 = por %p76, %p77
    %p79 = scmp.ne.s32.totalorder %s68, %s69
    %p80 = scmp.eq.s32.totalorder %s18, 0
    %p81 = por %p79, %p80
    %p82 = scmp.ne.s32.totalorder %s68, %s69
    %p83 = scmp.eq.s32.totalorder %s19, 1
    %p84 = por %p82, %p83
    %p86 = scmp.ne.s32.totalorder %s69, %s85
    %p87 = scmp.eq.s32.totalorder %s19, 0
    %p88 = por %p86, %p87
    %s89 = sadd.s32 %s20, %s21
    %s90 = sadd.s32 %s32, %s28
    %s91 = ssub.s32 %s89, %s90
    %p92 = scmp.eq.s32.totalorder %s91, 0
    %s94 = sadd.s32 %s93, 1
    %s95 = scalar_select %p92, %s93, %s94
    %p98 = pneg %p92
    %p99 = scmp.eq.s32.totalorder %s13, 1
    %p100 = por %p98, %p99
    %p101 = scmp.ne.s32.totalorder %s93, %s96
    %p102 = scmp.eq.s32.totalorder %s13, 0
    %p103 = por %p101, %p102
    %p104 = scmp.ne.s32.totalorder %s93, %s96
    %p105 = scmp.eq.s32.totalorder %s18, 1
    %p106 = por %p104, %p105
    %p107 = scmp.ne.s32.totalorder %s96, %s97
    %p108 = scmp.eq.s32.totalorder %s18, 0
    %p109 = por %p107, %p108
    %p110 = scmp.ne.s32.totalorder %s96, %s97
    %p111 = scmp.eq.s32.totalorder %s19, 1
    %p112 = por %p110, %p111
    %p114 = scmp.ne.s32.totalorder %s97, %s113
    %p115 = scmp.eq.s32.totalorder %s19, 0
    %p116 = por %p114, %p115
    %s117 = sadd.s32 %s20, %s21
    %s118 = sadd.s32 %s32, %s28
    %s119 = ssub.s32 %s117, %s118
    %p120 = scmp.eq.s32.totalorder %s119, 0
    %s122 = sadd.s32 %s121, 1
    %s123 = scalar_select %p120, %s121, %s122
    %p126 = pneg %p120
    %p127 = scmp.eq.s32.totalorder %s13, 1
    %p128 = por %p126, %p127
    %p129 = scmp.ne.s32.totalorder %s121, %s124
    %p130 = scmp.eq.s32.totalorder %s13, 0
    %p131 = por %p129, %p130
    %p132 = scmp.ne.s32.totalorder %s121, %s124
    %p133 = scmp.eq.s32.totalorder %s18, 1
    %p134 = por %p132, %p133
    %p135 = scmp.ne.s32.totalorder %s124, %s125
    %p136 = scmp.eq.s32.totalorder %s18, 0
    %p137 = por %p135, %p136
    %p138 = scmp.ne.s32.totalorder %s124, %s125
    %p139 = scmp.eq.s32.totalorder %s19, 1
    %p140 = por %p138, %p139
    %p142 = scmp.ne.s32.totalorder %s125, %s141
    %p143 = scmp.eq.s32.totalorder %s19, 0
    %p144 = por %p142, %p143
    %s146 = sadd.s32 %s145, 1
    %p149 = scmp.eq.s32.totalorder %s13, 1
    %p150 = scmp.ne.s32.totalorder %s145, %s147
    %p151 = scmp.eq.s32.totalorder %s13, 0
    %p152 = por %p150, %p151
    %p153 = scmp.ne.s32.totalorder %s145, %s147
    %p154 = scmp.eq.s32.totalorder %s18, 1
    %p155 = por %p153, %p154
    %p156 = scmp.ne.s32.totalorder %s147, %s148
    %p157 = scmp.eq.s32.totalorder %s18, 0
    %p158 = por %p156, %p157
    %p159 = scmp.ne.s32.totalorder %s147, %s148
    %p160 = scmp.eq.s32.totalorder %s19, 1
    %p161 = por %p159, %p160
    %p163 = scmp.ne.s32.totalorder %s148, %s162
    %p164 = scmp.eq.s32.totalorder %s19, 0
    %p165 = por %p163, %p164
    %s166 = sadd.s32 %s20, %s21
    %s167 = sadd.s32 %s32, %s28
    %s168 = ssub.s32 %s166, %s167
    %p169 = scmp.eq.s32.totalorder %s168, 0
    %s171 = sadd.s32 %s170, 1
    %s172 = scalar_select %p169, %s170, %s171
    %p175 = pneg %p169
    %p176 = scmp.eq.s32.totalorder %s13, 1
    %p177 = por %p175, %p176
    %p178 = scmp.ne.s32.totalorder %s170, %s173
    %p179 = scmp.eq.s32.totalorder %s13, 0
    %p180 = por %p178, %p179
    %p181 = scmp.ne.s32.totalorder %s170, %s173
    %p182 = scmp.eq.s32.totalorder %s18, 1
    %p183 = por %p181, %p182
    %p184 = scmp.ne.s32.totalorder %s173, %s174
    %p185 = scmp.eq.s32.totalorder %s18, 0
    %p186 = por %p184, %p185
    %p187 = scmp.ne.s32.totalorder %s173, %s174
    %p188 = scmp.eq.s32.totalorder %s19, 1
    %p189 = por %p187, %p188
    %p191 = scmp.ne.s32.totalorder %s174, %s190
    %p192 = scmp.eq.s32.totalorder %s19, 0
    %p193 = por %p191, %p192
    %s194 = ssub.s32 %s20, %s32
    %p195 = scmp.eq.s32.totalorder %s194, 0
    %s197 = sadd.s32 %s196, 1
    %s198 = scalar_select %p195, %s196, %s197
    %p201 = pneg %p195
    %p202 = scmp.eq.s32.totalorder %s13, 1
    %p203 = por %p201, %p202
    %p204 = scmp.ne.s32.totalorder %s196, %s199
    %p205 = scmp.eq.s32.totalorder %s13, 0
    %p206 = por %p204, %p205
    %p207 = scmp.ne.s32.totalorder %s196, %s199
    %p208 = scmp.eq.s32.totalorder %s18, 1
    %p209 = por %p207, %p208
    %p210 = scmp.ne.s32.totalorder %s199, %s200
    %p211 = scmp.eq.s32.totalorder %s18, 0
    %p212 = por %p210, %p211
    %p213 = scmp.ne.s32.totalorder %s199, %s200
    %p214 = scmp.eq.s32.totalorder %s19, 1
    %p215 = por %p213, %p214
    %p217 = scmp.ne.s32.totalorder %s200, %s216
    %p218 = scmp.eq.s32.totalorder %s19, 0
    %p219 = por %p217, %p218
    %p220 = scmp.le.s32.totalorder 1, %s13
    %p221 = scmp.lt.s32.totalorder %s13, 3
    %p222 = pnand %p220, %p221
    %p223 = pneg %p222
    // Predicated region
    $region9: #{basic_block_forward.4} parent=5 // pred_check
      _
    $region10: #{basic_block_forward.4} parent=5 // pred_check_branch
      %225 = sbr.rel (%p222) target = $region12
    $region11: #{basic_block_forward.4} parent=5 // pred_region
      %s226 = ssub.s32 %s13, 1
      // Predicated region
      $region13: #{basic_block_forward.4} parent=11 // pred_check
        %p227 = pneg %p158
      $region14: #{basic_block_forward.4} parent=11 // pred_check_branch
        %229 = sbr.rel (%p227) target = $region16
      $region15: #{basic_block_forward.4} parent=11 // pred_region
        _
      $region16: #{basic_block_forward.4} parent=11 // pred_fallthru
        _
    $region12: #{basic_block_forward.4} parent=5 // pred_fallthru
      _
    %p230 = scmp.lt.s32.totalorder %s13, 2
    // Predicated region
    $region17: #{basic_block_forward.4} parent=5 // pred_check
      %p231 = pneg %p230
    $region18: #{basic_block_forward.4} parent=5 // pred_check_branch
      %233 = sbr.rel (%p231) target = $region20
    $region19: #{basic_block_forward.4} parent=5 // pred_region
      // Predicated region
      $region21: #{basic_block_forward.4} parent=19 // pred_check
        %p234 = pneg %p47
      $region22: #{basic_block_forward.4} parent=19 // pred_check_branch
        %236 = sbr.rel (%p234) target = $region24
      $region23: #{basic_block_forward.4} parent=19 // pred_region
        %s237 = sadd.s32 %s20, %s21
        %p238 = scmp.lt.s32.totalorder %s237, 1
        %s239 = scalar_select %p238, %s237, 1
        %s240 = smul.addr %s239, 18
        %s241 = smul.addr %s240, 4
        %s242 = scalar_lea.vmem %s0, %s241
        %s243 = sadd.s32 %s20, %s21
      $region24: #{basic_block_forward.4} parent=19 // pred_fallthru
        _
      // Predicated region
      $region25: #{basic_block_forward.4} parent=19 // pred_check
        %p244 = pneg %p75
      $region26: #{basic_block_forward.4} parent=19 // pred_check_branch
        %246 = sbr.rel (%p244) target = $region28
      $region27: #{basic_block_forward.4} parent=19 // pred_region
        %s247 = sadd.s32 %s20, %s21
        %p248 = scmp.lt.s32.totalorder %s247, 1
        %s249 = scalar_select %p248, %s247, 1
        %s250 = smul.addr %s249, 18
        %s251 = smul.addr %s250, 4
        %s252 = scalar_lea.vmem %s1, %s251
        %s253 = sadd.s32 %s20, %s21
      $region28: #{basic_block_forward.4} parent=19 // pred_fallthru
        _
      // Predicated region
      $region29: #{basic_block_forward.4} parent=19 // pred_check
        %p254 = pneg %p103
      $region30: #{basic_block_forward.4} parent=19 // pred_check_branch
        %256 = sbr.rel (%p254) target = $region32
      $region31: #{basic_block_forward.4} parent=19 // pred_region
        %s257 = sadd.s32 %s20, %s21
        %p258 = scmp.lt.s32.totalorder %s257, 1
        %s259 = scalar_select %p258, %s257, 1
        %s260 = smul.addr %s259, 18
        %s261 = smul.addr %s260, 4
        %s262 = scalar_lea.vmem %s2, %s261
        %s263 = sadd.s32 %s20, %s21
      $region32: #{basic_block_forward.4} parent=19 // pred_fallthru
        _
      // Predicated region
      $region33: #{basic_block_forward.4} parent=19 // pred_check
        %p264 = pneg %p131
      $region34: #{basic_block_forward.4} parent=19 // pred_check_branch
        %266 = sbr.rel (%p264) target = $region36
      $region35: #{basic_block_forward.4} parent=19 // pred_region
        %s267 = sadd.s32 %s20, %s21
        %p268 = scmp.lt.s32.totalorder %s267, 1
        %s269 = scalar_select %p268, %s267, 1
        %s270 = smul.addr %s269, 18
        %s271 = smul.addr %s270, 4
        %s272 = scalar_lea.vmem %s3, %s271
        %s273 = sadd.s32 %s20, %s21
      $region36: #{basic_block_forward.4} parent=19 // pred_fallthru
        _
    $region20: #{basic_block_forward.4} parent=5 // pred_fallthru
      _
    %p274 = scmp.le.s32.totalorder 1, %s13
    %p275 = scmp.lt.s32.totalorder %s13, 3
    %p276 = pnand %p274, %p275
    %p277 = pneg %p276
    // Predicated region
    $region37: #{basic_block_forward.4} parent=5 // pred_check
      _
    $region38: #{basic_block_forward.4} parent=5 // pred_check_branch
      %279 = sbr.rel (%p276) target = $region40
    $region39: #{basic_block_forward.4} parent=5 // pred_region
      %s280 = ssub.s32 %s13, 1
      %s281 = sadd.s32 %s22, %s23
      %p282 = scmp.lt.s32.totalorder %s281, 1
      %s283 = scalar_select %p282, %s281, 1
      %s284 = smul.addr %s283, 18
      %s285 = smul.addr %s284, 4
      %s286 = scalar_lea.vmem %s0, %s285
      %p287 = pneg %p53
      %p288 = pneg %p50
      %s289 = sadd.s32 %s22, %s23
      %p290 = scmp.lt.s32.totalorder %s289, 1
      %s291 = scalar_select %p290, %s289, 1
      %s292 = smul.addr %s291, 18
      %s293 = smul.addr %s292, 4
      %s294 = scalar_lea.vmem %s1, %s293
      %p295 = pneg %p81
      %p296 = pneg %p78
      %s297 = sadd.s32 %s22, %s23
      %p298 = scmp.lt.s32.totalorder %s297, 1
      %s299 = scalar_select %p298, %s297, 1
      %s300 = smul.addr %s299, 18
      %s301 = smul.addr %s300, 4
      %s302 = scalar_lea.vmem %s2, %s301
      %p303 = pneg %p109
      %p304 = pneg %p106
      %s305 = sadd.s32 %s22, %s23
      %p306 = scmp.lt.s32.totalorder %s305, 1
      %s307 = scalar_select %p306, %s305, 1
      %s308 = smul.addr %s307, 18
      %s309 = smul.addr %s308, 4
      %s310 = scalar_lea.vmem %s3, %s309
      %p311 = pneg %p137
      %p312 = pneg %p134
      %p313 = pneg %p158
      %p314 = pneg %p155
      %p315 = pneg %p186
      %p316 = pneg %p183
      %s317 = sadd.s32 %s22, %s23
      %p318 = scmp.lt.s32.totalorder %s317, 1
      %s319 = scalar_select %p318, %s317, 1
      %s320 = smul.addr %s319, 8
      %s321 = smul.addr %s320, 4
      %s322 = scalar_lea.vmem %s5, %s321
      %p323 = pneg %p212
      %p324 = pneg %p209
      %p325 = scmp.lt.s32.totalorder %s22, 1
      %s326 = scalar_select %p325, %s22, 1
      %s327 = smul.addr %s326, 2
      %s328 = scalar_lea.vmem %s6, %s327
      %s329 = sadd.s32 %s22, %s23
      %p330 = scmp.lt.s32.totalorder %s329, 1
      %s331 = scalar_select %p330, %s329, 1
      %s332 = smul.addr %s331, 18
      %s333 = smul.addr %s332, 4
      %s334 = scalar_lea.vmem %s0, %s333
      %s335 = sadd.s32 %s22, %s23
      %s336 = sadd.s32 %s22, %s23
      %p337 = scmp.lt.s32.totalorder %s336, 1
      %s338 = scalar_select %p337, %s336, 1
      %s339 = smul.addr %s338, 18
      %s340 = smul.addr %s339, 4
      %s341 = scalar_lea.vmem %s1, %s340
      %s342 = sadd.s32 %s22, %s23
      %s343 = sadd.s32 %s22, %s23
      %p344 = scmp.lt.s32.totalorder %s343, 1
      %s345 = scalar_select %p344, %s343, 1
      %s346 = smul.addr %s345, 18
      %s347 = smul.addr %s346, 4
      %s348 = scalar_lea.vmem %s2, %s347
      %s349 = sadd.s32 %s22, %s23
      %s350 = sadd.s32 %s22, %s23
      %p351 = scmp.lt.s32.totalorder %s350, 1
      %s352 = scalar_select %p351, %s350, 1
      %s353 = smul.addr %s352, 18
      %s354 = smul.addr %s353, 4
      %s355 = scalar_lea.vmem %s3, %s354
      %s356 = sadd.s32 %s22, %s23
      %s357 = sadd.s32 %s22, %s23
      %p358 = scmp.lt.s32.totalorder %s357, 1
      %s359 = scalar_select %p358, %s357, 1
      %s360 = smul.addr %s359, 8
      %s361 = smul.addr %s360, 4
      %s362 = scalar_lea.vmem %s5, %s361
      %s363 = sadd.s32 %s22, %s23
      %p364 = scmp.lt.s32.totalorder %s22, 1
      %s365 = scalar_select %p364, %s22, 1
      %s366 = smul.addr %s365, 2
      %s367 = scalar_lea.vmem %s6, %s366
      %v369 = vld [vmem:[%s334] sm:$0xf]
      %v370 = vld [vmem:[%s334 + $0x8] sm:$0xf]
      %v371 = vld [vmem:[%s334 + $0x10] sm:$0xf]
      %v372 = vld [vmem:[%s334 + $0x18] sm:$0xf]
      %v373 = vld [vmem:[%s334 + $0x20] sm:$0xf]
      %v374 = vld [vmem:[%s334 + $0x28] sm:$0xf]
      %v375 = vld [vmem:[%s334 + $0x30] sm:$0xf]
      %v376 = vld [vmem:[%s334 + $0x38] sm:$0xf]
      %vm377 = vcmask 27648
      %378 = vst.msk [vmem:[#allocation2] sm:$0xf] %vm377, %v369
      %379 = vst.msk [vmem:[#allocation2 + $0x4] sm:$0xf] %vm377, %v370
      %380 = vst.msk [vmem:[#allocation2 + $0x8] sm:$0xf] %vm377, %v371
      %381 = vst.msk [vmem:[#allocation2 + $0xc] sm:$0xf] %vm377, %v372
      %382 = vst.msk [vmem:[#allocation2 + $0x10] sm:$0xf] %vm377, %v373
      %383 = vst.msk [vmem:[#allocation2 + $0x14] sm:$0xf] %vm377, %v374
      %384 = vst.msk [vmem:[#allocation2 + $0x18] sm:$0xf] %vm377, %v375
      %385 = vst.msk [vmem:[#allocation2 + $0x1c] sm:$0xf] %vm377, %v376
      %v386 = vld [vmem:[%s341] sm:$0xf]
      %v387 = vld [vmem:[%s341 + $0x8] sm:$0xf]
      %v388 = vld [vmem:[%s341 + $0x10] sm:$0xf]
      %v389 = vld [vmem:[%s341 + $0x18] sm:$0xf]
      %v390 = vld [vmem:[%s341 + $0x20] sm:$0xf]
      %v391 = vld [vmem:[%s341 + $0x28] sm:$0xf]
      %v392 = vld [vmem:[%s341 + $0x30] sm:$0xf]
      %v393 = vld [vmem:[%s341 + $0x38] sm:$0xf]
      %402 = vrot.lane.b32.xlu0 %v386, 4
      %v403 = vpop.permute.xlu0 %402
      %404 = vrot.lane.b32.xlu0 %v387, 4
      %v405 = vpop.permute.xlu0 %404
      %406 = vrot.lane.b32.xlu0 %v388, 4
      %v407 = vpop.permute.xlu0 %406
      %408 = vrot.lane.b32.xlu0 %v389, 4
      %v409 = vpop.permute.xlu0 %408
      %410 = vrot.lane.b32.xlu0 %v390, 4
      %v411 = vpop.permute.xlu0 %410
      %412 = vrot.lane.b32.xlu0 %v391, 4
      %v413 = vpop.permute.xlu0 %412
      %414 = vrot.lane.b32.xlu0 %v392, 4
      %v415 = vpop.permute.xlu0 %414
      %416 = vrot.lane.b32.xlu0 %v393, 4
      %v417 = vpop.permute.xlu0 %416
      %vm426 = vcmask 60448
      %427 = vst.msk [vmem:[#allocation2] sm:$0xf] %vm426, %v403
      %428 = vst.msk [vmem:[#allocation2 + $0x4] sm:$0xf] %vm426, %v405
      %429 = vst.msk [vmem:[#allocation2 + $0x8] sm:$0xf] %vm426, %v407
      %430 = vst.msk [vmem:[#allocation2 + $0xc] sm:$0xf] %vm426, %v409
      %431 = vst.msk [vmem:[#allocation2 + $0x10] sm:$0xf] %vm426, %v411
      %432 = vst.msk [vmem:[#allocation2 + $0x14] sm:$0xf] %vm426, %v413
      %433 = vst.msk [vmem:[#allocation2 + $0x18] sm:$0xf] %vm426, %v415
      %434 = vst.msk [vmem:[#allocation2 + $0x1c] sm:$0xf] %vm426, %v417
      %v435 = vld [vmem:[%s334] sm:$0xf]
      %v436 = vld [vmem:[%s334 + $0x4] sm:$0x1]
      %v437 = vld [vmem:[%s334 + $0x8] sm:$0xf]
      %v438 = vld [vmem:[%s334 + $0xc] sm:$0x1]
      %v439 = vld [vmem:[%s334 + $0x10] sm:$0xf]
      %v440 = vld [vmem:[%s334 + $0x14] sm:$0x1]
      %v441 = vld [vmem:[%s334 + $0x18] sm:$0xf]
      %v442 = vld [vmem:[%s334 + $0x1c] sm:$0x1]
      %v443 = vld [vmem:[%s334 + $0x20] sm:$0xf]
      %v444 = vld [vmem:[%s334 + $0x24] sm:$0x1]
      %v445 = vld [vmem:[%s334 + $0x28] sm:$0xf]
      %v446 = vld [vmem:[%s334 + $0x2c] sm:$0x1]
      %v447 = vld [vmem:[%s334 + $0x30] sm:$0xf]
      %v448 = vld [vmem:[%s334 + $0x34] sm:$0x1]
      %v449 = vld [vmem:[%s334 + $0x38] sm:$0xf]
      %v450 = vld [vmem:[%s334 + $0x3c] sm:$0x1]
      %vm451 = vsmask.f32 3328
      %vm452 = vsmask.f32 7440
      %vm453 = vmor %vm451, %vm452
      %v455 = vshrl.u32 %v435, 16
      %v457 = vrot.slane %v455, 4
      %v458 = vshll.u32 %v435, 16
      %v460 = vrot.slane %v458, 5
      %v461 = vor.u32 %v457, %v460
      %v462 = vrot.slane %v461, 4
      %v464 = vshll.u32 %v436, 16
      %v466 = vrot.slane %v464, 5
      %v467 = vsel %vm453, %v462, %v466
      %v469 = vshrl.u32 %v437, 16
      %v471 = vrot.slane %v469, 4
      %v472 = vshll.u32 %v437, 16
      %v474 = vrot.slane %v472, 5
      %v475 = vor.u32 %v471, %v474
      %v476 = vrot.slane %v475, 4
      %v478 = vshll.u32 %v438, 16
      %v480 = vrot.slane %v478, 5
      %v481 = vsel %vm453, %v476, %v480
      %v483 = vshrl.u32 %v439, 16
      %v485 = vrot.slane %v483, 4
      %v486 = vshll.u32 %v439, 16
      %v488 = vrot.slane %v486, 5
      %v489 = vor.u32 %v485, %v488
      %v490 = vrot.slane %v489, 4
      %v492 = vshll.u32 %v440, 16
      %v494 = vrot.slane %v492, 5
      %v495 = vsel %vm453, %v490, %v494
      %v497 = vshrl.u32 %v441, 16
      %v499 = vrot.slane %v497, 4
      %v500 = vshll.u32 %v441, 16
      %v502 = vrot.slane %v500, 5
      %v503 = vor.u32 %v499, %v502
      %v504 = vrot.slane %v503, 4
      %v506 = vshll.u32 %v442, 16
      %v508 = vrot.slane %v506, 5
      %v509 = vsel %vm453, %v504, %v508
      %v511 = vshrl.u32 %v443, 16
      %v513 = vrot.slane %v511, 4
      %v514 = vshll.u32 %v443, 16
      %v516 = vrot.slane %v514, 5
      %v517 = vor.u32 %v513, %v516
      %v518 = vrot.slane %v517, 4
      %v520 = vshll.u32 %v444, 16
      %v522 = vrot.slane %v520, 5
      %v523 = vsel %vm453, %v518, %v522
      %v525 = vshrl.u32 %v445, 16
      %v527 = vrot.slane %v525, 4
      %v528 = vshll.u32 %v445, 16
      %v530 = vrot.slane %v528, 5
      %v531 = vor.u32 %v527, %v530
      %v532 = vrot.slane %v531, 4
      %v534 = vshll.u32 %v446, 16
      %v536 = vrot.slane %v534, 5
      %v537 = vsel %vm453, %v532, %v536
      %v539 = vshrl.u32 %v447, 16
      %v541 = vrot.slane %v539, 4
      %v542 = vshll.u32 %v447, 16
      %v544 = vrot.slane %v542, 5
      %v545 = vor.u32 %v541, %v544
      %v546 = vrot.slane %v545, 4
      %v548 = vshll.u32 %v448, 16
      %v550 = vrot.slane %v548, 5
      %v551 = vsel %vm453, %v546, %v550
      %v553 = vshrl.u32 %v449, 16
      %v555 = vrot.slane %v553, 4
      %v556 = vshll.u32 %v449, 16
      %v558 = vrot.slane %v556, 5
      %v559 = vor.u32 %v555, %v558
      %v560 = vrot.slane %v559, 4
      %v562 = vshll.u32 %v450, 16
      %v564 = vrot.slane %v562, 5
      %v565 = vsel %vm453, %v560, %v564
      %566 = vrot.lane.b32.xlu0 %v467, 8
      %v567 = vpop.permute.xlu0 %566
      %568 = vrot.lane.b32.xlu0 %v481, 8
      %v569 = vpop.permute.xlu0 %568
      %570 = vrot.lane.b32.xlu0 %v495, 8
      %v571 = vpop.permute.xlu0 %570
      %572 = vrot.lane.b32.xlu0 %v509, 8
      %v573 = vpop.permute.xlu0 %572
      %574 = vrot.lane.b32.xlu0 %v523, 8
      %v575 = vpop.permute.xlu0 %574
      %576 = vrot.lane.b32.xlu0 %v537, 8
      %v577 = vpop.permute.xlu0 %576
      %578 = vrot.lane.b32.xlu0 %v551, 8
      %v579 = vpop.permute.xlu0 %578
      %580 = vrot.lane.b32.xlu0 %v565, 8
      %v581 = vpop.permute.xlu0 %580
      %vm590 = vcmask 93248
      %591 = vst.msk [vmem:[#allocation2] sm:$0xf] %vm590, %v567
      %592 = vst.msk [vmem:[#allocation2 + $0x4] sm:$0xf] %vm590, %v569
      %593 = vst.msk [vmem:[#allocation2 + $0x8] sm:$0xf] %vm590, %v571
      %594 = vst.msk [vmem:[#allocation2 + $0xc] sm:$0xf] %vm590, %v573
      %595 = vst.msk [vmem:[#allocation2 + $0x10] sm:$0xf] %vm590, %v575
      %596 = vst.msk [vmem:[#allocation2 + $0x14] sm:$0xf] %vm590, %v577
      %597 = vst.msk [vmem:[#allocation2 + $0x18] sm:$0xf] %vm590, %v579
      %598 = vst.msk [vmem:[#allocation2 + $0x1c] sm:$0xf] %vm590, %v581
      %v599 = vld [vmem:[%s348] sm:$0xf]
      %v600 = vld [vmem:[%s348 + $0x8] sm:$0xf]
      %v601 = vld [vmem:[%s348 + $0x10] sm:$0xf]
      %v602 = vld [vmem:[%s348 + $0x18] sm:$0xf]
      %v603 = vld [vmem:[%s348 + $0x20] sm:$0xf]
      %v604 = vld [vmem:[%s348 + $0x28] sm:$0xf]
      %v605 = vld [vmem:[%s348 + $0x30] sm:$0xf]
      %v606 = vld [vmem:[%s348 + $0x38] sm:$0xf]
      %615 = vrot.lane.b32.xlu0 %v599, 12
      %v616 = vpop.permute.xlu0 %615
      %617 = vrot.lane.b32.xlu0 %v600, 12
      %v618 = vpop.permute.xlu0 %617
      %619 = vrot.lane.b32.xlu0 %v601, 12
      %v620 = vpop.permute.xlu0 %619
      %621 = vrot.lane.b32.xlu0 %v602, 12
      %v622 = vpop.permute.xlu0 %621
      %623 = vrot.lane.b32.xlu0 %v603, 12
      %v624 = vpop.permute.xlu0 %623
      %625 = vrot.lane.b32.xlu0 %v604, 12
      %v626 = vpop.permute.xlu0 %625
      %627 = vrot.lane.b32.xlu0 %v605, 12
      %v628 = vpop.permute.xlu0 %627
      %629 = vrot.lane.b32.xlu0 %v606, 12
      %v630 = vpop.permute.xlu0 %629
      %vm639 = vcmask 126048
      %640 = vst.msk [vmem:[#allocation2] sm:$0xf] %vm639, %v616
      %641 = vst.msk [vmem:[#allocation2 + $0x4] sm:$0xf] %vm639, %v618
      %642 = vst.msk [vmem:[#allocation2 + $0x8] sm:$0xf] %vm639, %v620
      %643 = vst.msk [vmem:[#allocation2 + $0xc] sm:$0xf] %vm639, %v622
      %644 = vst.msk [vmem:[#allocation2 + $0x10] sm:$0xf] %vm639, %v624
      %645 = vst.msk [vmem:[#allocation2 + $0x14] sm:$0xf] %vm639, %v626
      %646 = vst.msk [vmem:[#allocation2 + $0x18] sm:$0xf] %vm639, %v628
      %647 = vst.msk [vmem:[#allocation2 + $0x1c] sm:$0xf] %vm639, %v630
      %v648 = vld [vmem:[%s355] sm:$0xf]
      %v649 = vld [vmem:[%s355 + $0x8] sm:$0xf]
      %v650 = vld [vmem:[%s355 + $0x10] sm:$0xf]
      %v651 = vld [vmem:[%s355 + $0x18] sm:$0xf]
      %v652 = vld [vmem:[%s355 + $0x20] sm:$0xf]
      %v653 = vld [vmem:[%s355 + $0x28] sm:$0xf]
      %v654 = vld [vmem:[%s355 + $0x30] sm:$0xf]
      %v655 = vld [vmem:[%s355 + $0x38] sm:$0xf]
      %664 = vrot.lane.b32.xlu0 %v648, 16
      %v665 = vpop.permute.xlu0 %664
      %666 = vrot.lane.b32.xlu0 %v649, 16
      %v667 = vpop.permute.xlu0 %666
      %668 = vrot.lane.b32.xlu0 %v650, 16
      %v669 = vpop.permute.xlu0 %668
      %670 = vrot.lane.b32.xlu0 %v651, 16
      %v671 = vpop.permute.xlu0 %670
      %672 = vrot.lane.b32.xlu0 %v652, 16
      %v673 = vpop.permute.xlu0 %672
      %674 = vrot.lane.b32.xlu0 %v653, 16
      %v675 = vpop.permute.xlu0 %674
      %676 = vrot.lane.b32.xlu0 %v654, 16
      %v677 = vpop.permute.xlu0 %676
      %678 = vrot.lane.b32.xlu0 %v655, 16
      %v679 = vpop.permute.xlu0 %678
      %vm688 = vcmask 158848
      %689 = vst.msk [vmem:[#allocation2] sm:$0xf] %vm688, %v665
      %690 = vst.msk [vmem:[#allocation2 + $0x4] sm:$0xf] %vm688, %v667
      %691 = vst.msk [vmem:[#allocation2 + $0x8] sm:$0xf] %vm688, %v669
      %692 = vst.msk [vmem:[#allocation2 + $0xc] sm:$0xf] %vm688, %v671
      %693 = vst.msk [vmem:[#allocation2 + $0x10] sm:$0xf] %vm688, %v673
      %694 = vst.msk [vmem:[#allocation2 + $0x14] sm:$0xf] %vm688, %v675
      %695 = vst.msk [vmem:[#allocation2 + $0x18] sm:$0xf] %vm688, %v677
      %696 = vst.msk [vmem:[#allocation2 + $0x1c] sm:$0xf] %vm688, %v679
      %v697 = vld [vmem:[%s348] sm:$0xf]
      %v698 = vld [vmem:[%s348 + $0x4] sm:$0x1]
      %v699 = vld [vmem:[%s348 + $0x8] sm:$0xf]
      %v700 = vld [vmem:[%s348 + $0xc] sm:$0x1]
      %v701 = vld [vmem:[%s348 + $0x10] sm:$0xf]
      %v702 = vld [vmem:[%s348 + $0x14] sm:$0x1]
      %v703 = vld [vmem:[%s348 + $0x18] sm:$0xf]
      %v704 = vld [vmem:[%s348 + $0x1c] sm:$0x1]
      %v705 = vld [vmem:[%s348 + $0x20] sm:$0xf]
      %v706 = vld [vmem:[%s348 + $0x24] sm:$0x1]
      %v707 = vld [vmem:[%s348 + $0x28] sm:$0xf]
      %v708 = vld [vmem:[%s348 + $0x2c] sm:$0x1]
      %v709 = vld [vmem:[%s348 + $0x30] sm:$0xf]
      %v710 = vld [vmem:[%s348 + $0x34] sm:$0x1]
      %v711 = vld [vmem:[%s348 + $0x38] sm:$0xf]
      %v712 = vld [vmem:[%s348 + $0x3c] sm:$0x1]
      %v714 = vshrl.u32 %v697, 16
      %v716 = vrot.slane %v714, 4
      %v717 = vshll.u32 %v697, 16
      %v719 = vrot.slane %v717, 5
      %v720 = vor.u32 %v716, %v719
      %v721 = vrot.slane %v720, 4
      %v723 = vshll.u32 %v698, 16
      %v725 = vrot.slane %v723, 5
      %v726 = vsel %vm453, %v721, %v725
      %v728 = vshrl.u32 %v699, 16
      %v730 = vrot.slane %v728, 4
      %v731 = vshll.u32 %v699, 16
      %v733 = vrot.slane %v731, 5
      %v734 = vor.u32 %v730, %v733
      %v735 = vrot.slane %v734, 4
      %v737 = vshll.u32 %v700, 16
      %v739 = vrot.slane %v737, 5
      %v740 = vsel %vm453, %v735, %v739
      %v742 = vshrl.u32 %v701, 16
      %v744 = vrot.slane %v742, 4
      %v745 = vshll.u32 %v701, 16
      %v747 = vrot.slane %v745, 5
      %v748 = vor.u32 %v744, %v747
      %v749 = vrot.slane %v748, 4
      %v751 = vshll.u32 %v702, 16
      %v753 = vrot.slane %v751, 5
      %v754 = vsel %vm453, %v749, %v753
      %v756 = vshrl.u32 %v703, 16
      %v758 = vrot.slane %v756, 4
      %v759 = vshll.u32 %v703, 16
      %v761 = vrot.slane %v759, 5
      %v762 = vor.u32 %v758, %v761
      %v763 = vrot.slane %v762, 4
      %v765 = vshll.u32 %v704, 16
      %v767 = vrot.slane %v765, 5
      %v768 = vsel %vm453, %v763, %v767
      %v770 = vshrl.u32 %v705, 16
      %v772 = vrot.slane %v770, 4
      %v773 = vshll.u32 %v705, 16
      %v775 = vrot.slane %v773, 5
      %v776 = vor.u32 %v772, %v775
      %v777 = vrot.slane %v776, 4
      %v779 = vshll.u32 %v706, 16
      %v781 = vrot.slane %v779, 5
      %v782 = vsel %vm453, %v777, %v781
      %v784 = vshrl.u32 %v707, 16
      %v786 = vrot.slane %v784, 4
      %v787 = vshll.u32 %v707, 16
      %v789 = vrot.slane %v787, 5
      %v790 = vor.u32 %v786, %v789
      %v791 = vrot.slane %v790, 4
      %v793 = vshll.u32 %v708, 16
      %v795 = vrot.slane %v793, 5
      %v796 = vsel %vm453, %v791, %v795
      %v798 = vshrl.u32 %v709, 16
      %v800 = vrot.slane %v798, 4
      %v801 = vshll.u32 %v709, 16
      %v803 = vrot.slane %v801, 5
      %v804 = vor.u32 %v800, %v803
      %v805 = vrot.slane %v804, 4
      %v807 = vshll.u32 %v710, 16
      %v809 = vrot.slane %v807, 5
      %v810 = vsel %vm453, %v805, %v809
      %v812 = vshrl.u32 %v711, 16
      %v814 = vrot.slane %v812, 4
      %v815 = vshll.u32 %v711, 16
      %v817 = vrot.slane %v815, 5
      %v818 = vor.u32 %v814, %v817
      %v819 = vrot.slane %v818, 4
      %v821 = vshll.u32 %v712, 16
      %v823 = vrot.slane %v821, 5
      %v824 = vsel %vm453, %v819, %v823
      %825 = vrot.lane.b32.xlu0 %v726, 20
      %v826 = vpop.permute.xlu0 %825
      %827 = vrot.lane.b32.xlu0 %v740, 20
      %v828 = vpop.permute.xlu0 %827
      %829 = vrot.lane.b32.xlu0 %v754, 20
      %v830 = vpop.permute.xlu0 %829
      %831 = vrot.lane.b32.xlu0 %v768, 20
      %v832 = vpop.permute.xlu0 %831
      %833 = vrot.lane.b32.xlu0 %v782, 20
      %v834 = vpop.permute.xlu0 %833
      %835 = vrot.lane.b32.xlu0 %v796, 20
      %v836 = vpop.permute.xlu0 %835
      %837 = vrot.lane.b32.xlu0 %v810, 20
      %v838 = vpop.permute.xlu0 %837
      %839 = vrot.lane.b32.xlu0 %v824, 20
      %v840 = vpop.permute.xlu0 %839
      %vm849 = vcmask 191648
      %850 = vst.msk [vmem:[#allocation2] sm:$0xf] %vm849, %v826
      %851 = vst.msk [vmem:[#allocation2 + $0x4] sm:$0xf] %vm849, %v828
      %852 = vst.msk [vmem:[#allocation2 + $0x8] sm:$0xf] %vm849, %v830
      %853 = vst.msk [vmem:[#allocation2 + $0xc] sm:$0xf] %vm849, %v832
      %854 = vst.msk [vmem:[#allocation2 + $0x10] sm:$0xf] %vm849, %v834
      %855 = vst.msk [vmem:[#allocation2 + $0x14] sm:$0xf] %vm849, %v836
      %856 = vst.msk [vmem:[#allocation2 + $0x18] sm:$0xf] %vm849, %v838
      %857 = vst.msk [vmem:[#allocation2 + $0x1c] sm:$0xf] %vm849, %v840
      %s858 = scalar_lea.vmem %s334, 8
      %v859 = vld [vmem:[%s858] sm:$0xf]
      %v860 = vld [vmem:[%s858 + $0x8] sm:$0xf]
      %v861 = vld [vmem:[%s858 + $0x10] sm:$0xf]
      %v862 = vld [vmem:[%s858 + $0x18] sm:$0xf]
      %v863 = vld [vmem:[%s858 + $0x20] sm:$0xf]
      %v864 = vld [vmem:[%s858 + $0x28] sm:$0xf]
      %v865 = vld [vmem:[%s858 + $0x30] sm:$0xf]
      %v866 = vld [vmem:[%s858 + $0x38] sm:$0xf]
      %875 = vrot.lane.b32.xlu0 %v859, 24
      %v876 = vpop.permute.xlu0 %875
      %877 = vrot.lane.b32.xlu0 %v860, 24
      %v878 = vpop.permute.xlu0 %877
      %879 = vrot.lane.b32.xlu0 %v861, 24
      %v880 = vpop.permute.xlu0 %879
      %881 = vrot.lane.b32.xlu0 %v862, 24
      %v882 = vpop.permute.xlu0 %881
      %883 = vrot.lane.b32.xlu0 %v863, 24
      %v884 = vpop.permute.xlu0 %883
      %885 = vrot.lane.b32.xlu0 %v864, 24
      %v886 = vpop.permute.xlu0 %885
      %887 = vrot.lane.b32.xlu0 %v865, 24
      %v888 = vpop.permute.xlu0 %887
      %889 = vrot.lane.b32.xlu0 %v866, 24
      %v890 = vpop.permute.xlu0 %889
      %vm899 = vcmask 224448
      %900 = vst.msk [vmem:[#allocation2] sm:$0xf] %vm899, %v876
      %901 = vst.msk [vmem:[#allocation2 + $0x4] sm:$0xf] %vm899, %v878
      %902 = vst.msk [vmem:[#allocation2 + $0x8] sm:$0xf] %vm899, %v880
      %903 = vst.msk [vmem:[#allocation2 + $0xc] sm:$0xf] %vm899, %v882
      %904 = vst.msk [vmem:[#allocation2 + $0x10] sm:$0xf] %vm899, %v884
      %905 = vst.msk [vmem:[#allocation2 + $0x14] sm:$0xf] %vm899, %v886
      %906 = vst.msk [vmem:[#allocation2 + $0x18] sm:$0xf] %vm899, %v888
      %907 = vst.msk [vmem:[#allocation2 + $0x1c] sm:$0xf] %vm899, %v890
      %s908 = scalar_lea.vmem %s341, 8
      %v909 = vld [vmem:[%s908] sm:$0xf]
      %v910 = vld [vmem:[%s908 + $0x8] sm:$0xf]
      %v911 = vld [vmem:[%s908 + $0x10] sm:$0xf]
      %v912 = vld [vmem:[%s908 + $0x18] sm:$0xf]
      %v913 = vld [vmem:[%s908 + $0x20] sm:$0xf]
      %v914 = vld [vmem:[%s908 + $0x28] sm:$0xf]
      %v915 = vld [vmem:[%s908 + $0x30] sm:$0xf]
      %v916 = vld [vmem:[%s908 + $0x38] sm:$0xf]
      %925 = vrot.lane.b32.xlu0 %v909, 28
      %v926 = vpop.permute.xlu0 %925
      %927 = vrot.lane.b32.xlu0 %v910, 28
      %v928 = vpop.permute.xlu0 %927
      %929 = vrot.lane.b32.xlu0 %v911, 28
      %v930 = vpop.permute.xlu0 %929
      %931 = vrot.lane.b32.xlu0 %v912, 28
      %v932 = vpop.permute.xlu0 %931
      %933 = vrot.lane.b32.xlu0 %v913, 28
      %v934 = vpop.permute.xlu0 %933
      %935 = vrot.lane.b32.xlu0 %v914, 28
      %v936 = vpop.permute.xlu0 %935
      %937 = vrot.lane.b32.xlu0 %v915, 28
      %v938 = vpop.permute.xlu0 %937
      %939 = vrot.lane.b32.xlu0 %v916, 28
      %v940 = vpop.permute.xlu0 %939
      %vm949 = vcmask 257248
      %950 = vst.msk [vmem:[#allocation2] sm:$0xf] %vm949, %v926
      %951 = vst.msk [vmem:[#allocation2 + $0x4] sm:$0xf] %vm949, %v928
      %952 = vst.msk [vmem:[#allocation2 + $0x8] sm:$0xf] %vm949, %v930
      %953 = vst.msk [vmem:[#allocation2 + $0xc] sm:$0xf] %vm949, %v932
      %954 = vst.msk [vmem:[#allocation2 + $0x10] sm:$0xf] %vm949, %v934
      %955 = vst.msk [vmem:[#allocation2 + $0x14] sm:$0xf] %vm949, %v936
      %956 = vst.msk [vmem:[#allocation2 + $0x18] sm:$0xf] %vm949, %v938
      %957 = vst.msk [vmem:[#allocation2 + $0x1c] sm:$0xf] %vm949, %v940
      %v958 = vld [vmem:[%s858] sm:$0xf]
      %v959 = vld [vmem:[%s858 + $0x4] sm:$0x1]
      %v960 = vld [vmem:[%s858 + $0x8] sm:$0xf]
      %v961 = vld [vmem:[%s858 + $0xc] sm:$0x1]
      %v962 = vld [vmem:[%s858 + $0x10] sm:$0xf]
      %v963 = vld [vmem:[%s858 + $0x14] sm:$0x1]
      %v964 = vld [vmem:[%s858 + $0x18] sm:$0xf]
      %v965 = vld [vmem:[%s858 + $0x1c] sm:$0x1]
      %v966 = vld [vmem:[%s858 + $0x20] sm:$0xf]
      %v967 = vld [vmem:[%s858 + $0x24] sm:$0x1]
      %v968 = vld [vmem:[%s858 + $0x28] sm:$0xf]
      %v969 = vld [vmem:[%s858 + $0x2c] sm:$0x1]
      %v970 = vld [vmem:[%s858 + $0x30] sm:$0xf]
      %v971 = vld [vmem:[%s858 + $0x34] sm:$0x1]
      %v972 = vld [vmem:[%s858 + $0x38] sm:$0xf]
      %v973 = vld [vmem:[%s858 + $0x3c] sm:$0x1]
      %v975 = vshrl.u32 %v958, 16
      %v977 = vrot.slane %v975, 4
      %v978 = vshll.u32 %v958, 16
      %v980 = vrot.slane %v978, 5
      %v981 = vor.u32 %v977, %v980
      %v982 = vrot.slane %v981, 4
      %v984 = vshll.u32 %v959, 16
      %v986 = vrot.slane %v984, 5
      %v987 = vsel %vm453, %v982, %v986
      %v989 = vshrl.u32 %v960, 16
      %v991 = vrot.slane %v989, 4
      %v992 = vshll.u32 %v960, 16
      %v994 = vrot.slane %v992, 5
      %v995 = vor.u32 %v991, %v994
      %v996 = vrot.slane %v995, 4
      %v998 = vshll.u32 %v961, 16
      %v1000 = vrot.slane %v998, 5
      %v1001 = vsel %vm453, %v996, %v1000
      %v1003 = vshrl.u32 %v962, 16
      %v1005 = vrot.slane %v1003, 4
      %v1006 = vshll.u32 %v962, 16
      %v1008 = vrot.slane %v1006, 5
      %v1009 = vor.u32 %v1005, %v1008
      %v1010 = vrot.slane %v1009, 4
      %v1012 = vshll.u32 %v963, 16
      %v1014 = vrot.slane %v1012, 5
      %v1015 = vsel %vm453, %v1010, %v1014
      %v1017 = vshrl.u32 %v964, 16
      %v1019 = vrot.slane %v1017, 4
      %v1020 = vshll.u32 %v964, 16
      %v1022 = vrot.slane %v1020, 5
      %v1023 = vor.u32 %v1019, %v1022
      %v1024 = vrot.slane %v1023, 4
      %v1026 = vshll.u32 %v965, 16
      %v1028 = vrot.slane %v1026, 5
      %v1029 = vsel %vm453, %v1024, %v1028
      %v1031 = vshrl.u32 %v966, 16
      %v1033 = vrot.slane %v1031, 4
      %v1034 = vshll.u32 %v966, 16
      %v1036 = vrot.slane %v1034, 5
      %v1037 = vor.u32 %v1033, %v1036
      %v1038 = vrot.slane %v1037, 4
      %v1040 = vshll.u32 %v967, 16
      %v1042 = vrot.slane %v1040, 5
      %v1043 = vsel %vm453, %v1038, %v1042
      %v1045 = vshrl.u32 %v968, 16
      %v1047 = vrot.slane %v1045, 4
      %v1048 = vshll.u32 %v968, 16
      %v1050 = vrot.slane %v1048, 5
      %v1051 = vor.u32 %v1047, %v1050
      %v1052 = vrot.slane %v1051, 4
      %v1054 = vshll.u32 %v969, 16
      %v1056 = vrot.slane %v1054, 5
      %v1057 = vsel %vm453, %v1052, %v1056
      %v1059 = vshrl.u32 %v970, 16
      %v1061 = vrot.slane %v1059, 4
      %v1062 = vshll.u32 %v970, 16
      %v1064 = vrot.slane %v1062, 5
      %v1065 = vor.u32 %v1061, %v1064
      %v1066 = vrot.slane %v1065, 4
      %v1068 = vshll.u32 %v971, 16
      %v1070 = vrot.slane %v1068, 5
      %v1071 = vsel %vm453, %v1066, %v1070
      %v1073 = vshrl.u32 %v972, 16
      %v1075 = vrot.slane %v1073, 4
      %v1076 = vshll.u32 %v972, 16
      %v1078 = vrot.slane %v1076, 5
      %v1079 = vor.u32 %v1075, %v1078
      %v1080 = vrot.slane %v1079, 4
      %v1082 = vshll.u32 %v973, 16
      %v1084 = vrot.slane %v1082, 5
      %v1085 = vsel %vm453, %v1080, %v1084
      %1086 = vrot.lane.b32.xlu0 %v987, 32
      %v1087 = vpop.permute.xlu0 %1086
      %1088 = vrot.lane.b32.xlu0 %v1001, 32
      %v1089 = vpop.permute.xlu0 %1088
      %1090 = vrot.lane.b32.xlu0 %v1015, 32
      %v1091 = vpop.permute.xlu0 %1090
      %1092 = vrot.lane.b32.xlu0 %v1029, 32
      %v1093 = vpop.permute.xlu0 %1092
      %1094 = vrot.lane.b32.xlu0 %v1043, 32
      %v1095 = vpop.permute.xlu0 %1094
      %1096 = vrot.lane.b32.xlu0 %v1057, 32
      %v1097 = vpop.permute.xlu0 %1096
      %1098 = vrot.lane.b32.xlu0 %v1071, 32
      %v1099 = vpop.permute.xlu0 %1098
      %1100 = vrot.lane.b32.xlu0 %v1085, 32
      %v1101 = vpop.permute.xlu0 %1100
      %vm1110 = vcmask 290048
      %1111 = vst.msk [vmem:[#allocation2] sm:$0xf] %vm1110, %v1087
      %1112 = vst.msk [vmem:[#allocation2 + $0x4] sm:$0xf] %vm1110, %v1089
      %1113 = vst.msk [vmem:[#allocation2 + $0x8] sm:$0xf] %vm1110, %v1091
      %1114 = vst.msk [vmem:[#allocation2 + $0xc] sm:$0xf] %vm1110, %v1093
      %1115 = vst.msk [vmem:[#allocation2 + $0x10] sm:$0xf] %vm1110, %v1095
      %1116 = vst.msk [vmem:[#allocation2 + $0x14] sm:$0xf] %vm1110, %v1097
      %1117 = vst.msk [vmem:[#allocation2 + $0x18] sm:$0xf] %vm1110, %v1099
      %1118 = vst.msk [vmem:[#allocation2 + $0x1c] sm:$0xf] %vm1110, %v1101
      %v1119 = vld [vmem:[#allocation2] sm:$0xf]
      %v1120 = vld [vmem:[#allocation2 + $0x4] sm:$0xf]
      %v1121 = vld [vmem:[#allocation2 + $0x8] sm:$0xf]
      %v1122 = vld [vmem:[#allocation2 + $0xc] sm:$0xf]
      %v1123 = vld [vmem:[#allocation2 + $0x10] sm:$0xf]
      %v1124 = vld [vmem:[#allocation2 + $0x14] sm:$0xf]
      %v1125 = vld [vmem:[#allocation2 + $0x18] sm:$0xf]
      %v1126 = vld [vmem:[#allocation2 + $0x1c] sm:$0xf]
      %v1127 = vld [vmem:[%s4] sm:$0xf]
      %v1128 = vld [vmem:[%s4 + $0x4] sm:$0xf]
      %v1129 = vld [vmem:[%s4 + $0x8] sm:$0xf]
      %v1130 = vld [vmem:[%s4 + $0xc] sm:$0xf]
      %v1131 = vld [vmem:[%s4 + $0x10] sm:$0x3]
      %v1140 = vunpack.c.l.b16 %v1119
      %v1141 = vunpack.c.l.b16 %v1120
      %v1142 = vunpack.c.l.b16 %v1121
      %v1143 = vunpack.c.l.b16 %v1122
      %v1144 = vunpack.c.l.b16 %v1123
      %v1145 = vunpack.c.l.b16 %v1124
      %v1146 = vunpack.c.l.b16 %v1125
      %v1147 = vunpack.c.l.b16 %v1126
      %v1148 = vpack.c.b16 %v1141, %v1140
      %v1149 = vpack.c.b16 %v1143, %v1142
      %v1150 = vpack.c.b16 %v1145, %v1144
      %v1151 = vpack.c.b16 %v1147, %v1146
      %v1157 = vunpack.c.l.b16 %v1127
      %v1158 = vunpack.c.l.b16 %v1128
      %v1159 = vunpack.c.l.b16 %v1129
      %v1160 = vunpack.c.l.b16 %v1130
      %v1161 = vunpack.c.l.b16 %v1131
      %v1162 = vpack.c.b16 %v1158, %v1157
      %v1163 = vpack.c.b16 %v1160, %v1159
      %v1164 = vpack.c.b16 %v1161, %v1161
      %vm1167 = vcmask 293888
      %v1169 = vsel %vm1167, %v1148, 0
      %v1172 = vsel %vm1167, %v1149, 0
      %v1175 = vsel %vm1167, %v1150, 0
      %v1178 = vsel %vm1167, %v1151, 0
      %vm1180 = vcmask 1041408
      %v1182 = vsel %vm1180, %v1164, 0
      %1184 = vmatpush.bf16.msra.mxu0 0
      %1185 = vmatpush.bf16.msra.mxu0 0
      %1186 = vmatpush.bf16.msra.mxu0 0
      %1187 = vmatpush.bf16.msra.mxu0 0
      %1188 = vmatpush.bf16.msra.mxu0 0
      %1189 = vmatpush.bf16.msra.mxu0 %v1182
      %1190 = vmatpush.bf16.msra.mxu0 %v1163
      %1191 = vmatpush.bf16.msra.mxu0 %v1162
      %1192 = vmatmul.bf16.gmra.mxu0 %v1169
      %v1193 = vpop.f32.mrf.mxu0
      %v1194 = vadd.f32 0.0, %v1193
      %v1195 = vpop.f32.mrf.mxu0
      %v1196 = vadd.f32 0.0, %v1195
      %1197 = vmatmul.bf16.gmra.mxu0 %v1172
      %v1198 = vpop.f32.mrf.mxu0
      %v1199 = vadd.f32 0.0, %v1198
      %v1200 = vpop.f32.mrf.mxu0
      %v1201 = vadd.f32 0.0, %v1200
      %1202 = vmatmul.bf16.gmra.mxu0 %v1175
      %v1203 = vpop.f32.mrf.mxu0
      %v1204 = vadd.f32 0.0, %v1203
      %v1205 = vpop.f32.mrf.mxu0
      %v1206 = vadd.f32 0.0, %v1205
      %1207 = vmatmul.bf16.gmra.mxu0 %v1178
      %v1208 = vpop.f32.mrf.mxu0
      %v1209 = vadd.f32 0.0, %v1208
      %v1210 = vpop.f32.mrf.mxu0
      %v1211 = vadd.f32 0.0, %v1210
      %1212 = vdwg.mxu0
      %v1213 = vpack.c.bf16 %v1194, %v1194
      %v1214 = vpack.c.bf16 %v1196, %v1196
      %v1215 = vpack.c.bf16 %v1199, %v1199
      %v1216 = vpack.c.bf16 %v1201, %v1201
      %v1217 = vpack.c.bf16 %v1204, %v1204
      %v1218 = vpack.c.bf16 %v1206, %v1206
      %v1219 = vpack.c.bf16 %v1209, %v1209
      %v1220 = vpack.c.bf16 %v1211, %v1211
      %1221 = vst [vmem:[%s362] sm:$0xf] %v1213
      %1222 = vst [vmem:[%s362 + $0x4] sm:$0xf] %v1214
      %1223 = vst [vmem:[%s362 + $0x8] sm:$0xf] %v1215
      %1224 = vst [vmem:[%s362 + $0xc] sm:$0xf] %v1216
      %1225 = vst [vmem:[%s362 + $0x10] sm:$0xf] %v1217
      %1226 = vst [vmem:[%s362 + $0x14] sm:$0xf] %v1218
      %1227 = vst [vmem:[%s362 + $0x18] sm:$0xf] %v1219
      %1228 = vst [vmem:[%s362 + $0x1c] sm:$0xf] %v1220
      %p1229 = scmp.eq.s32.totalorder %s23, 0
      // Predicated region
      $region41: #{basic_block_forward.4} parent=39 // pred_check
        %p1230 = pneg %p1229
      $region42: #{basic_block_forward.4} parent=39 // pred_check_branch
        %1232 = sbr.rel (%p1230) target = $region44
      $region43: #{basic_block_forward.4} parent=39 // pred_region
        %1233 = vst [vmem:[%s367] sm:$0x3] 0.0
      $region44: #{basic_block_forward.4} parent=39 // pred_fallthru
        _
      %v1234 = vld [vmem:[%s367] sm:$0x3]
      %v1235 = vadd.f32 %v1194, %v1196
      %v1236 = vadd.f32 %v1235, %v1199
      %v1237 = vadd.f32 %v1236, %v1201
      %v1238 = vadd.f32 %v1237, %v1204
      %v1239 = vadd.f32 %v1238, %v1206
      %v1240 = vadd.f32 %v1239, %v1209
      %v1241 = vadd.f32 %v1240, %v1211
      %v1242 = vrot.slane %v1241, 4
      %v1243 = vadd.f32 %v1241, %v1242
      %v1244 = vrot.slane %v1243, 2
      %v1245 = vadd.f32 %v1243, %v1244
      %v1246 = vrot.slane %v1245, 1
      %v1247 = vadd.f32 %v1245, %v1246
      %v1248 = vmul.f32 %v1194, %v1194
      %v1249 = vmul.f32 %v1196, %v1196
      %v1250 = vmul.f32 %v1199, %v1199
      %v1251 = vmul.f32 %v1201, %v1201
      %v1252 = vmul.f32 %v1204, %v1204
      %v1253 = vmul.f32 %v1206, %v1206
      %v1254 = vmul.f32 %v1209, %v1209
      %v1255 = vmul.f32 %v1211, %v1211
      %v1256 = vadd.f32 %v1248, %v1249
      %v1257 = vadd.f32 %v1256, %v1250
      %v1258 = vadd.f32 %v1257, %v1251
      %v1259 = vadd.f32 %v1258, %v1252
      %v1260 = vadd.f32 %v1259, %v1253
      %v1261 = vadd.f32 %v1260, %v1254
      %v1262 = vadd.f32 %v1261, %v1255
      %v1263 = vrot.slane %v1262, 4
      %v1264 = vadd.f32 %v1262, %v1263
      %v1265 = vrot.slane %v1264, 2
      %v1266 = vadd.f32 %v1264, %v1265
      %v1267 = vrot.slane %v1266, 1
      %v1268 = vadd.f32 %v1266, %v1267
      %vm1269 = vcmask 1040384
      %v1270 = vsel %vm1269, %v1247, %v1268
      %v1271 = vadd.f32 %v1234, %v1270
      %1272 = vst [vmem:[%s367] sm:$0x3] %v1271
      %s1273 = sadd.s32 %s22, %s23
      %p1274 = scmp.lt.s32.totalorder %s1273, 1
      %s1275 = scalar_select %p1274, %s1273, 1
      %s1276 = smul.addr %s1275, 8
      %s1277 = smul.addr %s1276, 4
      %s1278 = scalar_lea.vmem %s5, %s1277
      %p1279 = scmp.lt.s32.totalorder %s22, 1
      %s1280 = scalar_select %p1279, %s22, 1
      %s1281 = smul.addr %s1280, 2
      %s1282 = scalar_lea.vmem %s6, %s1281
      // Predicated region
      $region45: #{basic_block_forward.4} parent=39 // pred_check
        %p1283 = pneg %p183
      $region46: #{basic_block_forward.4} parent=39 // pred_check_branch
        %1285 = sbr.rel (%p1283) target = $region48
      $region47: #{basic_block_forward.4} parent=39 // pred_region
        %s1286 = sadd.s32 %s22, %s23
      $region48: #{basic_block_forward.4} parent=39 // pred_fallthru
        _
      // Predicated region
      $region49: #{basic_block_forward.4} parent=39 // pred_check
        %p1287 = pneg %p209
      $region50: #{basic_block_forward.4} parent=39 // pred_check_branch
        %1289 = sbr.rel (%p1287) target = $region52
      $region51: #{basic_block_forward.4} parent=39 // pred_region
        _
      $region52: #{basic_block_forward.4} parent=39 // pred_fallthru
        _
    $region40: #{basic_block_forward.4} parent=5 // pred_fallthru
      _
    %p1290 = scmp.le.s32.totalorder 2, %s13
    // Predicated region
    $region53: #{basic_block_forward.4} parent=5 // pred_check
      %p1291 = pneg %p1290
    $region54: #{basic_block_forward.4} parent=5 // pred_check_branch
      %1293 = sbr.rel (%p1291) target = $region56
    $region55: #{basic_block_forward.4} parent=5 // pred_region
      %s1294 = ssub.s32 %s13, 2
      // Predicated region
      $region57: #{basic_block_forward.4} parent=55 // pred_check
        %p1295 = pneg %p189
      $region58: #{basic_block_forward.4} parent=55 // pred_check_branch
        %1297 = sbr.rel (%p1295) target = $region60
      $region59: #{basic_block_forward.4} parent=55 // pred_region
        %s1298 = sadd.s32 %s24, %s25
        %p1299 = scmp.lt.s32.totalorder %s1298, 1
        %s1300 = scalar_select %p1299, %s1298, 1
        %s1301 = smul.addr %s1300, 8
        %s1302 = smul.addr %s1301, 4
        %s1303 = scalar_lea.vmem %s5, %s1302
      $region60: #{basic_block_forward.4} parent=55 // pred_fallthru
        _
      // Predicated region
      $region61: #{basic_block_forward.4} parent=55 // pred_check
        %p1304 = pneg %p215
      $region62: #{basic_block_forward.4} parent=55 // pred_check_branch
        %1306 = sbr.rel (%p1304) target = $region64
      $region63: #{basic_block_forward.4} parent=55 // pred_region
        %p1307 = scmp.lt.s32.totalorder %s24, 1
        %s1308 = scalar_select %p1307, %s24, 1
        %s1309 = smul.addr %s1308, 2
        %s1310 = scalar_lea.vmem %s6, %s1309
      $region64: #{basic_block_forward.4} parent=55 // pred_fallthru
        _
    $region56: #{basic_block_forward.4} parent=5 // pred_fallthru
      _
  $region6: #{basic_block_forward.4} parent=0 // loop_footer
    %s17 = sadd.s32 1, %s13
  $region7: #{basic_block_forward.4} parent=0 // loop_footer_branch
    %12 = sbr.rel target = $region3
  $region8: #{basic_block_forward.4} parent=0 // loop_exit
    _

// kernel: basic_block_forward.6
$region0: #{basic_block_forward.6}
  #allocation0 [shape = 'u32[]', space=smem, size = 0x4, offset = 0x4, fixed_abs, tag = 'smem constant byte address 0x4 - core index']
  #allocation1 [shape = 'u32[72,128]{1,0:T(1,128)}', space=vmem, size = 0x9000, scoped, tag = 'internal scratch']
  #allocation2 [shape = 'bf16[10,10,128]{2,1,0:T(8,128)(2,1)}', space=vmem, size = 0xa000, scoped, tag = 'scratch operand']
  #allocation3 [shape = 'bf16[64,1152]{1,0:T(8,128)(2,1)}', space=vmem, size = 0x24000, scoped, tag = 'scratch operand']
  %s0 = inlined_call_operand.vmem [shape: bf16[2,64,128], index: 0, kind: input, shape index: {}]
  %s1 = inlined_call_operand.vmem [shape: f32[2,128], index: 1, kind: input, shape index: {}]
  %s2 = inlined_call_operand.vmem [shape: bf16[1152,128], index: 2, kind: input, shape index: {}]
  %s3 = inlined_call_operand.vmem [shape: bf16[2,64,128], index: 3, kind: output, shape index: {0}]
  %s4 = inlined_call_operand.vmem [shape: f32[2,2,128], index: 4, kind: output, shape index: {1}]
  %5 = xla_tuple %s3, %s4
  %s6 = sld [smem:[#allocation0]]
  $region57: #{basic_block_forward.6} parent=0
    _
  %s8 = ssub.s32 1, %s6
  %s9 = scalar_select 0, %s8, %s6
  loop: start=0, step=1, limit=4
  $region2: #{basic_block_forward.6} parent=0 // loop_pre_header
    _
  $region3: #{basic_block_forward.6} parent=0 // loop_header
    %s11 = sphi 0, %s15
    %p12 = scmp.ge.s32.totalorder %s11, 4
    %s18 = sphi 0, %s30
    %s19 = sphi 0, %s26
    %s20 = sphi 0, %s18
    %s21 = sphi 0, %s19
    %s22 = sphi 0, %s20
    %s23 = sphi 0, %s21
    %s35 = sphi 0, %s37
    %s38 = sphi 0, %s35
    %s39 = sphi 0, %s38
    %s55 = sphi 0, %s39
    %s59 = sphi 0, %s59
    %s61 = sphi 0, %s59
    %s62 = sphi 0, %s61
    %s76 = sphi 0, %s62
    %s80 = sphi 0, %s80
    %s82 = sphi 0, %s80
    %s83 = sphi 0, %s82
    %s97 = sphi 0, %s83
    %s105 = sphi 0, %s107
    %s108 = sphi 0, %s105
    %s109 = sphi 0, %s108
    %s125 = sphi 0, %s109
    %s131 = sphi 0, %s133
    %s134 = sphi 0, %s131
    %s135 = sphi 0, %s134
    %s151 = sphi 0, %s135
  $region4: #{basic_block_forward.6} parent=0 // loop_header_branch
    %14 = sbr.rel (%p12) target = $region8
  $region5: #{basic_block_forward.6} parent=0 // loop_body
    %s16 = ssub.s32 %s11, 1
    %s17 = ssub.s32 %s11, 2
    %s24 = sadd.s32 1, %s19
    %p25 = scmp.ge.s32.totalorder %s24, 1
    %s26 = scalar_select %p25, 0, %s24
    %s27 = sadd.s32 1, %s18
    %s28 = scalar_select %p25, %s27, %s18
    %p29 = scmp.ge.s32.totalorder %s28, 2
    %s30 = scalar_select %p29, 0, %s28
    %s31 = sadd.s32 %s18, %s19
    %s32 = sadd.s32 %s30, %s26
    %s33 = ssub.s32 %s31, %s32
    %p34 = scmp.eq.s32.totalorder %s33, 0
    %s36 = sadd.s32 %s35, 1
    %s37 = scalar_select %p34, %s35, %s36
    %p40 = pneg %p34
    %p41 = scmp.eq.s32.totalorder %s11, 1
    %p42 = por %p40, %p41
    %p43 = scmp.ne.s32.totalorder %s35, %s38
    %p44 = scmp.eq.s32.totalorder %s11, 0
    %p45 = por %p43, %p44
    %p46 = scmp.ne.s32.totalorder %s35, %s38
    %p47 = scmp.eq.s32.totalorder %s16, 1
    %p48 = por %p46, %p47
    %p49 = scmp.ne.s32.totalorder %s38, %s39
    %p50 = scmp.eq.s32.totalorder %s16, 0
    %p51 = por %p49, %p50
    %p52 = scmp.ne.s32.totalorder %s38, %s39
    %p53 = scmp.eq.s32.totalorder %s17, 1
    %p54 = por %p52, %p53
    %p56 = scmp.ne.s32.totalorder %s39, %s55
    %p57 = scmp.eq.s32.totalorder %s17, 0
    %p58 = por %p56, %p57
    %s60 = sadd.s32 %s59, 1
    %p63 = scmp.eq.s32.totalorder %s11, 1
    %p64 = scmp.ne.s32.totalorder %s59, %s61
    %p65 = scmp.eq.s32.totalorder %s11, 0
    %p66 = por %p64, %p65
    %p67 = scmp.ne.s32.totalorder %s59, %s61
    %p68 = scmp.eq.s32.totalorder %s16, 1
    %p69 = por %p67, %p68
    %p70 = scmp.ne.s32.totalorder %s61, %s62
    %p71 = scmp.eq.s32.totalorder %s16, 0
    %p72 = por %p70, %p71
    %p73 = scmp.ne.s32.totalorder %s61, %s62
    %p74 = scmp.eq.s32.totalorder %s17, 1
    %p75 = por %p73, %p74
    %p77 = scmp.ne.s32.totalorder %s62, %s76
    %p78 = scmp.eq.s32.totalorder %s17, 0
    %p79 = por %p77, %p78
    %s81 = sadd.s32 %s80, 1
    %p84 = scmp.eq.s32.totalorder %s11, 1
    %p85 = scmp.ne.s32.totalorder %s80, %s82
    %p86 = scmp.eq.s32.totalorder %s11, 0
    %p87 = por %p85, %p86
    %p88 = scmp.ne.s32.totalorder %s80, %s82
    %p89 = scmp.eq.s32.totalorder %s16, 1
    %p90 = por %p88, %p89
    %p91 = scmp.ne.s32.totalorder %s82, %s83
    %p92 = scmp.eq.s32.totalorder %s16, 0
    %p93 = por %p91, %p92
    %p94 = scmp.ne.s32.totalorder %s82, %s83
    %p95 = scmp.eq.s32.totalorder %s17, 1
    %p96 = por %p94, %p95
    %p98 = scmp.ne.s32.totalorder %s83, %s97
    %p99 = scmp.eq.s32.totalorder %s17, 0
    %p100 = por %p98, %p99
    %s101 = sadd.s32 %s18, %s19
    %s102 = sadd.s32 %s30, %s26
    %s103 = ssub.s32 %s101, %s102
    %p104 = scmp.eq.s32.totalorder %s103, 0
    %s106 = sadd.s32 %s105, 1
    %s107 = scalar_select %p104, %s105, %s106
    %p110 = pneg %p104
    %p111 = scmp.eq.s32.totalorder %s11, 1
    %p112 = por %p110, %p111
    %p113 = scmp.ne.s32.totalorder %s105, %s108
    %p114 = scmp.eq.s32.totalorder %s11, 0
    %p115 = por %p113, %p114
    %p116 = scmp.ne.s32.totalorder %s105, %s108
    %p117 = scmp.eq.s32.totalorder %s16, 1
    %p118 = por %p116, %p117
    %p119 = scmp.ne.s32.totalorder %s108, %s109
    %p120 = scmp.eq.s32.totalorder %s16, 0
    %p121 = por %p119, %p120
    %p122 = scmp.ne.s32.totalorder %s108, %s109
    %p123 = scmp.eq.s32.totalorder %s17, 1
    %p124 = por %p122, %p123
    %p126 = scmp.ne.s32.totalorder %s109, %s125
    %p127 = scmp.eq.s32.totalorder %s17, 0
    %p128 = por %p126, %p127
    %s129 = ssub.s32 %s18, %s30
    %p130 = scmp.eq.s32.totalorder %s129, 0
    %s132 = sadd.s32 %s131, 1
    %s133 = scalar_select %p130, %s131, %s132
    %p136 = pneg %p130
    %p137 = scmp.eq.s32.totalorder %s11, 1
    %p138 = por %p136, %p137
    %p139 = scmp.ne.s32.totalorder %s131, %s134
    %p140 = scmp.eq.s32.totalorder %s11, 0
    %p141 = por %p139, %p140
    %p142 = scmp.ne.s32.totalorder %s131, %s134
    %p143 = scmp.eq.s32.totalorder %s16, 1
    %p144 = por %p142, %p143
    %p145 = scmp.ne.s32.totalorder %s134, %s135
    %p146 = scmp.eq.s32.totalorder %s16, 0
    %p147 = por %p145, %p146
    %p148 = scmp.ne.s32.totalorder %s134, %s135
    %p149 = scmp.eq.s32.totalorder %s17, 1
    %p150 = por %p148, %p149
    %p152 = scmp.ne.s32.totalorder %s135, %s151
    %p153 = scmp.eq.s32.totalorder %s17, 0
    %p154 = por %p152, %p153
    %p155 = scmp.le.s32.totalorder 1, %s11
    %p156 = scmp.lt.s32.totalorder %s11, 3
    %p157 = pnand %p155, %p156
    %p158 = pneg %p157
    // Predicated region
    $region9: #{basic_block_forward.6} parent=5 // pred_check
      _
    $region10: #{basic_block_forward.6} parent=5 // pred_check_branch
      %160 = sbr.rel (%p157) target = $region12
    $region11: #{basic_block_forward.6} parent=5 // pred_region
      %s161 = ssub.s32 %s11, 1
      // Predicated region
      $region13: #{basic_block_forward.6} parent=11 // pred_check
        %p162 = pneg %p72
      $region14: #{basic_block_forward.6} parent=11 // pred_check_branch
        %164 = sbr.rel (%p162) target = $region16
      $region15: #{basic_block_forward.6} parent=11 // pred_region
        _
      $region16: #{basic_block_forward.6} parent=11 // pred_fallthru
        _
      // Predicated region
      $region17: #{basic_block_forward.6} parent=11 // pred_check
        %p165 = pneg %p93
      $region18: #{basic_block_forward.6} parent=11 // pred_check_branch
        %167 = sbr.rel (%p165) target = $region20
      $region19: #{basic_block_forward.6} parent=11 // pred_region
        _
      $region20: #{basic_block_forward.6} parent=11 // pred_fallthru
        _
    $region12: #{basic_block_forward.6} parent=5 // pred_fallthru
      _
    %p168 = scmp.lt.s32.totalorder %s11, 2
    // Predicated region
    $region21: #{basic_block_forward.6} parent=5 // pred_check
      %p169 = pneg %p168
    $region22: #{basic_block_forward.6} parent=5 // pred_check_branch
      %171 = sbr.rel (%p169) target = $region24
    $region23: #{basic_block_forward.6} parent=5 // pred_region
      // Predicated region
      $region25: #{basic_block_forward.6} parent=23 // pred_check
        %p172 = pneg %p45
      $region26: #{basic_block_forward.6} parent=23 // pred_check_branch
        %174 = sbr.rel (%p172) target = $region28
      $region27: #{basic_block_forward.6} parent=23 // pred_region
        %s175 = sadd.s32 %s18, %s19
        %p176 = scmp.lt.s32.totalorder %s175, 1
        %s177 = scalar_select %p176, %s175, 1
        %s178 = smul.addr %s177, 8
        %s179 = smul.addr %s178, 4
        %s180 = scalar_lea.vmem %s0, %s179
        %s181 = sadd.s32 %s18, %s19
      $region28: #{basic_block_forward.6} parent=23 // pred_fallthru
        _
    $region24: #{basic_block_forward.6} parent=5 // pred_fallthru
      _
    %p182 = scmp.le.s32.totalorder 1, %s11
    %p183 = scmp.lt.s32.totalorder %s11, 3
    %p184 = pnand %p182, %p183
    %p185 = pneg %p184
    // Predicated region
    $region29: #{basic_block_forward.6} parent=5 // pred_check
      _
    $region30: #{basic_block_forward.6} parent=5 // pred_check_branch
      %187 = sbr.rel (%p184) target = $region32
    $region31: #{basic_block_forward.6} parent=5 // pred_region
      %s188 = ssub.s32 %s11, 1
      %s189 = sadd.s32 %s20, %s21
      %p190 = scmp.lt.s32.totalorder %s189, 1
      %s191 = scalar_select %p190, %s189, 1
      %s192 = smul.addr %s191, 8
      %s193 = smul.addr %s192, 4
      %s194 = scalar_lea.vmem %s0, %s193
      %p195 = pneg %p51
      %p196 = pneg %p48
      %p197 = pneg %p72
      %p198 = pneg %p69
      %p199 = pneg %p93
      %p200 = pneg %p90
      %p201 = pneg %p121
      %p202 = pneg %p118
      %s203 = sadd.s32 %s20, %s21
      %p204 = scmp.lt.s32.totalorder %s203, 1
      %s205 = scalar_select %p204, %s203, 1
      %s206 = smul.addr %s205, 8
      %s207 = smul.addr %s206, 4
      %s208 = scalar_lea.vmem %s3, %s207
      %p209 = pneg %p147
      %p210 = pneg %p144
      %p211 = scmp.lt.s32.totalorder %s20, 1
      %s212 = scalar_select %p211, %s20, 1
      %s213 = smul.addr %s212, 2
      %s214 = scalar_lea.vmem %s4, %s213
      %s215 = sadd.s32 %s20, %s21
      %p216 = scmp.lt.s32.totalorder %s215, 1
      %s217 = scalar_select %p216, %s215, 1
      %s218 = smul.addr %s217, 8
      %s219 = smul.addr %s218, 4
      %s220 = scalar_lea.vmem %s0, %s219
      %s221 = sadd.s32 %s20, %s21
      %s222 = sadd.s32 %s20, %s21
      %p223 = scmp.lt.s32.totalorder %s222, 1
      %s224 = scalar_select %p223, %s222, 1
      %s225 = smul.addr %s224, 8
      %s226 = smul.addr %s225, 4
      %s227 = scalar_lea.vmem %s3, %s226
      %s228 = sadd.s32 %s20, %s21
      %p229 = scmp.lt.s32.totalorder %s20, 1
      %s230 = scalar_select %p229, %s20, 1
      %s231 = smul.addr %s230, 2
      %s232 = scalar_lea.vmem %s4, %s231
      %v234 = vld [vmem:[%s1] sm:$0x3]
      %v235 = vld [vmem:[%s220] sm:$0xf]
      %v236 = vld [vmem:[%s220 + $0x4] sm:$0xf]
      %v237 = vld [vmem:[%s220 + $0x8] sm:$0xf]
      %v238 = vld [vmem:[%s220 + $0xc] sm:$0xf]
      %v239 = vld [vmem:[%s220 + $0x10] sm:$0xf]
      %v240 = vld [vmem:[%s220 + $0x14] sm:$0xf]
      %v241 = vld [vmem:[%s220 + $0x18] sm:$0xf]
      %v242 = vld [vmem:[%s220 + $0x1c] sm:$0xf]
      %v243 = vunpack.c.l.bf16 %v235
      %v244 = vunpack.c.l.bf16 %v236
      %v245 = vunpack.c.l.bf16 %v237
      %v246 = vunpack.c.l.bf16 %v238
      %v247 = vunpack.c.l.bf16 %v239
      %v248 = vunpack.c.l.bf16 %v240
      %v249 = vunpack.c.l.bf16 %v241
      %v250 = vunpack.c.l.bf16 %v242
      %v251 = vperm.slane %v234, 0
      %v252 = vmul.f32 %v243, %v251
      %v253 = vmul.f32 %v244, %v251
      %v254 = vmul.f32 %v245, %v251
      %v255 = vmul.f32 %v246, %v251
      %v256 = vmul.f32 %v247, %v251
      %v257 = vmul.f32 %v248, %v251
      %v258 = vmul.f32 %v249, %v251
      %v259 = vmul.f32 %v250, %v251
      %v260 = vperm.slane %v234, 1
      %v261 = vadd.f32 %v252, %v260
      %v262 = vadd.f32 %v253, %v260
      %v263 = vadd.f32 %v254, %v260
      %v264 = vadd.f32 %v255, %v260
      %v265 = vadd.f32 %v256, %v260
      %v266 = vadd.f32 %v257, %v260
      %v267 = vadd.f32 %v258, %v260
      %v268 = vadd.f32 %v259, %v260
      %v269 = vmax.f32 %v261, 0.0
      %v270 = vmax.f32 %v262, 0.0
      %v271 = vmax.f32 %v263, 0.0
      %v272 = vmax.f32 %v264, 0.0
      %v273 = vmax.f32 %v265, 0.0
      %v274 = vmax.f32 %v266, 0.0
      %v275 = vmax.f32 %v267, 0.0
      %v276 = vmax.f32 %v268, 0.0
      %277 = vst [vmem:[#allocation2] sm:$0xf] 0
      %278 = vst [vmem:[#allocation2 + $0x4] sm:$0x1] 0
      %279 = vst [vmem:[#allocation2 + $0x8] sm:$0xf] 0
      %280 = vst [vmem:[#allocation2 + $0xc] sm:$0x1] 0
      %281 = vst [vmem:[#allocation2 + $0x10] sm:$0xf] 0
      %282 = vst [vmem:[#allocation2 + $0x14] sm:$0x1] 0
      %283 = vst [vmem:[#allocation2 + $0x18] sm:$0xf] 0
      %284 = vst [vmem:[#allocation2 + $0x1c] sm:$0x1] 0
      %285 = vst [vmem:[#allocation2 + $0x20] sm:$0xf] 0
      %286 = vst [vmem:[#allocation2 + $0x24] sm:$0x1] 0
      %287 = vst [vmem:[#allocation2 + $0x28] sm:$0xf] 0
      %288 = vst [vmem:[#allocation2 + $0x2c] sm:$0x1] 0
      %289 = vst [vmem:[#allocation2 + $0x30] sm:$0xf] 0
      %290 = vst [vmem:[#allocation2 + $0x34] sm:$0x1] 0
      %291 = vst [vmem:[#allocation2 + $0x38] sm:$0xf] 0
      %292 = vst [vmem:[#allocation2 + $0x3c] sm:$0x1] 0
      %293 = vst [vmem:[#allocation2 + $0x40] sm:$0xf] 0
      %294 = vst [vmem:[#allocation2 + $0x44] sm:$0x1] 0
      %295 = vst [vmem:[#allocation2 + $0x48] sm:$0xf] 0
      %296 = vst [vmem:[#allocation2 + $0x4c] sm:$0x1] 0
      %v297 = vpack.c.bf16 %v269, %v269
      %v298 = vpack.c.bf16 %v270, %v270
      %v299 = vpack.c.bf16 %v271, %v271
      %v300 = vpack.c.bf16 %v272, %v272
      %v301 = vpack.c.bf16 %v273, %v273
      %v302 = vpack.c.bf16 %v274, %v274
      %v303 = vpack.c.bf16 %v275, %v275
      %v304 = vpack.c.bf16 %v276, %v276
      %v306 = vshrl.u32 %v297, 16
      %v308 = vrot.slane %v306, 7
      %v309 = vshll.u32 %v297, 16
      %v311 = vor.u32 %v308, %v309
      %v312 = vrot.slane %v308, 4
      %v314 = vshrl.u32 %v298, 16
      %v316 = vrot.slane %v314, 7
      %v317 = vshll.u32 %v298, 16
      %v319 = vor.u32 %v316, %v317
      %v320 = vrot.slane %v316, 4
      %v322 = vshrl.u32 %v299, 16
      %v324 = vrot.slane %v322, 7
      %v325 = vshll.u32 %v299, 16
      %v327 = vor.u32 %v324, %v325
      %v328 = vrot.slane %v324, 4
      %v330 = vshrl.u32 %v300, 16
      %v332 = vrot.slane %v330, 7
      %v333 = vshll.u32 %v300, 16
      %v335 = vor.u32 %v332, %v333
      %v336 = vrot.slane %v332, 4
      %v338 = vshrl.u32 %v301, 16
      %v340 = vrot.slane %v338, 7
      %v341 = vshll.u32 %v301, 16
      %v343 = vor.u32 %v340, %v341
      %v344 = vrot.slane %v340, 4
      %v346 = vshrl.u32 %v302, 16
      %v348 = vrot.slane %v346, 7
      %v349 = vshll.u32 %v302, 16
      %v351 = vor.u32 %v348, %v349
      %v352 = vrot.slane %v348, 4
      %v354 = vshrl.u32 %v303, 16
      %v356 = vrot.slane %v354, 7
      %v357 = vshll.u32 %v303, 16
      %v359 = vor.u32 %v356, %v357
      %v360 = vrot.slane %v356, 4
      %v362 = vshrl.u32 %v304, 16
      %v364 = vrot.slane %v362, 7
      %v365 = vshll.u32 %v304, 16
      %v367 = vor.u32 %v364, %v365
      %v368 = vrot.slane %v364, 4
      %s385 = scalar_lea.vmem [#allocation2], 8
      %vm386 = vcmask 1043456
      %vm387 = vsmask.f32 7938
      %vm388 = vmand %vm386, %vm387
      %v389 = vld [vmem:[%s385] sm:$0xf]
      %v390 = vsel %vm388, %v311, %v389
      %391 = vst [vmem:[%s385] sm:$0xf] %v390
      %vm392 = vcmask 1040384
      %vm393 = vsmask.f32 256
      %vm394 = vmand %vm392, %vm393
      %v395 = vld [vmem:[%s385 + $0x4] sm:$0x1]
      %v396 = vsel %vm394, %v312, %v395
      %397 = vst [vmem:[%s385 + $0x4] sm:$0x1] %v396
      %v398 = vld [vmem:[%s385 + $0x8] sm:$0xf]
      %v399 = vsel %vm388, %v319, %v398
      %400 = vst [vmem:[%s385 + $0x8] sm:$0xf] %v399
      %v401 = vld [vmem:[%s385 + $0xc] sm:$0x1]
      %v402 = vsel %vm394, %v320, %v401
      %403 = vst [vmem:[%s385 + $0xc] sm:$0x1] %v402
      %v404 = vld [vmem:[%s385 + $0x10] sm:$0xf]
      %v405 = vsel %vm388, %v327, %v404
      %406 = vst [vmem:[%s385 + $0x10] sm:$0xf] %v405
      %v407 = vld [vmem:[%s385 + $0x14] sm:$0x1]
      %v408 = vsel %vm394, %v328, %v407
      %409 = vst [vmem:[%s385 + $0x14] sm:$0x1] %v408
      %v410 = vld [vmem:[%s385 + $0x18] sm:$0xf]
      %v411 = vsel %vm388, %v335, %v410
      %412 = vst [vmem:[%s385 + $0x18] sm:$0xf] %v411
      %v413 = vld [vmem:[%s385 + $0x1c] sm:$0x1]
      %v414 = vsel %vm394, %v336, %v413
      %415 = vst [vmem:[%s385 + $0x1c] sm:$0x1] %v414
      %v416 = vld [vmem:[%s385 + $0x20] sm:$0xf]
      %v417 = vsel %vm388, %v343, %v416
      %418 = vst [vmem:[%s385 + $0x20] sm:$0xf] %v417
      %v419 = vld [vmem:[%s385 + $0x24] sm:$0x1]
      %v420 = vsel %vm394, %v344, %v419
      %421 = vst [vmem:[%s385 + $0x24] sm:$0x1] %v420
      %v422 = vld [vmem:[%s385 + $0x28] sm:$0xf]
      %v423 = vsel %vm388, %v351, %v422
      %424 = vst [vmem:[%s385 + $0x28] sm:$0xf] %v423
      %v425 = vld [vmem:[%s385 + $0x2c] sm:$0x1]
      %v426 = vsel %vm394, %v352, %v425
      %427 = vst [vmem:[%s385 + $0x2c] sm:$0x1] %v426
      %v428 = vld [vmem:[%s385 + $0x30] sm:$0xf]
      %v429 = vsel %vm388, %v359, %v428
      %430 = vst [vmem:[%s385 + $0x30] sm:$0xf] %v429
      %v431 = vld [vmem:[%s385 + $0x34] sm:$0x1]
      %v432 = vsel %vm394, %v360, %v431
      %433 = vst [vmem:[%s385 + $0x34] sm:$0x1] %v432
      %v434 = vld [vmem:[%s385 + $0x38] sm:$0xf]
      %v435 = vsel %vm388, %v367, %v434
      %436 = vst [vmem:[%s385 + $0x38] sm:$0xf] %v435
      %v437 = vld [vmem:[%s385 + $0x3c] sm:$0x1]
      %v438 = vsel %vm394, %v368, %v437
      %439 = vst [vmem:[%s385 + $0x3c] sm:$0x1] %v438
      %v440 = vld [vmem:[#allocation2] sm:$0xf]
      %v441 = vld [vmem:[#allocation2 + $0x8] sm:$0xf]
      %v442 = vld [vmem:[#allocation2 + $0x10] sm:$0xf]
      %v443 = vld [vmem:[#allocation2 + $0x18] sm:$0xf]
      %v444 = vld [vmem:[#allocation2 + $0x20] sm:$0xf]
      %v445 = vld [vmem:[#allocation2 + $0x28] sm:$0xf]
      %v446 = vld [vmem:[#allocation2 + $0x30] sm:$0xf]
      %v447 = vld [vmem:[#allocation2 + $0x38] sm:$0xf]
      %448 = vst [vmem:[#allocation3] sm:$0xf] %v440
      %449 = vst [vmem:[#allocation3 + $0x24] sm:$0xf] %v441
      %450 = vst [vmem:[#allocation3 + $0x48] sm:$0xf] %v442
      %451 = vst [vmem:[#allocation3 + $0x6c] sm:$0xf] %v443
      %452 = vst [vmem:[#allocation3 + $0x90] sm:$0xf] %v444
      %453 = vst [vmem:[#allocation3 + $0xb4] sm:$0xf] %v445
      %454 = vst [vmem:[#allocation3 + $0xd8] sm:$0xf] %v446
      %455 = vst [vmem:[#allocation3 + $0xfc] sm:$0xf] %v447
      %v456 = vld [vmem:[#allocation2] sm:$0xf]
      %v457 = vld [vmem:[#allocation2 + $0x4] sm:$0x1]
      %v458 = vld [vmem:[#allocation2 + $0x8] sm:$0xf]
      %v459 = vld [vmem:[#allocation2 + $0xc] sm:$0x1]
      %v460 = vld [vmem:[#allocation2 + $0x10] sm:$0xf]
      %v461 = vld [vmem:[#allocation2 + $0x14] sm:$0x1]
      %v462 = vld [vmem:[#allocation2 + $0x18] sm:$0xf]
      %v463 = vld [vmem:[#allocation2 + $0x1c] sm:$0x1]
      %v464 = vld [vmem:[#allocation2 + $0x20] sm:$0xf]
      %v465 = vld [vmem:[#allocation2 + $0x24] sm:$0x1]
      %v466 = vld [vmem:[#allocation2 + $0x28] sm:$0xf]
      %v467 = vld [vmem:[#allocation2 + $0x2c] sm:$0x1]
      %v468 = vld [vmem:[#allocation2 + $0x30] sm:$0xf]
      %v469 = vld [vmem:[#allocation2 + $0x34] sm:$0x1]
      %v470 = vld [vmem:[#allocation2 + $0x38] sm:$0xf]
      %v471 = vld [vmem:[#allocation2 + $0x3c] sm:$0x1]
      %vm472 = vsmask.f32 3328
      %vm473 = vsmask.f32 7440
      %vm474 = vmor %vm472, %vm473
      %v476 = vshrl.u32 %v456, 16
      %v478 = vrot.slane %v476, 4
      %v479 = vshll.u32 %v456, 16
      %v481 = vrot.slane %v479, 5
      %v482 = vor.u32 %v478, %v481
      %v483 = vrot.slane %v482, 4
      %v485 = vshll.u32 %v457, 16
      %v487 = vrot.slane %v485, 5
      %v488 = vsel %vm474, %v483, %v487
      %v490 = vshrl.u32 %v458, 16
      %v492 = vrot.slane %v490, 4
      %v493 = vshll.u32 %v458, 16
      %v495 = vrot.slane %v493, 5
      %v496 = vor.u32 %v492, %v495
      %v497 = vrot.slane %v496, 4
      %v499 = vshll.u32 %v459, 16
      %v501 = vrot.slane %v499, 5
      %v502 = vsel %vm474, %v497, %v501
      %v504 = vshrl.u32 %v460, 16
      %v506 = vrot.slane %v504, 4
      %v507 = vshll.u32 %v460, 16
      %v509 = vrot.slane %v507, 5
      %v510 = vor.u32 %v506, %v509
      %v511 = vrot.slane %v510, 4
      %v513 = vshll.u32 %v461, 16
      %v515 = vrot.slane %v513, 5
      %v516 = vsel %vm474, %v511, %v515
      %v518 = vshrl.u32 %v462, 16
      %v520 = vrot.slane %v518, 4
      %v521 = vshll.u32 %v462, 16
      %v523 = vrot.slane %v521, 5
      %v524 = vor.u32 %v520, %v523
      %v525 = vrot.slane %v524, 4
      %v527 = vshll.u32 %v463, 16
      %v529 = vrot.slane %v527, 5
      %v530 = vsel %vm474, %v525, %v529
      %v532 = vshrl.u32 %v464, 16
      %v534 = vrot.slane %v532, 4
      %v535 = vshll.u32 %v464, 16
      %v537 = vrot.slane %v535, 5
      %v538 = vor.u32 %v534, %v537
      %v539 = vrot.slane %v538, 4
      %v541 = vshll.u32 %v465, 16
      %v543 = vrot.slane %v541, 5
      %v544 = vsel %vm474, %v539, %v543
      %v546 = vshrl.u32 %v466, 16
      %v548 = vrot.slane %v546, 4
      %v549 = vshll.u32 %v466, 16
      %v551 = vrot.slane %v549, 5
      %v552 = vor.u32 %v548, %v551
      %v553 = vrot.slane %v552, 4
      %v555 = vshll.u32 %v467, 16
      %v557 = vrot.slane %v555, 5
      %v558 = vsel %vm474, %v553, %v557
      %v560 = vshrl.u32 %v468, 16
      %v562 = vrot.slane %v560, 4
      %v563 = vshll.u32 %v468, 16
      %v565 = vrot.slane %v563, 5
      %v566 = vor.u32 %v562, %v565
      %v567 = vrot.slane %v566, 4
      %v569 = vshll.u32 %v469, 16
      %v571 = vrot.slane %v569, 5
      %v572 = vsel %vm474, %v567, %v571
      %v574 = vshrl.u32 %v470, 16
      %v576 = vrot.slane %v574, 4
      %v577 = vshll.u32 %v470, 16
      %v579 = vrot.slane %v577, 5
      %v580 = vor.u32 %v576, %v579
      %v581 = vrot.slane %v580, 4
      %v583 = vshll.u32 %v471, 16
      %v585 = vrot.slane %v583, 5
      %v586 = vsel %vm474, %v581, %v585
      %595 = vst [vmem:[#allocation3 + $0x4] sm:$0xf] %v488
      %596 = vst [vmem:[#allocation3 + $0x28] sm:$0xf] %v502
      %597 = vst [vmem:[#allocation3 + $0x4c] sm:$0xf] %v516
      %598 = vst [vmem:[#allocation3 + $0x70] sm:$0xf] %v530
      %599 = vst [vmem:[#allocation3 + $0x94] sm:$0xf] %v544
      %600 = vst [vmem:[#allocation3 + $0xb8] sm:$0xf] %v558
      %601 = vst [vmem:[#allocation3 + $0xdc] sm:$0xf] %v572
      %602 = vst [vmem:[#allocation3 + $0x100] sm:$0xf] %v586
      %v603 = vld [vmem:[#allocation2] sm:$0xe]
      %v604 = vld [vmem:[#allocation2 + $0x4] sm:$0x1]
      %v605 = vld [vmem:[#allocation2 + $0x8] sm:$0xe]
      %v606 = vld [vmem:[#allocation2 + $0xc] sm:$0x1]
      %v607 = vld [vmem:[#allocation2 + $0x10] sm:$0xe]
      %v608 = vld [vmem:[#allocation2 + $0x14] sm:$0x1]
      %v609 = vld [vmem:[#allocation2 + $0x18] sm:$0xe]
      %v610 = vld [vmem:[#allocation2 + $0x1c] sm:$0x1]
      %v611 = vld [vmem:[#allocation2 + $0x20] sm:$0xe]
      %v612 = vld [vmem:[#allocation2 + $0x24] sm:$0x1]
      %v613 = vld [vmem:[#allocation2 + $0x28] sm:$0xe]
      %v614 = vld [vmem:[#allocation2 + $0x2c] sm:$0x1]
      %v615 = vld [vmem:[#allocation2 + $0x30] sm:$0xe]
      %v616 = vld [vmem:[#allocation2 + $0x34] sm:$0x1]
      %v617 = vld [vmem:[#allocation2 + $0x38] sm:$0xe]
      %v618 = vld [vmem:[#allocation2 + $0x3c] sm:$0x1]
      %vm635 = vcmask 1042432
      %vm636 = vcmask 1046532
      %vm637 = vmor %vm635, %vm636
      %v638 = vrot.slane %v603, 5
      %v639 = vrot.slane %v638, 4
      %v640 = vrot.slane %v604, 5
      %v641 = vsel %vm637, %v639, %v640
      %v642 = vrot.slane %v605, 5
      %v643 = vrot.slane %v642, 4
      %v644 = vrot.slane %v606, 5
      %v645 = vsel %vm637, %v643, %v644
      %v646 = vrot.slane %v607, 5
      %v647 = vrot.slane %v646, 4
      %v648 = vrot.slane %v608, 5
      %v649 = vsel %vm637, %v647, %v648
      %v650 = vrot.slane %v609, 5
      %v651 = vrot.slane %v650, 4
      %v652 = vrot.slane %v610, 5
      %v653 = vsel %vm637, %v651, %v652
      %v654 = vrot.slane %v611, 5
      %v655 = vrot.slane %v654, 4
      %v656 = vrot.slane %v612, 5
      %v657 = vsel %vm637, %v655, %v656
      %v658 = vrot.slane %v613, 5
      %v659 = vrot.slane %v658, 4
      %v660 = vrot.slane %v614, 5
      %v661 = vsel %vm637, %v659, %v660
      %v662 = vrot.slane %v615, 5
      %v663 = vrot.slane %v662, 4
      %v664 = vrot.slane %v616, 5
      %v665 = vsel %vm637, %v663, %v664
      %v666 = vrot.slane %v617, 5
      %v667 = vrot.slane %v666, 4
      %v668 = vrot.slane %v618, 5
      %v669 = vsel %vm637, %v667, %v668
      %678 = vst [vmem:[#allocation3 + $0x8] sm:$0xf] %v641
      %679 = vst [vmem:[#allocation3 + $0x2c] sm:$0xf] %v645
      %680 = vst [vmem:[#allocation3 + $0x50] sm:$0xf] %v649
      %681 = vst [vmem:[#allocation3 + $0x74] sm:$0xf] %v653
      %682 = vst [vmem:[#allocation3 + $0x98] sm:$0xf] %v657
      %683 = vst [vmem:[#allocation3 + $0xbc] sm:$0xf] %v661
      %684 = vst [vmem:[#allocation3 + $0xe0] sm:$0xf] %v665
      %685 = vst [vmem:[#allocation3 + $0x104] sm:$0xf] %v669
      %v686 = vld [vmem:[%s385] sm:$0xf]
      %v687 = vld [vmem:[%s385 + $0x8] sm:$0xf]
      %v688 = vld [vmem:[%s385 + $0x10] sm:$0xf]
      %v689 = vld [vmem:[%s385 + $0x18] sm:$0xf]
      %v690 = vld [vmem:[%s385 + $0x20] sm:$0xf]
      %v691 = vld [vmem:[%s385 + $0x28] sm:$0xf]
      %v692 = vld [vmem:[%s385 + $0x30] sm:$0xf]
      %v693 = vld [vmem:[%s385 + $0x38] sm:$0xf]
      %694 = vst [vmem:[#allocation3 + $0xc] sm:$0xf] %v686
      %695 = vst [vmem:[#allocation3 + $0x30] sm:$0xf] %v687
      %696 = vst [vmem:[#allocation3 + $0x54] sm:$0xf] %v688
      %697 = vst [vmem:[#allocation3 + $0x78] sm:$0xf] %v689
      %698 = vst [vmem:[#allocation3 + $0x9c] sm:$0xf] %v690
      %699 = vst [vmem:[#allocation3 + $0xc0] sm:$0xf] %v691
      %700 = vst [vmem:[#allocation3 + $0xe4] sm:$0xf] %v692
      %701 = vst [vmem:[#allocation3 + $0x108] sm:$0xf] %v693
      %v702 = vld [vmem:[%s385] sm:$0xf]
      %v703 = vld [vmem:[%s385 + $0x4] sm:$0x1]
      %v704 = vld [vmem:[%s385 + $0x8] sm:$0xf]
      %v705 = vld [vmem:[%s385 + $0xc] sm:$0x1]
      %v706 = vld [vmem:[%s385 + $0x10] sm:$0xf]
      %v707 = vld [vmem:[%s385 + $0x14] sm:$0x1]
      %v708 = vld [vmem:[%s385 + $0x18] sm:$0xf]
      %v709 = vld [vmem:[%s385 + $0x1c] sm:$0x1]
      %v710 = vld [vmem:[%s385 + $0x20] sm:$0xf]
      %v711 = vld [vmem:[%s385 + $0x24] sm:$0x1]
      %v712 = vld [vmem:[%s385 + $0x28] sm:$0xf]
      %v713 = vld [vmem:[%s385 + $0x2c] sm:$0x1]
      %v714 = vld [vmem:[%s385 + $0x30] sm:$0xf]
      %v715 = vld [vmem:[%s385 + $0x34] sm:$0x1]
      %v716 = vld [vmem:[%s385 + $0x38] sm:$0xf]
      %v717 = vld [vmem:[%s385 + $0x3c] sm:$0x1]
      %v719 = vshrl.u32 %v702, 16
      %v721 = vrot.slane %v719, 4
      %v722 = vshll.u32 %v702, 16
      %v724 = vrot.slane %v722, 5
      %v725 = vor.u32 %v721, %v724
      %v726 = vrot.slane %v725, 4
      %v728 = vshll.u32 %v703, 16
      %v730 = vrot.slane %v728, 5
      %v731 = vsel %vm474, %v726, %v730
      %v733 = vshrl.u32 %v704, 16
      %v735 = vrot.slane %v733, 4
      %v736 = vshll.u32 %v704, 16
      %v738 = vrot.slane %v736, 5
      %v739 = vor.u32 %v735, %v738
      %v740 = vrot.slane %v739, 4
      %v742 = vshll.u32 %v705, 16
      %v744 = vrot.slane %v742, 5
      %v745 = vsel %vm474, %v740, %v744
      %v747 = vshrl.u32 %v706, 16
      %v749 = vrot.slane %v747, 4
      %v750 = vshll.u32 %v706, 16
      %v752 = vrot.slane %v750, 5
      %v753 = vor.u32 %v749, %v752
      %v754 = vrot.slane %v753, 4
      %v756 = vshll.u32 %v707, 16
      %v758 = vrot.slane %v756, 5
      %v759 = vsel %vm474, %v754, %v758
      %v761 = vshrl.u32 %v708, 16
      %v763 = vrot.slane %v761, 4
      %v764 = vshll.u32 %v708, 16
      %v766 = vrot.slane %v764, 5
      %v767 = vor.u32 %v763, %v766
      %v768 = vrot.slane %v767, 4
      %v770 = vshll.u32 %v709, 16
      %v772 = vrot.slane %v770, 5
      %v773 = vsel %vm474, %v768, %v772
      %v775 = vshrl.u32 %v710, 16
      %v777 = vrot.slane %v775, 4
      %v778 = vshll.u32 %v710, 16
      %v780 = vrot.slane %v778, 5
      %v781 = vor.u32 %v777, %v780
      %v782 = vrot.slane %v781, 4
      %v784 = vshll.u32 %v711, 16
      %v786 = vrot.slane %v784, 5
      %v787 = vsel %vm474, %v782, %v786
      %v789 = vshrl.u32 %v712, 16
      %v791 = vrot.slane %v789, 4
      %v792 = vshll.u32 %v712, 16
      %v794 = vrot.slane %v792, 5
      %v795 = vor.u32 %v791, %v794
      %v796 = vrot.slane %v795, 4
      %v798 = vshll.u32 %v713, 16
      %v800 = vrot.slane %v798, 5
      %v801 = vsel %vm474, %v796, %v800
      %v803 = vshrl.u32 %v714, 16
      %v805 = vrot.slane %v803, 4
      %v806 = vshll.u32 %v714, 16
      %v808 = vrot.slane %v806, 5
      %v809 = vor.u32 %v805, %v808
      %v810 = vrot.slane %v809, 4
      %v812 = vshll.u32 %v715, 16
      %v814 = vrot.slane %v812, 5
      %v815 = vsel %vm474, %v810, %v814
      %v817 = vshrl.u32 %v716, 16
      %v819 = vrot.slane %v817, 4
      %v820 = vshll.u32 %v716, 16
      %v822 = vrot.slane %v820, 5
      %v823 = vor.u32 %v819, %v822
      %v824 = vrot.slane %v823, 4
      %v826 = vshll.u32 %v717, 16
      %v828 = vrot.slane %v826, 5
      %v829 = vsel %vm474, %v824, %v828
      %838 = vst [vmem:[#allocation3 + $0x10] sm:$0xf] %v731
      %839 = vst [vmem:[#allocation3 + $0x34] sm:$0xf] %v745
      %840 = vst [vmem:[#allocation3 + $0x58] sm:$0xf] %v759
      %841 = vst [vmem:[#allocation3 + $0x7c] sm:$0xf] %v773
      %842 = vst [vmem:[#allocation3 + $0xa0] sm:$0xf] %v787
      %843 = vst [vmem:[#allocation3 + $0xc4] sm:$0xf] %v801
      %844 = vst [vmem:[#allocation3 + $0xe8] sm:$0xf] %v815
      %845 = vst [vmem:[#allocation3 + $0x10c] sm:$0xf] %v829
      %v846 = vld [vmem:[%s385] sm:$0xe]
      %v847 = vld [vmem:[%s385 + $0x4] sm:$0x1]
      %v848 = vld [vmem:[%s385 + $0x8] sm:$0xe]
      %v849 = vld [vmem:[%s385 + $0xc] sm:$0x1]
      %v850 = vld [vmem:[%s385 + $0x10] sm:$0xe]
      %v851 = vld [vmem:[%s385 + $0x14] sm:$0x1]
      %v852 = vld [vmem:[%s385 + $0x18] sm:$0xe]
      %v853 = vld [vmem:[%s385 + $0x1c] sm:$0x1]
      %v854 = vld [vmem:[%s385 + $0x20] sm:$0xe]
      %v855 = vld [vmem:[%s385 + $0x24] sm:$0x1]
      %v856 = vld [vmem:[%s385 + $0x28] sm:$0xe]
      %v857 = vld [vmem:[%s385 + $0x2c] sm:$0x1]
      %v858 = vld [vmem:[%s385 + $0x30] sm:$0xe]
      %v859 = vld [vmem:[%s385 + $0x34] sm:$0x1]
      %v860 = vld [vmem:[%s385 + $0x38] sm:$0xe]
      %v861 = vld [vmem:[%s385 + $0x3c] sm:$0x1]
      %v878 = vrot.slane %v846, 5
      %v879 = vrot.slane %v878, 4
      %v880 = vrot.slane %v847, 5
      %v881 = vsel %vm637, %v879, %v880
      %v882 = vrot.slane %v848, 5
      %v883 = vrot.slane %v882, 4
      %v884 = vrot.slane %v849, 5
      %v885 = vsel %vm637, %v883, %v884
      %v886 = vrot.slane %v850, 5
      %v887 = vrot.slane %v886, 4
      %v888 = vrot.slane %v851, 5
      %v889 = vsel %vm637, %v887, %v888
      %v890 = vrot.slane %v852, 5
      %v891 = vrot.slane %v890, 4
      %v892 = vrot.slane %v853, 5
      %v893 = vsel %vm637, %v891, %v892
      %v894 = vrot.slane %v854, 5
      %v895 = vrot.slane %v894, 4
      %v896 = vrot.slane %v855, 5
      %v897 = vsel %vm637, %v895, %v896
      %v898 = vrot.slane %v856, 5
      %v899 = vrot.slane %v898, 4
      %v900 = vrot.slane %v857, 5
      %v901 = vsel %vm637, %v899, %v900
      %v902 = vrot.slane %v858, 5
      %v903 = vrot.slane %v902, 4
      %v904 = vrot.slane %v859, 5
      %v905 = vsel %vm637, %v903, %v904
      %v906 = vrot.slane %v860, 5
      %v907 = vrot.slane %v906, 4
      %v908 = vrot.slane %v861, 5
      %v909 = vsel %vm637, %v907, %v908
      %918 = vst [vmem:[#allocation3 + $0x14] sm:$0xf] %v881
      %919 = vst [vmem:[#allocation3 + $0x38] sm:$0xf] %v885
      %920 = vst [vmem:[#allocation3 + $0x5c] sm:$0xf] %v889
      %921 = vst [vmem:[#allocation3 + $0x80] sm:$0xf] %v893
      %922 = vst [vmem:[#allocation3 + $0xa4] sm:$0xf] %v897
      %923 = vst [vmem:[#allocation3 + $0xc8] sm:$0xf] %v901
      %924 = vst [vmem:[#allocation3 + $0xec] sm:$0xf] %v905
      %925 = vst [vmem:[#allocation3 + $0x110] sm:$0xf] %v909
      %s926 = scalar_lea.vmem [#allocation2], 16
      %v927 = vld [vmem:[%s926] sm:$0xf]
      %v928 = vld [vmem:[%s926 + $0x8] sm:$0xf]
      %v929 = vld [vmem:[%s926 + $0x10] sm:$0xf]
      %v930 = vld [vmem:[%s926 + $0x18] sm:$0xf]
      %v931 = vld [vmem:[%s926 + $0x20] sm:$0xf]
      %v932 = vld [vmem:[%s926 + $0x28] sm:$0xf]
      %v933 = vld [vmem:[%s926 + $0x30] sm:$0xf]
      %v934 = vld [vmem:[%s926 + $0x38] sm:$0xf]
      %935 = vst [vmem:[#allocation3 + $0x18] sm:$0xf] %v927
      %936 = vst [vmem:[#allocation3 + $0x3c] sm:$0xf] %v928
      %937 = vst [vmem:[#allocation3 + $0x60] sm:$0xf] %v929
      %938 = vst [vmem:[#allocation3 + $0x84] sm:$0xf] %v930
      %939 = vst [vmem:[#allocation3 + $0xa8] sm:$0xf] %v931
      %940 = vst [vmem:[#allocation3 + $0xcc] sm:$0xf] %v932
      %941 = vst [vmem:[#allocation3 + $0xf0] sm:$0xf] %v933
      %942 = vst [vmem:[#allocation3 + $0x114] sm:$0xf] %v934
      %v943 = vld [vmem:[%s926] sm:$0xf]
      %v944 = vld [vmem:[%s926 + $0x4] sm:$0x1]
      %v945 = vld [vmem:[%s926 + $0x8] sm:$0xf]
      %v946 = vld [vmem:[%s926 + $0xc] sm:$0x1]
      %v947 = vld [vmem:[%s926 + $0x10] sm:$0xf]
      %v948 = vld [vmem:[%s926 + $0x14] sm:$0x1]
      %v949 = vld [vmem:[%s926 + $0x18] sm:$0xf]
      %v950 = vld [vmem:[%s926 + $0x1c] sm:$0x1]
      %v951 = vld [vmem:[%s926 + $0x20] sm:$0xf]
      %v952 = vld [vmem:[%s926 + $0x24] sm:$0x1]
      %v953 = vld [vmem:[%s926 + $0x28] sm:$0xf]
      %v954 = vld [vmem:[%s926 + $0x2c] sm:$0x1]
      %v955 = vld [vmem:[%s926 + $0x30] sm:$0xf]
      %v956 = vld [vmem:[%s926 + $0x34] sm:$0x1]
      %v957 = vld [vmem:[%s926 + $0x38] sm:$0xf]
      %v958 = vld [vmem:[%s926 + $0x3c] sm:$0x1]
      %v960 = vshrl.u32 %v943, 16
      %v962 = vrot.slane %v960, 4
      %v963 = vshll.u32 %v943, 16
      %v965 = vrot.slane %v963, 5
      %v966 = vor.u32 %v962, %v965
      %v967 = vrot.slane %v966, 4
      %v969 = vshll.u32 %v944, 16
      %v971 = vrot.slane %v969, 5
      %v972 = vsel %vm474, %v967, %v971
      %v974 = vshrl.u32 %v945, 16
      %v976 = vrot.slane %v974, 4
      %v977 = vshll.u32 %v945, 16
      %v979 = vrot.slane %v977, 5
      %v980 = vor.u32 %v976, %v979
      %v981 = vrot.slane %v980, 4
      %v983 = vshll.u32 %v946, 16
      %v985 = vrot.slane %v983, 5
      %v986 = vsel %vm474, %v981, %v985
      %v988 = vshrl.u32 %v947, 16
      %v990 = vrot.slane %v988, 4
      %v991 = vshll.u32 %v947, 16
      %v993 = vrot.slane %v991, 5
      %v994 = vor.u32 %v990, %v993
      %v995 = vrot.slane %v994, 4
      %v997 = vshll.u32 %v948, 16
      %v999 = vrot.slane %v997, 5
      %v1000 = vsel %vm474, %v995, %v999
      %v1002 = vshrl.u32 %v949, 16
      %v1004 = vrot.slane %v1002, 4
      %v1005 = vshll.u32 %v949, 16
      %v1007 = vrot.slane %v1005, 5
      %v1008 = vor.u32 %v1004, %v1007
      %v1009 = vrot.slane %v1008, 4
      %v1011 = vshll.u32 %v950, 16
      %v1013 = vrot.slane %v1011, 5
      %v1014 = vsel %vm474, %v1009, %v1013
      %v1016 = vshrl.u32 %v951, 16
      %v1018 = vrot.slane %v1016, 4
      %v1019 = vshll.u32 %v951, 16
      %v1021 = vrot.slane %v1019, 5
      %v1022 = vor.u32 %v1018, %v1021
      %v1023 = vrot.slane %v1022, 4
      %v1025 = vshll.u32 %v952, 16
      %v1027 = vrot.slane %v1025, 5
      %v1028 = vsel %vm474, %v1023, %v1027
      %v1030 = vshrl.u32 %v953, 16
      %v1032 = vrot.slane %v1030, 4
      %v1033 = vshll.u32 %v953, 16
      %v1035 = vrot.slane %v1033, 5
      %v1036 = vor.u32 %v1032, %v1035
      %v1037 = vrot.slane %v1036, 4
      %v1039 = vshll.u32 %v954, 16
      %v1041 = vrot.slane %v1039, 5
      %v1042 = vsel %vm474, %v1037, %v1041
      %v1044 = vshrl.u32 %v955, 16
      %v1046 = vrot.slane %v1044, 4
      %v1047 = vshll.u32 %v955, 16
      %v1049 = vrot.slane %v1047, 5
      %v1050 = vor.u32 %v1046, %v1049
      %v1051 = vrot.slane %v1050, 4
      %v1053 = vshll.u32 %v956, 16
      %v1055 = vrot.slane %v1053, 5
      %v1056 = vsel %vm474, %v1051, %v1055
      %v1058 = vshrl.u32 %v957, 16
      %v1060 = vrot.slane %v1058, 4
      %v1061 = vshll.u32 %v957, 16
      %v1063 = vrot.slane %v1061, 5
      %v1064 = vor.u32 %v1060, %v1063
      %v1065 = vrot.slane %v1064, 4
      %v1067 = vshll.u32 %v958, 16
      %v1069 = vrot.slane %v1067, 5
      %v1070 = vsel %vm474, %v1065, %v1069
      %1079 = vst [vmem:[#allocation3 + $0x1c] sm:$0xf] %v972
      %1080 = vst [vmem:[#allocation3 + $0x40] sm:$0xf] %v986
      %1081 = vst [vmem:[#allocation3 + $0x64] sm:$0xf] %v1000
      %1082 = vst [vmem:[#allocation3 + $0x88] sm:$0xf] %v1014
      %1083 = vst [vmem:[#allocation3 + $0xac] sm:$0xf] %v1028
      %1084 = vst [vmem:[#allocation3 + $0xd0] sm:$0xf] %v1042
      %1085 = vst [vmem:[#allocation3 + $0xf4] sm:$0xf] %v1056
      %1086 = vst [vmem:[#allocation3 + $0x118] sm:$0xf] %v1070
      %v1087 = vld [vmem:[%s926] sm:$0xe]
      %v1088 = vld [vmem:[%s926 + $0x4] sm:$0x1]
      %v1089 = vld [vmem:[%s926 + $0x8] sm:$0xe]
      %v1090 = vld [vmem:[%s926 + $0xc] sm:$0x1]
      %v1091 = vld [vmem:[%s926 + $0x10] sm:$0xe]
      %v1092 = vld [vmem:[%s926 + $0x14] sm:$0x1]
      %v1093 = vld [vmem:[%s926 + $0x18] sm:$0xe]
      %v1094 = vld [vmem:[%s926 + $0x1c] sm:$0x1]
      %v1095 = vld [vmem:[%s926 + $0x20] sm:$0xe]
      %v1096 = vld [vmem:[%s926 + $0x24] sm:$0x1]
      %v1097 = vld [vmem:[%s926 + $0x28] sm:$0xe]
      %v1098 = vld [vmem:[%s926 + $0x2c] sm:$0x1]
      %v1099 = vld [vmem:[%s926 + $0x30] sm:$0xe]
      %v1100 = vld [vmem:[%s926 + $0x34] sm:$0x1]
      %v1101 = vld [vmem:[%s926 + $0x38] sm:$0xe]
      %v1102 = vld [vmem:[%s926 + $0x3c] sm:$0x1]
      %v1119 = vrot.slane %v1087, 5
      %v1120 = vrot.slane %v1119, 4
      %v1121 = vrot.slane %v1088, 5
      %v1122 = vsel %vm637, %v1120, %v1121
      %v1123 = vrot.slane %v1089, 5
      %v1124 = vrot.slane %v1123, 4
      %v1125 = vrot.slane %v1090, 5
      %v1126 = vsel %vm637, %v1124, %v1125
      %v1127 = vrot.slane %v1091, 5
      %v1128 = vrot.slane %v1127, 4
      %v1129 = vrot.slane %v1092, 5
      %v1130 = vsel %vm637, %v1128, %v1129
      %v1131 = vrot.slane %v1093, 5
      %v1132 = vrot.slane %v1131, 4
      %v1133 = vrot.slane %v1094, 5
      %v1134 = vsel %vm637, %v1132, %v1133
      %v1135 = vrot.slane %v1095, 5
      %v1136 = vrot.slane %v1135, 4
      %v1137 = vrot.slane %v1096, 5
      %v1138 = vsel %vm637, %v1136, %v1137
      %v1139 = vrot.slane %v1097, 5
      %v1140 = vrot.slane %v1139, 4
      %v1141 = vrot.slane %v1098, 5
      %v1142 = vsel %vm637, %v1140, %v1141
      %v1143 = vrot.slane %v1099, 5
      %v1144 = vrot.slane %v1143, 4
      %v1145 = vrot.slane %v1100, 5
      %v1146 = vsel %vm637, %v1144, %v1145
      %v1147 = vrot.slane %v1101, 5
      %v1148 = vrot.slane %v1147, 4
      %v1149 = vrot.slane %v1102, 5
      %v1150 = vsel %vm637, %v1148, %v1149
      %1159 = vst [vmem:[#allocation3 + $0x20] sm:$0xf] %v1122
      %1160 = vst [vmem:[#allocation3 + $0x44] sm:$0xf] %v1126
      %1161 = vst [vmem:[#allocation3 + $0x68] sm:$0xf] %v1130
      %1162 = vst [vmem:[#allocation3 + $0x8c] sm:$0xf] %v1134
      %1163 = vst [vmem:[#allocation3 + $0xb0] sm:$0xf] %v1138
      %1164 = vst [vmem:[#allocation3 + $0xd4] sm:$0xf] %v1142
      %1165 = vst [vmem:[#allocation3 + $0xf8] sm:$0xf] %v1146
      %1166 = vst [vmem:[#allocation3 + $0x11c] sm:$0xf] %v1150
      %v1167 = vld [vmem:[#allocation3] sm:$0xff]
      %v1168 = vld [vmem:[#allocation3 + $0x8] sm:$0xff]
      %v1169 = vld [vmem:[#allocation3 + $0x10] sm:$0xff]
      %v1170 = vld [vmem:[#allocation3 + $0x18] sm:$0xff]
      %v1171 = vld [vmem:[#allocation3 + $0x20] sm:$0xf]
      %v1172 = vld [vmem:[#allocation3 + $0x24] sm:$0xff]
      %v1173 = vld [vmem:[#allocation3 + $0x2c] sm:$0xff]
      %v1174 = vld [vmem:[#allocation3 + $0x34] sm:$0xff]
      %v1175 = vld [vmem:[#allocation3 + $0x3c] sm:$0xff]
      %v1176 = vld [vmem:[#allocation3 + $0x44] sm:$0xf]
      %v1177 = vld [vmem:[#allocation3 + $0x48] sm:$0xff]
      %v1178 = vld [vmem:[#allocation3 + $0x50] sm:$0xff]
      %v1179 = vld [vmem:[#allocation3 + $0x58] sm:$0xff]
      %v1180 = vld [vmem:[#allocation3 + $0x60] sm:$0xff]
      %v1181 = vld [vmem:[#allocation3 + $0x68] sm:$0xf]
      %v1182 = vld [vmem:[#allocation3 + $0x6c] sm:$0xff]
      %v1183 = vld [vmem:[#allocation3 + $0x74] sm:$0xff]
      %v1184 = vld [vmem:[#allocation3 + $0x7c] sm:$0xff]
      %v1185 = vld [vmem:[#allocation3 + $0x84] sm:$0xff]
      %v1186 = vld [vmem:[#allocation3 + $0x8c] sm:$0xf]
      %v1187 = vld [vmem:[#allocation3 + $0x90] sm:$0xff]
      %v1188 = vld [vmem:[#allocation3 + $0x98] sm:$0xff]
      %v1189 = vld [vmem:[#allocation3 + $0xa0] sm:$0xff]
      %v1190 = vld [vmem:[#allocation3 + $0xa8] sm:$0xff]
      %v1191 = vld [vmem:[#allocation3 + $0xb0] sm:$0xf]
      %v1192 = vld [vmem:[#allocation3 + $0xb4] sm:$0xff]
      %v1193 = vld [vmem:[#allocation3 + $0xbc] sm:$0xff]
      %v1194 = vld [vmem:[#allocation3 + $0xc4] sm:$0xff]
      %v1195 = vld [vmem:[#allocation3 + $0xcc] sm:$0xff]
      %v1196 = vld [vmem:[#allocation3 + $0xd4] sm:$0xf]
      %v1197 = vld [vmem:[#allocation3 + $0xd8] sm:$0xff]
      %v1198 = vld [vmem:[#allocation3 + $0xe0] sm:$0xff]
      %v1199 = vld [vmem:[#allocation3 + $0xe8] sm:$0xff]
      %v1200 = vld [vmem:[#allocation3 + $0xf0] sm:$0xff]
      %v1201 = vld [vmem:[#allocation3 + $0xf8] sm:$0xf]
      %v1202 = vld [vmem:[#allocation3 + $0xfc] sm:$0xff]
      %v1203 = vld [vmem:[#allocation3 + $0x104] sm:$0xff]
      %v1204 = vld [vmem:[#allocation3 + $0x10c] sm:$0xff]
      %v1205 = vld [vmem:[#allocation3 + $0x114] sm:$0xff]
      %v1206 = vld [vmem:[#allocation3 + $0x11c] sm:$0xf]
      %v1207 = vld [vmem:[%s2] sm:$0xf]
      %v1208 = vld [vmem:[%s2 + $0x4] sm:$0xf]
      %v1209 = vld [vmem:[%s2 + $0x8] sm:$0xf]
      %v1210 = vld [vmem:[%s2 + $0xc] sm:$0xf]
      %v1211 = vld [vmem:[%s2 + $0x10] sm:$0xf]
      %v1212 = vld [vmem:[%s2 + $0x14] sm:$0xf]
      %v1213 = vld [vmem:[%s2 + $0x18] sm:$0xf]
      %v1214 = vld [vmem:[%s2 + $0x1c] sm:$0xf]
      %v1215 = vld [vmem:[%s2 + $0x20] sm:$0xf]
      %v1216 = vld [vmem:[%s2 + $0x24] sm:$0xf]
      %v1217 = vld [vmem:[%s2 + $0x28] sm:$0xf]
      %v1218 = vld [vmem:[%s2 + $0x2c] sm:$0xf]
      %v1219 = vld [vmem:[%s2 + $0x30] sm:$0xf]
      %v1220 = vld [vmem:[%s2 + $0x34] sm:$0xf]
      %v1221 = vld [vmem:[%s2 + $0x38] sm:$0xf]
      %v1222 = vld [vmem:[%s2 + $0x3c] sm:$0xf]
      %v1223 = vld [vmem:[%s2 + $0x40] sm:$0xf]
      %v1224 = vld [vmem:[%s2 + $0x44] sm:$0xf]
      %v1225 = vld [vmem:[%s2 + $0x48] sm:$0xf]
      %v1226 = vld [vmem:[%s2 + $0x4c] sm:$0xf]
      %v1227 = vld [vmem:[%s2 + $0x50] sm:$0xf]
      %v1228 = vld [vmem:[%s2 + $0x54] sm:$0xf]
      %v1229 = vld [vmem:[%s2 + $0x58] sm:$0xf]
      %v1230 = vld [vmem:[%s2 + $0x5c] sm:$0xf]
      %v1231 = vld [vmem:[%s2 + $0x60] sm:$0xf]
      %v1232 = vld [vmem:[%s2 + $0x64] sm:$0xf]
      %v1233 = vld [vmem:[%s2 + $0x68] sm:$0xf]
      %v1234 = vld [vmem:[%s2 + $0x6c] sm:$0xf]
      %v1235 = vld [vmem:[%s2 + $0x70] sm:$0xf]
      %v1236 = vld [vmem:[%s2 + $0x74] sm:$0xf]
      %v1237 = vld [vmem:[%s2 + $0x78] sm:$0xf]
      %v1238 = vld [vmem:[%s2 + $0x7c] sm:$0xf]
      %v1239 = vld [vmem:[%s2 + $0x80] sm:$0xf]
      %v1240 = vld [vmem:[%s2 + $0x84] sm:$0xf]
      %v1241 = vld [vmem:[%s2 + $0x88] sm:$0xf]
      %v1242 = vld [vmem:[%s2 + $0x8c] sm:$0xf]
      %v1243 = vld [vmem:[%s2 + $0x90] sm:$0xf]
      %v1244 = vld [vmem:[%s2 + $0x94] sm:$0xf]
      %v1245 = vld [vmem:[%s2 + $0x98] sm:$0xf]
      %v1246 = vld [vmem:[%s2 + $0x9c] sm:$0xf]
      %v1247 = vld [vmem:[%s2 + $0xa0] sm:$0xf]
      %v1248 = vld [vmem:[%s2 + $0xa4] sm:$0xf]
      %v1249 = vld [vmem:[%s2 + $0xa8] sm:$0xf]
      %v1250 = vld [vmem:[%s2 + $0xac] sm:$0xf]
      %v1251 = vld [vmem:[%s2 + $0xb0] sm:$0xf]
      %v1252 = vld [vmem:[%s2 + $0xb4] sm:$0xf]
      %v1253 = vld [vmem:[%s2 + $0xb8] sm:$0xf]
      %v1254 = vld [vmem:[%s2 + $0xbc] sm:$0xf]
      %v1255 = vld [vmem:[%s2 + $0xc0] sm:$0xf]
      %v1256 = vld [vmem:[%s2 + $0xc4] sm:$0xf]
      %v1257 = vld [vmem:[%s2 + $0xc8] sm:$0xf]
      %v1258 = vld [vmem:[%s2 + $0xcc] sm:$0xf]
      %v1259 = vld [vmem:[%s2 + $0xd0] sm:$0xf]
      %v1260 = vld [vmem:[%s2 + $0xd4] sm:$0xf]
      %v1261 = vld [vmem:[%s2 + $0xd8] sm:$0xf]
      %v1262 = vld [vmem:[%s2 + $0xdc] sm:$0xf]
      %v1263 = vld [vmem:[%s2 + $0xe0] sm:$0xf]
      %v1264 = vld [vmem:[%s2 + $0xe4] sm:$0xf]
      %v1265 = vld [vmem:[%s2 + $0xe8] sm:$0xf]
      %v1266 = vld [vmem:[%s2 + $0xec] sm:$0xf]
      %v1267 = vld [vmem:[%s2 + $0xf0] sm:$0xf]
      %v1268 = vld [vmem:[%s2 + $0xf4] sm:$0xf]
      %v1269 = vld [vmem:[%s2 + $0xf8] sm:$0xf]
      %v1270 = vld [vmem:[%s2 + $0xfc] sm:$0xf]
      %v1271 = vld [vmem:[%s2 + $0x100] sm:$0xf]
      %v1272 = vld [vmem:[%s2 + $0x104] sm:$0xf]
      %v1273 = vld [vmem:[%s2 + $0x108] sm:$0xf]
      %v1274 = vld [vmem:[%s2 + $0x10c] sm:$0xf]
      %v1275 = vld [vmem:[%s2 + $0x110] sm:$0xf]
      %v1276 = vld [vmem:[%s2 + $0x114] sm:$0xf]
      %v1277 = vld [vmem:[%s2 + $0x118] sm:$0xf]
      %v1278 = vld [vmem:[%s2 + $0x11c] sm:$0xf]
      %v1279 = vld [vmem:[%s2 + $0x120] sm:$0xf]
      %v1280 = vld [vmem:[%s2 + $0x124] sm:$0xf]
      %v1281 = vld [vmem:[%s2 + $0x128] sm:$0xf]
      %v1282 = vld [vmem:[%s2 + $0x12c] sm:$0xf]
      %v1283 = vld [vmem:[%s2 + $0x130] sm:$0xf]
      %v1284 = vld [vmem:[%s2 + $0x134] sm:$0xf]
      %v1285 = vld [vmem:[%s2 + $0x138] sm:$0xf]
      %v1286 = vld [vmem:[%s2 + $0x13c] sm:$0xf]
      %v1287 = vld [vmem:[%s2 + $0x140] sm:$0xf]
      %v1288 = vld [vmem:[%s2 + $0x144] sm:$0xf]
      %v1289 = vld [vmem:[%s2 + $0x148] sm:$0xf]
      %v1290 = vld [vmem:[%s2 + $0x14c] sm:$0xf]
      %v1291 = vld [vmem:[%s2 + $0x150] sm:$0xf]
      %v1292 = vld [vmem:[%s2 + $0x154] sm:$0xf]
      %v1293 = vld [vmem:[%s2 + $0x158] sm:$0xf]
      %v1294 = vld [vmem:[%s2 + $0x15c] sm:$0xf]
      %v1295 = vld [vmem:[%s2 + $0x160] sm:$0xf]
      %v1296 = vld [vmem:[%s2 + $0x164] sm:$0xf]
      %v1297 = vld [vmem:[%s2 + $0x168] sm:$0xf]
      %v1298 = vld [vmem:[%s2 + $0x16c] sm:$0xf]
      %v1299 = vld [vmem:[%s2 + $0x170] sm:$0xf]
      %v1300 = vld [vmem:[%s2 + $0x174] sm:$0xf]
      %v1301 = vld [vmem:[%s2 + $0x178] sm:$0xf]
      %v1302 = vld [vmem:[%s2 + $0x17c] sm:$0xf]
      %v1303 = vld [vmem:[%s2 + $0x180] sm:$0xf]
      %v1304 = vld [vmem:[%s2 + $0x184] sm:$0xf]
      %v1305 = vld [vmem:[%s2 + $0x188] sm:$0xf]
      %v1306 = vld [vmem:[%s2 + $0x18c] sm:$0xf]
      %v1307 = vld [vmem:[%s2 + $0x190] sm:$0xf]
      %v1308 = vld [vmem:[%s2 + $0x194] sm:$0xf]
      %v1309 = vld [vmem:[%s2 + $0x198] sm:$0xf]
      %v1310 = vld [vmem:[%s2 + $0x19c] sm:$0xf]
      %v1311 = vld [vmem:[%s2 + $0x1a0] sm:$0xf]
      %v1312 = vld [vmem:[%s2 + $0x1a4] sm:$0xf]
      %v1313 = vld [vmem:[%s2 + $0x1a8] sm:$0xf]
      %v1314 = vld [vmem:[%s2 + $0x1ac] sm:$0xf]
      %v1315 = vld [vmem:[%s2 + $0x1b0] sm:$0xf]
      %v1316 = vld [vmem:[%s2 + $0x1b4] sm:$0xf]
      %v1317 = vld [vmem:[%s2 + $0x1b8] sm:$0xf]
      %v1318 = vld [vmem:[%s2 + $0x1bc] sm:$0xf]
      %v1319 = vld [vmem:[%s2 + $0x1c0] sm:$0xf]
      %v1320 = vld [vmem:[%s2 + $0x1c4] sm:$0xf]
      %v1321 = vld [vmem:[%s2 + $0x1c8] sm:$0xf]
      %v1322 = vld [vmem:[%s2 + $0x1cc] sm:$0xf]
      %v1323 = vld [vmem:[%s2 + $0x1d0] sm:$0xf]
      %v1324 = vld [vmem:[%s2 + $0x1d4] sm:$0xf]
      %v1325 = vld [vmem:[%s2 + $0x1d8] sm:$0xf]
      %v1326 = vld [vmem:[%s2 + $0x1dc] sm:$0xf]
      %v1327 = vld [vmem:[%s2 + $0x1e0] sm:$0xf]
      %v1328 = vld [vmem:[%s2 + $0x1e4] sm:$0xf]
      %v1329 = vld [vmem:[%s2 + $0x1e8] sm:$0xf]
      %v1330 = vld [vmem:[%s2 + $0x1ec] sm:$0xf]
      %v1331 = vld [vmem:[%s2 + $0x1f0] sm:$0xf]
      %v1332 = vld [vmem:[%s2 + $0x1f4] sm:$0xf]
      %v1333 = vld [vmem:[%s2 + $0x1f8] sm:$0xf]
      %v1334 = vld [vmem:[%s2 + $0x1fc] sm:$0xf]
      %v1335 = vld [vmem:[%s2 + $0x200] sm:$0xf]
      %v1336 = vld [vmem:[%s2 + $0x204] sm:$0xf]
      %v1337 = vld [vmem:[%s2 + $0x208] sm:$0xf]
      %v1338 = vld [vmem:[%s2 + $0x20c] sm:$0xf]
      %v1339 = vld [vmem:[%s2 + $0x210] sm:$0xf]
      %v1340 = vld [vmem:[%s2 + $0x214] sm:$0xf]
      %v1341 = vld [vmem:[%s2 + $0x218] sm:$0xf]
      %v1342 = vld [vmem:[%s2 + $0x21c] sm:$0xf]
      %v1343 = vld [vmem:[%s2 + $0x220] sm:$0xf]
      %v1344 = vld [vmem:[%s2 + $0x224] sm:$0xf]
      %v1345 = vld [vmem:[%s2 + $0x228] sm:$0xf]
      %v1346 = vld [vmem:[%s2 + $0x22c] sm:$0xf]
      %v1347 = vld [vmem:[%s2 + $0x230] sm:$0xf]
      %v1348 = vld [vmem:[%s2 + $0x234] sm:$0xf]
      %v1349 = vld [vmem:[%s2 + $0x238] sm:$0xf]
      %v1350 = vld [vmem:[%s2 + $0x23c] sm:$0xf]
      %v1391 = vunpack.c.l.b16 %v1167
      %v1392 = vunpack.c.h.b16 %v1167
      %v1393 = vunpack.c.l.b16 %v1168
      %v1394 = vunpack.c.h.b16 %v1168
      %v1395 = vunpack.c.l.b16 %v1169
      %v1396 = vunpack.c.h.b16 %v1169
      %v1397 = vunpack.c.l.b16 %v1170
      %v1398 = vunpack.c.h.b16 %v1170
      %v1399 = vunpack.c.l.b16 %v1171
      %v1400 = vunpack.c.l.b16 %v1172
      %v1401 = vunpack.c.h.b16 %v1172
      %v1402 = vunpack.c.l.b16 %v1173
      %v1403 = vunpack.c.h.b16 %v1173
      %v1404 = vunpack.c.l.b16 %v1174
      %v1405 = vunpack.c.h.b16 %v1174
      %v1406 = vunpack.c.l.b16 %v1175
      %v1407 = vunpack.c.h.b16 %v1175
      %v1408 = vunpack.c.l.b16 %v1176
      %v1409 = vunpack.c.l.b16 %v1177
      %v1410 = vunpack.c.h.b16 %v1177
      %v1411 = vunpack.c.l.b16 %v1178
      %v1412 = vunpack.c.h.b16 %v1178
      %v1413 = vunpack.c.l.b16 %v1179
      %v1414 = vunpack.c.h.b16 %v1179
      %v1415 = vunpack.c.l.b16 %v1180
      %v1416 = vunpack.c.h.b16 %v1180
      %v1417 = vunpack.c.l.b16 %v1181
      %v1418 = vunpack.c.l.b16 %v1182
      %v1419 = vunpack.c.h.b16 %v1182
      %v1420 = vunpack.c.l.b16 %v1183
      %v1421 = vunpack.c.h.b16 %v1183
      %v1422 = vunpack.c.l.b16 %v1184
      %v1423 = vunpack.c.h.b16 %v1184
      %v1424 = vunpack.c.l.b16 %v1185
      %v1425 = vunpack.c.h.b16 %v1185
      %v1426 = vunpack.c.l.b16 %v1186
      %v1427 = vunpack.c.l.b16 %v1187
      %v1428 = vunpack.c.h.b16 %v1187
      %v1429 = vunpack.c.l.b16 %v1188
      %v1430 = vunpack.c.h.b16 %v1188
      %v1431 = vunpack.c.l.b16 %v1189
      %v1432 = vunpack.c.h.b16 %v1189
      %v1433 = vunpack.c.l.b16 %v1190
      %v1434 = vunpack.c.h.b16 %v1190
      %v1435 = vunpack.c.l.b16 %v1191
      %v1436 = vunpack.c.l.b16 %v1192
      %v1437 = vunpack.c.h.b16 %v1192
      %v1438 = vunpack.c.l.b16 %v1193
      %v1439 = vunpack.c.h.b16 %v1193
      %v1440 = vunpack.c.l.b16 %v1194
      %v1441 = vunpack.c.h.b16 %v1194
      %v1442 = vunpack.c.l.b16 %v1195
      %v1443 = vunpack.c.h.b16 %v1195
      %v1444 = vunpack.c.l.b16 %v1196
      %v1445 = vunpack.c.l.b16 %v1197
      %v1446 = vunpack.c.h.b16 %v1197
      %v1447 = vunpack.c.l.b16 %v1198
      %v1448 = vunpack.c.h.b16 %v1198
      %v1449 = vunpack.c.l.b16 %v1199
      %v1450 = vunpack.c.h.b16 %v1199
      %v1451 = vunpack.c.l.b16 %v1200
      %v1452 = vunpack.c.h.b16 %v1200
      %v1453 = vunpack.c.l.b16 %v1201
      %v1454 = vunpack.c.l.b16 %v1202
      %v1455 = vunpack.c.h.b16 %v1202
      %v1456 = vunpack.c.l.b16 %v1203
      %v1457 = vunpack.c.h.b16 %v1203
      %v1458 = vunpack.c.l.b16 %v1204
      %v1459 = vunpack.c.h.b16 %v1204
      %v1460 = vunpack.c.l.b16 %v1205
      %v1461 = vunpack.c.h.b16 %v1205
      %v1462 = vunpack.c.l.b16 %v1206
      %v1463 = vpack.c.b16 %v1400, %v1391
      %v1464 = vpack.c.b16 %v1401, %v1392
      %v1465 = vpack.c.b16 %v1402, %v1393
      %v1466 = vpack.c.b16 %v1403, %v1394
      %v1467 = vpack.c.b16 %v1404, %v1395
      %v1468 = vpack.c.b16 %v1405, %v1396
      %v1469 = vpack.c.b16 %v1406, %v1397
      %v1470 = vpack.c.b16 %v1407, %v1398
      %v1471 = vpack.c.b16 %v1408, %v1399
      %v1472 = vpack.c.b16 %v1418, %v1409
      %v1473 = vpack.c.b16 %v1419, %v1410
      %v1474 = vpack.c.b16 %v1420, %v1411
      %v1475 = vpack.c.b16 %v1421, %v1412
      %v1476 = vpack.c.b16 %v1422, %v1413
      %v1477 = vpack.c.b16 %v1423, %v1414
      %v1478 = vpack.c.b16 %v1424, %v1415
      %v1479 = vpack.c.b16 %v1425, %v1416
      %v1480 = vpack.c.b16 %v1426, %v1417
      %v1481 = vpack.c.b16 %v1436, %v1427
      %v1482 = vpack.c.b16 %v1437, %v1428
      %v1483 = vpack.c.b16 %v1438, %v1429
      %v1484 = vpack.c.b16 %v1439, %v1430
      %v1485 = vpack.c.b16 %v1440, %v1431
      %v1486 = vpack.c.b16 %v1441, %v1432
      %v1487 = vpack.c.b16 %v1442, %v1433
      %v1488 = vpack.c.b16 %v1443, %v1434
      %v1489 = vpack.c.b16 %v1444, %v1435
      %v1490 = vpack.c.b16 %v1454, %v1445
      %v1491 = vpack.c.b16 %v1455, %v1446
      %v1492 = vpack.c.b16 %v1456, %v1447
      %v1493 = vpack.c.b16 %v1457, %v1448
      %v1494 = vpack.c.b16 %v1458, %v1449
      %v1495 = vpack.c.b16 %v1459, %v1450
      %v1496 = vpack.c.b16 %v1460, %v1451
      %v1497 = vpack.c.b16 %v1461, %v1452
      %v1498 = vpack.c.b16 %v1462, %v1453
      %v1679 = vunpack.c.l.b16 %v1207
      %v1680 = vunpack.c.l.b16 %v1208
      %v1681 = vunpack.c.l.b16 %v1209
      %v1682 = vunpack.c.l.b16 %v1210
      %v1683 = vunpack.c.l.b16 %v1211
      %v1684 = vunpack.c.l.b16 %v1212
      %v1685 = vunpack.c.l.b16 %v1213
      %v1686 = vunpack.c.l.b16 %v1214
      %v1687 = vunpack.c.l.b16 %v1215
      %v1688 = vunpack.c.l.b16 %v1216
      %v1689 = vunpack.c.l.b16 %v1217
      %v1690 = vunpack.c.l.b16 %v1218
      %v1691 = vunpack.c.l.b16 %v1219
      %v1692 = vunpack.c.l.b16 %v1220
      %v1693 = vunpack.c.l.b16 %v1221
      %v1694 = vunpack.c.l.b16 %v1222
      %v1695 = vunpack.c.l.b16 %v1223
      %v1696 = vunpack.c.l.b16 %v1224
      %v1697 = vunpack.c.l.b16 %v1225
      %v1698 = vunpack.c.l.b16 %v1226
      %v1699 = vunpack.c.l.b16 %v1227
      %v1700 = vunpack.c.l.b16 %v1228
      %v1701 = vunpack.c.l.b16 %v1229
      %v1702 = vunpack.c.l.b16 %v1230
      %v1703 = vunpack.c.l.b16 %v1231
      %v1704 = vunpack.c.l.b16 %v1232
      %v1705 = vunpack.c.l.b16 %v1233
      %v1706 = vunpack.c.l.b16 %v1234
      %v1707 = vunpack.c.l.b16 %v1235
      %v1708 = vunpack.c.l.b16 %v1236
      %v1709 = vunpack.c.l.b16 %v1237
      %v1710 = vunpack.c.l.b16 %v1238
      %v1711 = vunpack.c.l.b16 %v1239
      %v1712 = vunpack.c.l.b16 %v1240
      %v1713 = vunpack.c.l.b16 %v1241
      %v1714 = vunpack.c.l.b16 %v1242
      %v1715 = vunpack.c.l.b16 %v1243
      %v1716 = vunpack.c.l.b16 %v1244
      %v1717 = vunpack.c.l.b16 %v1245
      %v1718 = vunpack.c.l.b16 %v1246
      %v1719 = vunpack.c.l.b16 %v1247
      %v1720 = vunpack.c.l.b16 %v1248
      %v1721 = vunpack.c.l.b16 %v1249
      %v1722 = vunpack.c.l.b16 %v1250
      %v1723 = vunpack.c.l.b16 %v1251
      %v1724 = vunpack.c.l.b16 %v1252
      %v1725 = vunpack.c.l.b16 %v1253
      %v1726 = vunpack.c.l.b16 %v1254
      %v1727 = vunpack.c.l.b16 %v1255
      %v1728 = vunpack.c.l.b16 %v1256
      %v1729 = vunpack.c.l.b16 %v1257
      %v1730 = vunpack.c.l.b16 %v1258
      %v1731 = vunpack.c.l.b16 %v1259
      %v1732 = vunpack.c.l.b16 %v1260
      %v1733 = vunpack.c.l.b16 %v1261
      %v1734 = vunpack.c.l.b16 %v1262
      %v1735 = vunpack.c.l.b16 %v1263
      %v1736 = vunpack.c.l.b16 %v1264
      %v1737 = vunpack.c.l.b16 %v1265
      %v1738 = vunpack.c.l.b16 %v1266
      %v1739 = vunpack.c.l.b16 %v1267
      %v1740 = vunpack.c.l.b16 %v1268
      %v1741 = vunpack.c.l.b16 %v1269
      %v1742 = vunpack.c.l.b16 %v1270
      %v1743 = vunpack.c.l.b16 %v1271
      %v1744 = vunpack.c.l.b16 %v1272
      %v1745 = vunpack.c.l.b16 %v1273
      %v1746 = vunpack.c.l.b16 %v1274
      %v1747 = vunpack.c.l.b16 %v1275
      %v1748 = vunpack.c.l.b16 %v1276
      %v1749 = vunpack.c.l.b16 %v1277
      %v1750 = vunpack.c.l.b16 %v1278
      %v1751 = vunpack.c.l.b16 %v1279
      %v1752 = vunpack.c.l.b16 %v1280
      %v1753 = vunpack.c.l.b16 %v1281
      %v1754 = vunpack.c.l.b16 %v1282
      %v1755 = vunpack.c.l.b16 %v1283
      %v1756 = vunpack.c.l.b16 %v1284
      %v1757 = vunpack.c.l.b16 %v1285
      %v1758 = vunpack.c.l.b16 %v1286
      %v1759 = vunpack.c.l.b16 %v1287
      %v1760 = vunpack.c.l.b16 %v1288
      %v1761 = vunpack.c.l.b16 %v1289
      %v1762 = vunpack.c.l.b16 %v1290
      %v1763 = vunpack.c.l.b16 %v1291
      %v1764 = vunpack.c.l.b16 %v1292
      %v1765 = vunpack.c.l.b16 %v1293
      %v1766 = vunpack.c.l.b16 %v1294
      %v1767 = vunpack.c.l.b16 %v1295
      %v1768 = vunpack.c.l.b16 %v1296
      %v1769 = vunpack.c.l.b16 %v1297
      %v1770 = vunpack.c.l.b16 %v1298
      %v1771 = vunpack.c.l.b16 %v1299
      %v1772 = vunpack.c.l.b16 %v1300
      %v1773 = vunpack.c.l.b16 %v1301
      %v1774 = vunpack.c.l.b16 %v1302
      %v1775 = vunpack.c.l.b16 %v1303
      %v1776 = vunpack.c.l.b16 %v1304
      %v1777 = vunpack.c.l.b16 %v1305
      %v1778 = vunpack.c.l.b16 %v1306
      %v1779 = vunpack.c.l.b16 %v1307
      %v1780 = vunpack.c.l.b16 %v1308
      %v1781 = vunpack.c.l.b16 %v1309
      %v1782 = vunpack.c.l.b16 %v1310
      %v1783 = vunpack.c.l.b16 %v1311
      %v1784 = vunpack.c.l.b16 %v1312
      %v1785 = vunpack.c.l.b16 %v1313
      %v1786 = vunpack.c.l.b16 %v1314
      %v1787 = vunpack.c.l.b16 %v1315
      %v1788 = vunpack.c.l.b16 %v1316
      %v1789 = vunpack.c.l.b16 %v1317
      %v1790 = vunpack.c.l.b16 %v1318
      %v1791 = vunpack.c.l.b16 %v1319
      %v1792 = vunpack.c.l.b16 %v1320
      %v1793 = vunpack.c.l.b16 %v1321
      %v1794 = vunpack.c.l.b16 %v1322
      %v1795 = vunpack.c.l.b16 %v1323
      %v1796 = vunpack.c.l.b16 %v1324
      %v1797 = vunpack.c.l.b16 %v1325
      %v1798 = vunpack.c.l.b16 %v1326
      %v1799 = vunpack.c.l.b16 %v1327
      %v1800 = vunpack.c.l.b16 %v1328
      %v1801 = vunpack.c.l.b16 %v1329
      %v1802 = vunpack.c.l.b16 %v1330
      %v1803 = vunpack.c.l.b16 %v1331
      %v1804 = vunpack.c.l.b16 %v1332
      %v1805 = vunpack.c.l.b16 %v1333
      %v1806 = vunpack.c.l.b16 %v1334
      %v1807 = vunpack.c.l.b16 %v1335
      %v1808 = vunpack.c.l.b16 %v1336
      %v1809 = vunpack.c.l.b16 %v1337
      %v1810 = vunpack.c.l.b16 %v1338
      %v1811 = vunpack.c.l.b16 %v1339
      %v1812 = vunpack.c.l.b16 %v1340
      %v1813 = vunpack.c.l.b16 %v1341
      %v1814 = vunpack.c.l.b16 %v1342
      %v1815 = vunpack.c.l.b16 %v1343
      %v1816 = vunpack.c.l.b16 %v1344
      %v1817 = vunpack.c.l.b16 %v1345
      %v1818 = vunpack.c.l.b16 %v1346
      %v1819 = vunpack.c.l.b16 %v1347
      %v1820 = vunpack.c.l.b16 %v1348
      %v1821 = vunpack.c.l.b16 %v1349
      %v1822 = vunpack.c.l.b16 %v1350
      %v1823 = vpack.c.b16 %v1680, %v1679
      %v1824 = vpack.c.b16 %v1682, %v1681
      %v1825 = vpack.c.b16 %v1684, %v1683
      %v1826 = vpack.c.b16 %v1686, %v1685
      %v1827 = vpack.c.b16 %v1688, %v1687
      %v1828 = vpack.c.b16 %v1690, %v1689
      %v1829 = vpack.c.b16 %v1692, %v1691
      %v1830 = vpack.c.b16 %v1694, %v1693
      %v1831 = vpack.c.b16 %v1696, %v1695
      %v1832 = vpack.c.b16 %v1698, %v1697
      %v1833 = vpack.c.b16 %v1700, %v1699
      %v1834 = vpack.c.b16 %v1702, %v1701
      %v1835 = vpack.c.b16 %v1704, %v1703
      %v1836 = vpack.c.b16 %v1706, %v1705
      %v1837 = vpack.c.b16 %v1708, %v1707
      %v1838 = vpack.c.b16 %v1710, %v1709
      %v1839 = vpack.c.b16 %v1712, %v1711
      %v1840 = vpack.c.b16 %v1714, %v1713
      %v1841 = vpack.c.b16 %v1716, %v1715
      %v1842 = vpack.c.b16 %v1718, %v1717
      %v1843 = vpack.c.b16 %v1720, %v1719
      %v1844 = vpack.c.b16 %v1722, %v1721
      %v1845 = vpack.c.b16 %v1724, %v1723
      %v1846 = vpack.c.b16 %v1726, %v1725
      %v1847 = vpack.c.b16 %v1728, %v1727
      %v1848 = vpack.c.b16 %v1730, %v1729
      %v1849 = vpack.c.b16 %v1732, %v1731
      %v1850 = vpack.c.b16 %v1734, %v1733
      %v1851 = vpack.c.b16 %v1736, %v1735
      %v1852 = vpack.c.b16 %v1738, %v1737
      %v1853 = vpack.c.b16 %v1740, %v1739
      %v1854 = vpack.c.b16 %v1742, %v1741
      %v1855 = vpack.c.b16 %v1744, %v1743
      %v1856 = vpack.c.b16 %v1746, %v1745
      %v1857 = vpack.c.b16 %v1748, %v1747
      %v1858 = vpack.c.b16 %v1750, %v1749
      %v1859 = vpack.c.b16 %v1752, %v1751
      %v1860 = vpack.c.b16 %v1754, %v1753
      %v1861 = vpack.c.b16 %v1756, %v1755
      %v1862 = vpack.c.b16 %v1758, %v1757
      %v1863 = vpack.c.b16 %v1760, %v1759
      %v1864 = vpack.c.b16 %v1762, %v1761
      %v1865 = vpack.c.b16 %v1764, %v1763
      %v1866 = vpack.c.b16 %v1766, %v1765
      %v1867 = vpack.c.b16 %v1768, %v1767
      %v1868 = vpack.c.b16 %v1770, %v1769
      %v1869 = vpack.c.b16 %v1772, %v1771
      %v1870 = vpack.c.b16 %v1774, %v1773
      %v1871 = vpack.c.b16 %v1776, %v1775
      %v1872 = vpack.c.b16 %v1778, %v1777
      %v1873 = vpack.c.b16 %v1780, %v1779
      %v1874 = vpack.c.b16 %v1782, %v1781
      %v1875 = vpack.c.b16 %v1784, %v1783
      %v1876 = vpack.c.b16 %v1786, %v1785
      %v1877 = vpack.c.b16 %v1788, %v1787
      %v1878 = vpack.c.b16 %v1790, %v1789
      %v1879 = vpack.c.b16 %v1792, %v1791
      %v1880 = vpack.c.b16 %v1794, %v1793
      %v1881 = vpack.c.b16 %v1796, %v1795
      %v1882 = vpack.c.b16 %v1798, %v1797
      %v1883 = vpack.c.b16 %v1800, %v1799
      %v1884 = vpack.c.b16 %v1802, %v1801
      %v1885 = vpack.c.b16 %v1804, %v1803
      %v1886 = vpack.c.b16 %v1806, %v1805
      %v1887 = vpack.c.b16 %v1808, %v1807
      %v1888 = vpack.c.b16 %v1810, %v1809
      %v1889 = vpack.c.b16 %v1812, %v1811
      %v1890 = vpack.c.b16 %v1814, %v1813
      %v1891 = vpack.c.b16 %v1816, %v1815
      %v1892 = vpack.c.b16 %v1818, %v1817
      %v1893 = vpack.c.b16 %v1820, %v1819
      %v1894 = vpack.c.b16 %v1822, %v1821
      %1967 = vmatpush.bf16.msra.mxu0 %v1830
      %1968 = vmatpush.bf16.msra.mxu0 %v1829
      %1969 = vmatpush.bf16.msra.mxu0 %v1828
      %1970 = vmatpush.bf16.msra.mxu0 %v1827
      %1971 = vmatpush.bf16.msra.mxu0 %v1826
      %1972 = vmatpush.bf16.msra.mxu0 %v1825
      %1973 = vmatpush.bf16.msra.mxu0 %v1824
      %1974 = vmatpush.bf16.msra.mxu0 %v1823
      %1975 = vmatmul.bf16.gmra.mxu0 %v1463
      %v1976 = vpop.f32.mrf.mxu0
      %v1977 = vadd.f32 0.0, %v1976
      %v1978 = vpop.f32.mrf.mxu0
      %v1979 = vadd.f32 0.0, %v1978
      %1980 = vmatmul.bf16.gmra.mxu0 %v1472
      %v1981 = vpop.f32.mrf.mxu0
      %v1982 = vadd.f32 0.0, %v1981
      %v1983 = vpop.f32.mrf.mxu0
      %v1984 = vadd.f32 0.0, %v1983
      %1985 = vmatmul.bf16.gmra.mxu0 %v1481
      %v1986 = vpop.f32.mrf.mxu0
      %v1987 = vadd.f32 0.0, %v1986
      %v1988 = vpop.f32.mrf.mxu0
      %v1989 = vadd.f32 0.0, %v1988
      %1990 = vmatmul.bf16.gmra.mxu0 %v1490
      %v1991 = vpop.f32.mrf.mxu0
      %v1992 = vadd.f32 0.0, %v1991
      %v1993 = vpop.f32.mrf.mxu0
      %v1994 = vadd.f32 0.0, %v1993
      %1995 = vdwg.mxu0
      %1996 = vmatpush.bf16.msra.mxu0 %v1838
      %1997 = vmatpush.bf16.msra.mxu0 %v1837
      %1998 = vmatpush.bf16.msra.mxu0 %v1836
      %1999 = vmatpush.bf16.msra.mxu0 %v1835
      %2000 = vmatpush.bf16.msra.mxu0 %v1834
      %2001 = vmatpush.bf16.msra.mxu0 %v1833
      %2002 = vmatpush.bf16.msra.mxu0 %v1832
      %2003 = vmatpush.bf16.msra.mxu0 %v1831
      %2004 = vmatmul.bf16.gmra.mxu0 %v1464
      %v2005 = vpop.f32.mrf.mxu0
      %v2006 = vadd.f32 %v1977, %v2005
      %v2007 = vpop.f32.mrf.mxu0
      %v2008 = vadd.f32 %v1979, %v2007
      %2009 = vmatmul.bf16.gmra.mxu0 %v1473
      %v2010 = vpop.f32.mrf.mxu0
      %v2011 = vadd.f32 %v1982, %v2010
      %v2012 = vpop.f32.mrf.mxu0
      %v2013 = vadd.f32 %v1984, %v2012
      %2014 = vmatmul.bf16.gmra.mxu0 %v1482
      %v2015 = vpop.f32.mrf.mxu0
      %v2016 = vadd.f32 %v1987, %v2015
      %v2017 = vpop.f32.mrf.mxu0
      %v2018 = vadd.f32 %v1989, %v2017
      %2019 = vmatmul.bf16.gmra.mxu0 %v1491
      %v2020 = vpop.f32.mrf.mxu0
      %v2021 = vadd.f32 %v1992, %v2020
      %v2022 = vpop.f32.mrf.mxu0
      %v2023 = vadd.f32 %v1994, %v2022
      %2024 = vdwg.mxu0
      %2025 = vmatpush.bf16.msra.mxu0 %v1846
      %2026 = vmatpush.bf16.msra.mxu0 %v1845
      %2027 = vmatpush.bf16.msra.mxu0 %v1844
      %2028 = vmatpush.bf16.msra.mxu0 %v1843
      %2029 = vmatpush.bf16.msra.mxu0 %v1842
      %2030 = vmatpush.bf16.msra.mxu0 %v1841
      %2031 = vmatpush.bf16.msra.mxu0 %v1840
      %2032 = vmatpush.bf16.msra.mxu0 %v1839
      %2033 = vmatmul.bf16.gmra.mxu0 %v1465
      %v2034 = vpop.f32.mrf.mxu0
      %v2035 = vadd.f32 %v2006, %v2034
      %v2036 = vpop.f32.mrf.mxu0
      %v2037 = vadd.f32 %v2008, %v2036
      %2038 = vmatmul.bf16.gmra.mxu0 %v1474
      %v2039 = vpop.f32.mrf.mxu0
      %v2040 = vadd.f32 %v2011, %v2039
      %v2041 = vpop.f32.mrf.mxu0
      %v2042 = vadd.f32 %v2013, %v2041
      %2043 = vmatmul.bf16.gmra.mxu0 %v1483
      %v2044 = vpop.f32.mrf.mxu0
      %v2045 = vadd.f32 %v2016, %v2044
      %v2046 = vpop.f32.mrf.mxu0
      %v2047 = vadd.f32 %v2018, %v2046
      %2048 = vmatmul.bf16.gmra.mxu0 %v1492
      %v2049 = vpop.f32.mrf.mxu0
      %v2050 = vadd.f32 %v2021, %v2049
      %v2051 = vpop.f32.mrf.mxu0
      %v2052 = vadd.f32 %v2023, %v2051
      %2053 = vdwg.mxu0
      %2054 = vmatpush.bf16.msra.mxu0 %v1854
      %2055 = vmatpush.bf16.msra.mxu0 %v1853
      %2056 = vmatpush.bf16.msra.mxu0 %v1852
      %2057 = vmatpush.bf16.msra.mxu0 %v1851
      %2058 = vmatpush.bf16.msra.mxu0 %v1850
      %2059 = vmatpush.bf16.msra.mxu0 %v1849
      %2060 = vmatpush.bf16.msra.mxu0 %v1848
      %2061 = vmatpush.bf16.msra.mxu0 %v1847
      %2062 = vmatmul.bf16.gmra.mxu0 %v1466
      %v2063 = vpop.f32.mrf.mxu0
      %v2064 = vadd.f32 %v2035, %v2063
      %v2065 = vpop.f32.mrf.mxu0
      %v2066 = vadd.f32 %v2037, %v2065
      %2067 = vmatmul.bf16.gmra.mxu0 %v1475
      %v2068 = vpop.f32.mrf.mxu0
      %v2069 = vadd.f32 %v2040, %v2068
      %v2070 = vpop.f32.mrf.mxu0
      %v2071 = vadd.f32 %v2042, %v2070
      %2072 = vmatmul.bf16.gmra.mxu0 %v1484
      %v2073 = vpop.f32.mrf.mxu0
      %v2074 = vadd.f32 %v2045, %v2073
      %v2075 = vpop.f32.mrf.mxu0
      %v2076 = vadd.f32 %v2047, %v2075
      %2077 = vmatmul.bf16.gmra.mxu0 %v1493
      %v2078 = vpop.f32.mrf.mxu0
      %v2079 = vadd.f32 %v2050, %v2078
      %v2080 = vpop.f32.mrf.mxu0
      %v2081 = vadd.f32 %v2052, %v2080
      %2082 = vdwg.mxu0
      %2083 = vmatpush.bf16.msra.mxu0 %v1862
      %2084 = vmatpush.bf16.msra.mxu0 %v1861
      %2085 = vmatpush.bf16.msra.mxu0 %v1860
      %2086 = vmatpush.bf16.msra.mxu0 %v1859
      %2087 = vmatpush.bf16.msra.mxu0 %v1858
      %2088 = vmatpush.bf16.msra.mxu0 %v1857
      %2089 = vmatpush.bf16.msra.mxu0 %v1856
      %2090 = vmatpush.bf16.msra.mxu0 %v1855
      %2091 = vmatmul.bf16.gmra.mxu0 %v1467
      %v2092 = vpop.f32.mrf.mxu0
      %v2093 = vadd.f32 %v2064, %v2092
      %v2094 = vpop.f32.mrf.mxu0
      %v2095 = vadd.f32 %v2066, %v2094
      %2096 = vmatmul.bf16.gmra.mxu0 %v1476
      %v2097 = vpop.f32.mrf.mxu0
      %v2098 = vadd.f32 %v2069, %v2097
      %v2099 = vpop.f32.mrf.mxu0
      %v2100 = vadd.f32 %v2071, %v2099
      %2101 = vmatmul.bf16.gmra.mxu0 %v1485
      %v2102 = vpop.f32.mrf.mxu0
      %v2103 = vadd.f32 %v2074, %v2102
      %v2104 = vpop.f32.mrf.mxu0
      %v2105 = vadd.f32 %v2076, %v2104
      %2106 = vmatmul.bf16.gmra.mxu0 %v1494
      %v2107 = vpop.f32.mrf.mxu0
      %v2108 = vadd.f32 %v2079, %v2107
      %v2109 = vpop.f32.mrf.mxu0
      %v2110 = vadd.f32 %v2081, %v2109
      %2111 = vdwg.mxu0
      %2112 = vmatpush.bf16.msra.mxu0 %v1870
      %2113 = vmatpush.bf16.msra.mxu0 %v1869
      %2114 = vmatpush.bf16.msra.mxu0 %v1868
      %2115 = vmatpush.bf16.msra.mxu0 %v1867
      %2116 = vmatpush.bf16.msra.mxu0 %v1866
      %2117 = vmatpush.bf16.msra.mxu0 %v1865
      %2118 = vmatpush.bf16.msra.mxu0 %v1864
      %2119 = vmatpush.bf16.msra.mxu0 %v1863
      %2120 = vmatmul.bf16.gmra.mxu0 %v1468
      %v2121 = vpop.f32.mrf.mxu0
      %v2122 = vadd.f32 %v2093, %v2121
      %v2123 = vpop.f32.mrf.mxu0
      %v2124 = vadd.f32 %v2095, %v2123
      %2125 = vmatmul.bf16.gmra.mxu0 %v1477
      %v2126 = vpop.f32.mrf.mxu0
      %v2127 = vadd.f32 %v2098, %v2126
      %v2128 = vpop.f32.mrf.mxu0
      %v2129 = vadd.f32 %v2100, %v2128
      %2130 = vmatmul.bf16.gmra.mxu0 %v1486
      %v2131 = vpop.f32.mrf.mxu0
      %v2132 = vadd.f32 %v2103, %v2131
      %v2133 = vpop.f32.mrf.mxu0
      %v2134 = vadd.f32 %v2105, %v2133
      %2135 = vmatmul.bf16.gmra.mxu0 %v1495
      %v2136 = vpop.f32.mrf.mxu0
      %v2137 = vadd.f32 %v2108, %v2136
      %v2138 = vpop.f32.mrf.mxu0
      %v2139 = vadd.f32 %v2110, %v2138
      %2140 = vdwg.mxu0
      %2141 = vmatpush.bf16.msra.mxu0 %v1878
      %2142 = vmatpush.bf16.msra.mxu0 %v1877
      %2143 = vmatpush.bf16.msra.mxu0 %v1876
      %2144 = vmatpush.bf16.msra.mxu0 %v1875
      %2145 = vmatpush.bf16.msra.mxu0 %v1874
      %2146 = vmatpush.bf16.msra.mxu0 %v1873
      %2147 = vmatpush.bf16.msra.mxu0 %v1872
      %2148 = vmatpush.bf16.msra.mxu0 %v1871
      %2149 = vmatmul.bf16.gmra.mxu0 %v1469
      %v2150 = vpop.f32.mrf.mxu0
      %v2151 = vadd.f32 %v2122, %v2150
      %v2152 = vpop.f32.mrf.mxu0
      %v2153 = vadd.f32 %v2124, %v2152
      %2154 = vmatmul.bf16.gmra.mxu0 %v1478
      %v2155 = vpop.f32.mrf.mxu0
      %v2156 = vadd.f32 %v2127, %v2155
      %v2157 = vpop.f32.mrf.mxu0
      %v2158 = vadd.f32 %v2129, %v2157
      %2159 = vmatmul.bf16.gmra.mxu0 %v1487
      %v2160 = vpop.f32.mrf.mxu0
      %v2161 = vadd.f32 %v2132, %v2160
      %v2162 = vpop.f32.mrf.mxu0
      %v2163 = vadd.f32 %v2134, %v2162
      %2164 = vmatmul.bf16.gmra.mxu0 %v1496
      %v2165 = vpop.f32.mrf.mxu0
      %v2166 = vadd.f32 %v2137, %v2165
      %v2167 = vpop.f32.mrf.mxu0
      %v2168 = vadd.f32 %v2139, %v2167
      %2169 = vdwg.mxu0
      %2170 = vmatpush.bf16.msra.mxu0 %v1886
      %2171 = vmatpush.bf16.msra.mxu0 %v1885
      %2172 = vmatpush.bf16.msra.mxu0 %v1884
      %2173 = vmatpush.bf16.msra.mxu0 %v1883
      %2174 = vmatpush.bf16.msra.mxu0 %v1882
      %2175 = vmatpush.bf16.msra.mxu0 %v1881
      %2176 = vmatpush.bf16.msra.mxu0 %v1880
      %2177 = vmatpush.bf16.msra.mxu0 %v1879
      %2178 = vmatmul.bf16.gmra.mxu0 %v1470
      %v2179 = vpop.f32.mrf.mxu0
      %v2180 = vadd.f32 %v2151, %v2179
      %v2181 = vpop.f32.mrf.mxu0
      %v2182 = vadd.f32 %v2153, %v2181
      %2183 = vmatmul.bf16.gmra.mxu0 %v1479
      %v2184 = vpop.f32.mrf.mxu0
      %v2185 = vadd.f32 %v2156, %v2184
      %v2186 = vpop.f32.mrf.mxu0
      %v2187 = vadd.f32 %v2158, %v2186
      %2188 = vmatmul.bf16.gmra.mxu0 %v1488
      %v2189 = vpop.f32.mrf.mxu0
      %v2190 = vadd.f32 %v2161, %v2189
      %v2191 = vpop.f32.mrf.mxu0
      %v2192 = vadd.f32 %v2163, %v2191
      %2193 = vmatmul.bf16.gmra.mxu0 %v1497
      %v2194 = vpop.f32.mrf.mxu0
      %v2195 = vadd.f32 %v2166, %v2194
      %v2196 = vpop.f32.mrf.mxu0
      %v2197 = vadd.f32 %v2168, %v2196
      %2198 = vdwg.mxu0
      %2199 = vmatpush.bf16.msra.mxu0 %v1894
      %2200 = vmatpush.bf16.msra.mxu0 %v1893
      %2201 = vmatpush.bf16.msra.mxu0 %v1892
      %2202 = vmatpush.bf16.msra.mxu0 %v1891
      %2203 = vmatpush.bf16.msra.mxu0 %v1890
      %2204 = vmatpush.bf16.msra.mxu0 %v1889
      %2205 = vmatpush.bf16.msra.mxu0 %v1888
      %2206 = vmatpush.bf16.msra.mxu0 %v1887
      %2207 = vmatmul.bf16.gmra.mxu0 %v1471
      %v2208 = vpop.f32.mrf.mxu0
      %v2209 = vadd.f32 %v2180, %v2208
      %v2210 = vpop.f32.mrf.mxu0
      %v2211 = vadd.f32 %v2182, %v2210
      %2212 = vmatmul.bf16.gmra.mxu0 %v1480
      %v2213 = vpop.f32.mrf.mxu0
      %v2214 = vadd.f32 %v2185, %v2213
      %v2215 = vpop.f32.mrf.mxu0
      %v2216 = vadd.f32 %v2187, %v2215
      %2217 = vmatmul.bf16.gmra.mxu0 %v1489
      %v2218 = vpop.f32.mrf.mxu0
      %v2219 = vadd.f32 %v2190, %v2218
      %v2220 = vpop.f32.mrf.mxu0
      %v2221 = vadd.f32 %v2192, %v2220
      %2222 = vmatmul.bf16.gmra.mxu0 %v1498
      %v2223 = vpop.f32.mrf.mxu0
      %v2224 = vadd.f32 %v2195, %v2223
      %v2225 = vpop.f32.mrf.mxu0
      %v2226 = vadd.f32 %v2197, %v2225
      %2227 = vdwg.mxu0
      %v2228 = vpack.c.bf16 %v2209, %v2209
      %v2229 = vpack.c.bf16 %v2211, %v2211
      %v2230 = vpack.c.bf16 %v2214, %v2214
      %v2231 = vpack.c.bf16 %v2216, %v2216
      %v2232 = vpack.c.bf16 %v2219, %v2219
      %v2233 = vpack.c.bf16 %v2221, %v2221
      %v2234 = vpack.c.bf16 %v2224, %v2224
      %v2235 = vpack.c.bf16 %v2226, %v2226
      %2236 = vst [vmem:[%s227] sm:$0xf] %v2228
      %2237 = vst [vmem:[%s227 + $0x4] sm:$0xf] %v2229
      %2238 = vst [vmem:[%s227 + $0x8] sm:$0xf] %v2230
      %2239 = vst [vmem:[%s227 + $0xc] sm:$0xf] %v2231
      %2240 = vst [vmem:[%s227 + $0x10] sm:$0xf] %v2232
      %2241 = vst [vmem:[%s227 + $0x14] sm:$0xf] %v2233
      %2242 = vst [vmem:[%s227 + $0x18] sm:$0xf] %v2234
      %2243 = vst [vmem:[%s227 + $0x1c] sm:$0xf] %v2235
      %p2244 = scmp.eq.s32.totalorder %s21, 0
      // Predicated region
      $region33: #{basic_block_forward.6} parent=31 // pred_check
        %p2245 = pneg %p2244
      $region34: #{basic_block_forward.6} parent=31 // pred_check_branch
        %2247 = sbr.rel (%p2245) target = $region36
      $region35: #{basic_block_forward.6} parent=31 // pred_region
        %2248 = vst [vmem:[%s232] sm:$0x3] 0.0
      $region36: #{basic_block_forward.6} parent=31 // pred_fallthru
        _
      %v2249 = vld [vmem:[%s232] sm:$0x3]
      %v2250 = vadd.f32 %v2209, %v2211
      %v2251 = vadd.f32 %v2250, %v2214
      %v2252 = vadd.f32 %v2251, %v2216
      %v2253 = vadd.f32 %v2252, %v2219
      %v2254 = vadd.f32 %v2253, %v2221
      %v2255 = vadd.f32 %v2254, %v2224
      %v2256 = vadd.f32 %v2255, %v2226
      %v2257 = vrot.slane %v2256, 4
      %v2258 = vadd.f32 %v2256, %v2257
      %v2259 = vrot.slane %v2258, 2
      %v2260 = vadd.f32 %v2258, %v2259
      %v2261 = vrot.slane %v2260, 1
      %v2262 = vadd.f32 %v2260, %v2261
      %v2263 = vmul.f32 %v2209, %v2209
      %v2264 = vmul.f32 %v2211, %v2211
      %v2265 = vmul.f32 %v2214, %v2214
      %v2266 = vmul.f32 %v2216, %v2216
      %v2267 = vmul.f32 %v2219, %v2219
      %v2268 = vmul.f32 %v2221, %v2221
      %v2269 = vmul.f32 %v2224, %v2224
      %v2270 = vmul.f32 %v2226, %v2226
      %v2271 = vadd.f32 %v2263, %v2264
      %v2272 = vadd.f32 %v2271, %v2265
      %v2273 = vadd.f32 %v2272, %v2266
      %v2274 = vadd.f32 %v2273, %v2267
      %v2275 = vadd.f32 %v2274, %v2268
      %v2276 = vadd.f32 %v2275, %v2269
      %v2277 = vadd.f32 %v2276, %v2270
      %v2278 = vrot.slane %v2277, 4
      %v2279 = vadd.f32 %v2277, %v2278
      %v2280 = vrot.slane %v2279, 2
      %v2281 = vadd.f32 %v2279, %v2280
      %v2282 = vrot.slane %v2281, 1
      %v2283 = vadd.f32 %v2281, %v2282
      %vm2284 = vcmask 1040384
      %v2285 = vsel %vm2284, %v2262, %v2283
      %v2286 = vadd.f32 %v2249, %v2285
      %2287 = vst [vmem:[%s232] sm:$0x3] %v2286
      %s2288 = sadd.s32 %s20, %s21
      %p2289 = scmp.lt.s32.totalorder %s2288, 1
      %s2290 = scalar_select %p2289, %s2288, 1
      %s2291 = smul.addr %s2290, 8
      %s2292 = smul.addr %s2291, 4
      %s2293 = scalar_lea.vmem %s3, %s2292
      %p2294 = scmp.lt.s32.totalorder %s20, 1
      %s2295 = scalar_select %p2294, %s20, 1
      %s2296 = smul.addr %s2295, 2
      %s2297 = scalar_lea.vmem %s4, %s2296
      // Predicated region
      $region37: #{basic_block_forward.6} parent=31 // pred_check
        %p2298 = pneg %p118
      $region38: #{basic_block_forward.6} parent=31 // pred_check_branch
        %2300 = sbr.rel (%p2298) target = $region40
      $region39: #{basic_block_forward.6} parent=31 // pred_region
        %s2301 = sadd.s32 %s20, %s21
      $region40: #{basic_block_forward.6} parent=31 // pred_fallthru
        _
      // Predicated region
      $region41: #{basic_block_forward.6} parent=31 // pred_check
        %p2302 = pneg %p144
      $region42: #{basic_block_forward.6} parent=31 // pred_check_branch
        %2304 = sbr.rel (%p2302) target = $region44
      $region43: #{basic_block_forward.6} parent=31 // pred_region
        _
      $region44: #{basic_block_forward.6} parent=31 // pred_fallthru
        _
    $region32: #{basic_block_forward.6} parent=5 // pred_fallthru
      _
    %p2305 = scmp.le.s32.totalorder 2, %s11
    // Predicated region
    $region45: #{basic_block_forward.6} parent=5 // pred_check
      %p2306 = pneg %p2305
    $region46: #{basic_block_forward.6} parent=5 // pred_check_branch
      %2308 = sbr.rel (%p2306) target = $region48
    $region47: #{basic_block_forward.6} parent=5 // pred_region
      %s2309 = ssub.s32 %s11, 2
      // Predicated region
      $region49: #{basic_block_forward.6} parent=47 // pred_check
        %p2310 = pneg %p124
      $region50: #{basic_block_forward.6} parent=47 // pred_check_branch
        %2312 = sbr.rel (%p2310) target = $region52
      $region51: #{basic_block_forward.6} parent=47 // pred_region
        %s2313 = sadd.s32 %s22, %s23
        %p2314 = scmp.lt.s32.totalorder %s2313, 1
        %s2315 = scalar_select %p2314, %s2313, 1
        %s2316 = smul.addr %s2315, 8
        %s2317 = smul.addr %s2316, 4
        %s2318 = scalar_lea.vmem %s3, %s2317
      $region52: #{basic_block_forward.6} parent=47 // pred_fallthru
        _
      // Predicated region
      $region53: #{basic_block_forward.6} parent=47 // pred_check
        %p2319 = pneg %p150
      $region54: #{basic_block_forward.6} parent=47 // pred_check_branch
        %2321 = sbr.rel (%p2319) target = $region56
      $region55: #{basic_block_forward.6} parent=47 // pred_region
        %p2322 = scmp.lt.s32.totalorder %s22, 1
        %s2323 = scalar_select %p2322, %s22, 1
        %s2324 = smul.addr %s2323, 2
        %s2325 = scalar_lea.vmem %s4, %s2324
      $region56: #{basic_block_forward.6} parent=47 // pred_fallthru
        _
    $region48: #{basic_block_forward.6} parent=5 // pred_fallthru
      _
  $region6: #{basic_block_forward.6} parent=0 // loop_footer
    %s15 = sadd.s32 1, %s11
  $region7: #{basic_block_forward.6} parent=0 // loop_footer_branch
    %10 = sbr.rel target = $region3
  $region8: #{basic_block_forward.6} parent=0 // loop_exit
    _

</llo_original>
